<compile_context>
chip_gen: v7x
topology: tpu7x:2x2x1
jax: 0.10.0
libtpu: 0.0.40
codegen_flags: <defaults>
</compile_context>

<pallas_src>
import functools

import jax
import jax.numpy as jnp
from jax.experimental import pallas as pl
from jax.experimental.pallas import tpu as pltpu


FEATURES = (64, 128, 256, 512)
IN_CHANNELS = 3
LRELU_SLOPE = 0.2
BN_EPS = 1e-5
VMEM_LIMIT = 32 * 1024 * 1024  # explicit, safe on v5e/v6e/v7x


def _round_up(x, m):
    return (x + m - 1) // m * m


# --------------- GEMM (+ bias / BatchNorm / LeakyReLU) kernel ---------------


def _make_gemm_kernel(has_bias, fuse_bn, apply_leaky, slope, eps, m_valid):
    def kernel(*refs):
        x_ref, w_ref = refs[0], refs[1]
        idx = 2
        b_ref = None
        if has_bias:
            b_ref = refs[idx]
            idx += 1
        g_ref = be_ref = None
        if fuse_bn:
            g_ref, be_ref = refs[idx], refs[idx + 1]
            idx += 2
        o_ref, acc_ref = refs[idx], refs[idx + 1]

        k = pl.program_id(2)

        @pl.when(k == 0)
        def _():
            acc_ref[...] = jnp.zeros_like(acc_ref)

        acc_ref[...] += jnp.dot(
            x_ref[...], w_ref[...], preferred_element_type=jnp.float32
        )

        @pl.when(k == pl.num_programs(2) - 1)
        def _():
            acc = acc_ref[...]
            if has_bias:
                acc = acc + b_ref[...]
            if fuse_bn:
                # Training-mode BatchNorm over the (single) M tile: rows >=
                # m_valid are zero padding and are masked out of the stats.
                rows = jax.lax.broadcasted_iota(jnp.int32, (acc.shape[0], 1), 0)
                valid = rows < m_valid
                inv_m = 1.0 / m_valid
                mean = jnp.sum(jnp.where(valid, acc, 0.0), axis=0,
                               keepdims=True) * inv_m
                xc = acc - mean
                var = jnp.sum(jnp.where(valid, xc * xc, 0.0), axis=0,
                              keepdims=True) * inv_m
                acc = xc * jax.lax.rsqrt(var + eps) * g_ref[...] + be_ref[...]
            if apply_leaky:
                acc = jnp.where(acc >= 0, acc, slope * acc)
            o_ref[...] = acc.astype(o_ref.dtype)

    return kernel


def conv_gemm(patches, w_mat, bias, *, bn=None, apply_leaky,
              slope=LRELU_SLOPE, eps=BN_EPS):
    """patches: (M, K) f32, w_mat: (K, Cout) f32, bias: (1, Cout) f32 or None,
    bn: optional (gamma, beta) each shaped (Cout,).

    K/Cout/M-tiled accumulator GEMM. Operands are cast to bf16, accumulation
    and the epilogue stay in f32. Cout padded to a multiple of 128 so stores
    are lane-dense (also fixes the Cout=1 final layer); result sliced back.
    When `bn` is given and the whole M dimension fits in one M tile, the
    BatchNorm + LeakyReLU is fused into the epilogue (returns fused=True);
    otherwise the caller must run the standalone BN kernel.
    """
    M, K = patches.shape
    Cout = w_mat.shape[1]
    has_bias = bias is not None

    # Tile sizes: no over-padding of tiny M (round to 8, cap at 256),
    # K tiled at <=512, Cout tiled at <=256 and padded to >=128 lanes.
    tm = min(256, _round_up(M, 8))
    m_pad = _round_up(M, tm)
    tk = min(512, _round_up(K, 128))
    k_pad = _round_up(K, tk)
    c_pad = _round_up(Cout, 128)
    tn = min(256, c_pad)
    c_pad = _round_up(c_pad, tn)

    fuse_bn = bn is not None and m_pad == tm           # whole M in one tile
    kernel_leaky = apply_leaky and (bn is None or fuse_bn)

    if (m_pad, k_pad) != (M, K):
        patches = jnp.pad(patches, ((0, m_pad - M), (0, k_pad - K)))
    if (k_pad, c_pad) != (K, Cout):
        w_mat = jnp.pad(w_mat, ((0, k_pad - K), (0, c_pad - Cout)))

    x_bf = patches.astype(jnp.bfloat16)
    w_bf = w_mat.astype(jnp.bfloat16)

    grid = (m_pad // tm, c_pad // tn, k_pad // tk)

    in_specs = [
        pl.BlockSpec((tm, tk), lambda i, j, k: (i, k)),
        pl.BlockSpec((tk, tn), lambda i, j, k: (k, j)),
    ]
    args = [x_bf, w_bf]

    def _chan_vec(v):
        v = v.reshape(1, Cout).astype(jnp.float32)
        if c_pad != Cout:
            v = jnp.pad(v, ((0, 0), (0, c_pad - Cout)))
        return v

    if has_bias:
        in_specs.append(pl.BlockSpec((1, tn), lambda i, j, k: (0, j)))
        args.append(_chan_vec(bias))
    if fuse_bn:
        gamma, beta = bn
        in_specs.append(pl.BlockSpec((1, tn), lambda i, j, k: (0, j)))
        args.append(_chan_vec(gamma))
        in_specs.append(pl.BlockSpec((1, tn), lambda i, j, k: (0, j)))
        args.append(_chan_vec(beta))

    cost = pl.CostEstimate(
        flops=2 * m_pad * k_pad * c_pad,
        transcendentals=0,
        bytes_accessed=(
            m_pad * k_pad * 2                       # bf16 patches
            + (m_pad // tm) * k_pad * c_pad * 2     # bf16 weights (per M tile)
            + m_pad * c_pad * 4                     # f32 output
        ),
    )

    out = pl.pallas_call(
        _make_gemm_kernel(has_bias, fuse_bn, kernel_leaky, slope, eps, M),
        out_shape=jax.ShapeDtypeStruct((m_pad, c_pad), jnp.float32),
        grid=grid,
        in_specs=in_specs,
        out_specs=pl.BlockSpec((tm, tn), lambda i, j, k: (i, j)),
        scratch_shapes=[pltpu.VMEM((tm, tn), jnp.float32)],
        compiler_params=pltpu.CompilerParams(
            dimension_semantics=("parallel", "parallel", "arbitrary"),
            vmem_limit_bytes=VMEM_LIMIT,
        ),
        cost_estimate=cost,
    )(*args)
    return out[:M, :Cout], fuse_bn


# --------------- BatchNorm + LeakyReLU kernel (large-M fallback) ------------


def _bn_lrelu_kernel(x_ref, g_ref, b_ref, o_ref, *, slope, eps):
    # x: (M, tc) f32. BatchNorm over M (= N*H*W) per channel, biased variance
    # (training-mode normalization), then LeakyReLU(slope).
    x = x_ref[...]
    inv_m = 1.0 / x.shape[0]
    mean = jnp.sum(x, axis=0, keepdims=True) * inv_m
    xc = x - mean
    var = jnp.sum(xc * xc, axis=0, keepdims=True) * inv_m
    y = xc * jax.lax.rsqrt(var + eps) * g_ref[...] + b_ref[...]
    o_ref[...] = jnp.where(y >= 0, y, slope * y)


def batchnorm_lrelu(x_nhwc, gamma, beta, *, slope=LRELU_SLOPE, eps=BN_EPS):
    N, H, W, C = x_nhwc.shape
    M = N * H * W
    x_mc = x_nhwc.reshape(M, C)           # NHWC-flat: free reshape, no transpose
    tc = min(128, C)
    assert C % tc == 0

    out = pl.pallas_call(
        functools.partial(_bn_lrelu_kernel, slope=slope, eps=eps),
        out_shape=jax.ShapeDtypeStruct((M, C), jnp.float32),
        grid=(C // tc,),
        in_specs=[
            pl.BlockSpec((M, tc), lambda c: (0, c)),
            pl.BlockSpec((1, tc), lambda c: (0, c)),
            pl.BlockSpec((1, tc), lambda c: (0, c)),
        ],
        out_specs=pl.BlockSpec((M, tc), lambda c: (0, c)),
        compiler_params=pltpu.CompilerParams(
            dimension_semantics=("parallel",),
            vmem_limit_bytes=VMEM_LIMIT,
        ),
    )(x_mc, gamma.reshape(1, C), beta.reshape(1, C))
    return out.reshape(N, H, W, C)


# ------------------------------- glue (JAX) ---------------------------------


def reflect_pad_nhwc(x, p):
    return jnp.pad(x, ((0, 0), (p, p), (p, p), (0, 0)), mode="reflect")


def im2col_nhwc(xp, k, stride):
    """xp: padded NHWC -> ((N*Ho*Wo, k*k*C), (N, Ho, Wo)). No transposes."""
    N, Hp, Wp, C = xp.shape
    Ho = (Hp - k) // stride + 1
    Wo = (Wp - k) // stride + 1
    cols = []
    for i in range(k):
        for j in range(k):
            cols.append(
                xp[:, i : i + stride * Ho : stride, j : j + stride * Wo : stride, :]
            )
    p = jnp.stack(cols, axis=3)           # (N, Ho, Wo, k*k, C)
    return p.reshape(N * Ho * Wo, k * k * C), (N, Ho, Wo)


def conv_layer_nhwc(x_nhwc, w, b, stride, *, apply_leaky, bn=None):
    """x: NHWC; w: (Cout, Cin, k, k) PyTorch layout; b: (Cout,) or None;
    bn: optional (gamma, beta) -> conv + BatchNorm + LeakyReLU block."""
    cout, cin, k, _ = w.shape
    xp = reflect_pad_nhwc(x_nhwc, 1)
    patches, (N, Ho, Wo) = im2col_nhwc(xp, k, stride)
    # K ordering of patches is (kh, kw, Cin) -> match with weight transpose.
    w_mat = jnp.transpose(w, (2, 3, 1, 0)).reshape(k * k * cin, cout)
    bias = None if b is None else b.reshape(1, cout)
    out_mc, bn_fused = conv_gemm(patches, w_mat, bias, bn=bn,
                                 apply_leaky=apply_leaky)
    h = out_mc.reshape(N, Ho, Wo, cout)
    if bn is not None and not bn_fused:
        h = batchnorm_lrelu(h, bn[0], bn[1])
    return h


# ------------------------------ model params --------------------------------


def init_params(key):
    ks = jax.random.split(key, 2 + 2 * len(FEATURES))
    ki = 0

    def conv_w(k, cout, cin, kern=4, scale=0.05):
        return jax.random.normal(k, (cout, cin, kern, kern), jnp.float32) * scale

    params = {}
    params["w0"] = conv_w(ks[ki], FEATURES[0], IN_CHANNELS * 2); ki += 1
    params["b0"] = jax.random.normal(ks[ki], (FEATURES[0],), jnp.float32) * 0.05; ki += 1
    cin = FEATURES[0]
    blocks = []
    for f in FEATURES[1:]:
        w = conv_w(ks[ki], f, cin); ki += 1
        blocks.append({
            "w": w,
            "gamma": jnp.ones((f,), jnp.float32),   # PyTorch BatchNorm2d default init
            "beta": jnp.zeros((f,), jnp.float32),
        })
        cin = f
    params["blocks"] = blocks
    params["wf"] = conv_w(ks[ki], 1, cin); ki += 1
    params["bf"] = jax.random.normal(ks[ki], (1,), jnp.float32) * 0.05; ki += 1
    return params


def discriminator_forward(params, x, y):
    # Inputs are NCHW (PyTorch convention); convert once to NHWC.
    h = jnp.concatenate([x, y], axis=1)
    h = jnp.transpose(h, (0, 2, 3, 1))
    # initial: conv(6->64, k4 s2 p1 reflect, bias) + LeakyReLU(0.2)
    h = conv_layer_nhwc(h, params["w0"], params["b0"], 2, apply_leaky=True)
    # DiscCNNBlocks: conv(bias=False) + BatchNorm + LeakyReLU(0.2)
    for idx, f in enumerate(FEATURES[1:]):
        stride = 1 if f == FEATURES[-1] else 2
        blk = params["blocks"][idx]
        h = conv_layer_nhwc(h, blk["w"], None, stride, apply_leaky=True,
                            bn=(blk["gamma"], blk["beta"]))
    # final: conv(512->1, k4 s1 p1 reflect, bias), no activation
    h = conv_layer_nhwc(h, params["wf"], params["bf"], 1, apply_leaky=False)
    return jnp.transpose(h, (0, 3, 1, 2))            # back to NCHW


# ------------------------- pure-JAX reference check --------------------------
# Reference uses bf16 conv operands with f32 accumulation (same numerics as the
# kernel's bf16 MXU path); BN / LeakyReLU stay in f32 like the kernels.


def _ref_conv(x, w, b, stride):
    xp = jnp.pad(x, ((0, 0), (0, 0), (1, 1), (1, 1)), mode="reflect")
    out = jax.lax.conv_general_dilated(
        xp.astype(jnp.bfloat16), w.astype(jnp.bfloat16),
        window_strides=(stride, stride), padding="VALID",
        dimension_numbers=("NCHW", "OIHW", "NCHW"),
        preferred_element_type=jnp.float32,
    )
    if b is not None:
        out = out + b.reshape(1, -1, 1, 1)
    return out


def _ref_forward(params, x, y):
    h = jnp.concatenate([x, y], axis=1)
    h = _ref_conv(h, params["w0"], params["b0"], 2)
    h = jnp.where(h >= 0, h, LRELU_SLOPE * h)
    for idx, f in enumerate(FEATURES[1:]):
        stride = 1 if f == FEATURES[-1] else 2
        blk = params["blocks"][idx]
        h = _ref_conv(h, blk["w"], None, stride)
        mean = jnp.mean(h, axis=(0, 2, 3), keepdims=True)
        var = jnp.mean((h - mean) ** 2, axis=(0, 2, 3), keepdims=True)
        h = (h - mean) * jax.lax.rsqrt(var + BN_EPS)
        h = h * blk["gamma"].reshape(1, -1, 1, 1) + blk["beta"].reshape(1, -1, 1, 1)
        h = jnp.where(h >= 0, h, LRELU_SLOPE * h)
    return _ref_conv(h, params["wf"], params["bf"], 1)


# ---------------------------------- main -------------------------------------

if __name__ == "__main__":
    key = jax.random.PRNGKey(0)
    kx, ky, kp = jax.random.split(key, 3)

    N, H, W = 2, 32, 32
    x = jax.random.normal(kx, (N, IN_CHANNELS, H, W), jnp.float32)
    y = jax.random.normal(ky, (N, IN_CHANNELS, H, W), jnp.float32)
    params = init_params(kp)

    fwd = jax.jit(discriminator_forward)
    out = jax.block_until_ready(fwd(params, x, y))

    # 32 -> 16 -> 8 -> 4 -> 3 -> 2 spatial, 1 output channel (PatchGAN map)
    assert out.shape == (N, 1, 2, 2), out.shape

    ref = jax.block_until_ready(_ref_forward(params, x, y))
    max_err = float(jnp.max(jnp.abs(out - ref)))
    assert jnp.allclose(out, ref, atol=2e-2, rtol=2e-2), max_err

    print("KERNEL_OK")
</pallas_src>

<mosaic_0001>
module attributes {stable_mosaic.version = 11 : i64} {
  func.func @kernel(%arg0: i32, %arg1: i32, %arg2: i32, %arg3: memref<256x128xbf16, #tpu.memory_space<vmem>>, %arg4: memref<128x128xbf16, #tpu.memory_space<vmem>>, %arg5: memref<1x128xf32, #tpu.memory_space<vmem>>, %arg6: memref<256x128xf32, #tpu.memory_space<vmem>>, %arg7: memref<256x128xf32, #tpu.memory_space<vmem>>) attributes {dimension_semantics = [#tpu.dimension_semantics<parallel>, #tpu.dimension_semantics<parallel>, #tpu.dimension_semantics<arbitrary>], iteration_bounds = array<i64: 2, 1, 1>, scalar_prefetch = 0 : i64, scratch_operands = 1 : i64, tpu.core_type = #tpu.core_type<tc>, window_params = [{transform_indices = @transform_0, window_bounds = array<i64: 256, 128>}, {transform_indices = @transform_1, window_bounds = array<i64: 128, 128>}, {transform_indices = @transform_2, window_bounds = array<i64: 1, 128>}, {transform_indices = @transform_3, window_bounds = array<i64: 256, 128>}]} {
    %c0_i32 = arith.constant 0 : i32
    %0 = arith.cmpi eq, %arg2, %c0_i32 : i32
    %1 = arith.extui %0 : i1 to i32
    %c0_i32_0 = arith.constant 0 : i32
    %2 = arith.cmpi ne, %1, %c0_i32_0 : i32
    scf.if %2 {
      %cst_10 = arith.constant 0.000000e+00 : f32
      %12 = vector.broadcast %cst_10 : f32 to vector<256x128xf32>
      %c0_11 = arith.constant 0 : index
      %c0_12 = arith.constant 0 : index
      %13 = vector.load %arg7[%c0_11, %c0_12] : memref<256x128xf32, #tpu.memory_space<vmem>>, vector<256x128xf32>
      tpu.vector_store %arg7[%c0_11, %c0_12], %12 {strides = array<i32>} : memref<256x128xf32, #tpu.memory_space<vmem>>, vector<256x128xf32>,
    } else {
    }
    %c0 = arith.constant 0 : index
    %c0_1 = arith.constant 0 : index
    %3 = vector.load %arg7[%c0, %c0_1] : memref<256x128xf32, #tpu.memory_space<vmem>>, vector<256x128xf32>
    %c0_2 = arith.constant 0 : index
    %c0_3 = arith.constant 0 : index
    %4 = vector.load %arg3[%c0_2, %c0_3] : memref<256x128xbf16, #tpu.memory_space<vmem>>, vector<256x128xbf16>
    %c0_4 = arith.constant 0 : index
    %c0_5 = arith.constant 0 : index
    %5 = vector.load %arg4[%c0_4, %c0_5] : memref<128x128xbf16, #tpu.memory_space<vmem>>, vector<128x128xbf16>
    %cst = arith.constant dense<0.000000e+00> : vector<256x128xf32>
    %6 = tpu.matmul %4, %5, %cst {dimension_numbers = #tpu.dot_dimension_numbers<[1], [0], [0], [1], [0, 0, 1, 1], [], []>} : vector<256x128xbf16>, vector<128x128xbf16>, vector<256x128xf32> -> vector<256x128xf32>
    %7 = arith.addf %3, %6 : vector<256x128xf32>
    %c0_6 = arith.constant 0 : index
    %c0_7 = arith.constant 0 : index
    %8 = vector.load %arg7[%c0_6, %c0_7] : memref<256x128xf32, #tpu.memory_space<vmem>>, vector<256x128xf32>
    tpu.vector_store %arg7[%c0_6, %c0_7], %7 {strides = array<i32>} : memref<256x128xf32, #tpu.memory_space<vmem>>, vector<256x128xf32>,
    %c0_i32_8 = arith.constant 0 : i32
    %9 = arith.cmpi eq, %arg2, %c0_i32_8 : i32
    %10 = arith.extui %9 : i1 to i32
    %c0_i32_9 = arith.constant 0 : i32
    %11 = arith.cmpi ne, %10, %c0_i32_9 : i32
    scf.if %11 {
      %c0_10 = arith.constant 0 : index
      %c0_11 = arith.constant 0 : index
      %12 = vector.load %arg7[%c0_10, %c0_11] : memref<256x128xf32, #tpu.memory_space<vmem>>, vector<256x128xf32>
      %c0_12 = arith.constant 0 : index
      %c0_13 = arith.constant 0 : index
      %13 = vector.load %arg5[%c0_12, %c0_13] : memref<1x128xf32, #tpu.memory_space<vmem>>, vector<1x128xf32>
      %14 = vector.broadcast %13 : vector<1x128xf32> to vector<256x128xf32>
      %15 = arith.addf %12, %14 : vector<256x128xf32>
      %cst_14 = arith.constant 0.000000e+00 : f32
      %16 = vector.broadcast %cst_14 : f32 to vector<256x128xf32>
      %17 = arith.cmpf oge, %15, %16 : vector<256x128xf32>
      %cst_15 = arith.constant 2.000000e-01 : f32
      %18 = vector.broadcast %cst_15 : f32 to vector<256x128xf32>
      %19 = arith.mulf %18, %15 : vector<256x128xf32>
      %20 = arith.select %17, %15, %19 : vector<256x128xi1>, vector<256x128xf32>
      %c0_16 = arith.constant 0 : index
      %c0_17 = arith.constant 0 : index
      %21 = vector.load %arg6[%c0_16, %c0_17] : memref<256x128xf32, #tpu.memory_space<vmem>>, vector<256x128xf32>
      tpu.vector_store %arg6[%c0_16, %c0_17], %20 {strides = array<i32>} : memref<256x128xf32, #tpu.memory_space<vmem>>, vector<256x128xf32>,
    } else {
    }
    return
  }
  func.func @transform_0(%arg0: i32, %arg1: i32, %arg2: i32) -> (i32, i32) {
    %c0_i32 = arith.constant 0 : i32
    return %arg0, %arg2 : i32, i32
  }
  func.func @transform_1(%arg0: i32, %arg1: i32, %arg2: i32) -> (i32, i32) {
    %c0_i32 = arith.constant 0 : i32
    return %arg2, %arg1 : i32, i32
  }
  func.func @transform_2(%arg0: i32, %arg1: i32, %arg2: i32) -> (i32, i32) {
    %c0_i32 = arith.constant 0 : i32
    %c0_i32_0 = arith.constant 0 : i32
    return %c0_i32, %arg1 : i32, i32
  }
  func.func @transform_3(%arg0: i32, %arg1: i32, %arg2: i32) -> (i32, i32) {
    %c0_i32 = arith.constant 0 : i32
    return %arg0, %arg1 : i32, i32
  }
}

module attributes {stable_mosaic.version = 11 : i64} {
  func.func @kernel(%arg0: i32, %arg1: i32, %arg2: i32, %arg3: memref<128x512xbf16, #tpu.memory_space<vmem>>, %arg4: memref<512x128xbf16, #tpu.memory_space<vmem>>, %arg5: memref<1x128xf32, #tpu.memory_space<vmem>>, %arg6: memref<1x128xf32, #tpu.memory_space<vmem>>, %arg7: memref<128x128xf32, #tpu.memory_space<vmem>>, %arg8: memref<128x128xf32, #tpu.memory_space<vmem>>) attributes {dimension_semantics = [#tpu.dimension_semantics<parallel>, #tpu.dimension_semantics<parallel>, #tpu.dimension_semantics<arbitrary>], iteration_bounds = array<i64: 1, 1, 2>, scalar_prefetch = 0 : i64, scratch_operands = 1 : i64, tpu.core_type = #tpu.core_type<tc>, window_params = [{transform_indices = @transform_0, window_bounds = array<i64: 128, 512>}, {transform_indices = @transform_1, window_bounds = array<i64: 512, 128>}, {transform_indices = @transform_2, window_bounds = array<i64: 1, 128>}, {transform_indices = @transform_3, window_bounds = array<i64: 1, 128>}, {transform_indices = @transform_4, window_bounds = array<i64: 128, 128>}]} {
    %c0_i32 = arith.constant 0 : i32
    %0 = arith.cmpi eq, %arg2, %c0_i32 : i32
    %1 = arith.extui %0 : i1 to i32
    %c0_i32_0 = arith.constant 0 : i32
    %2 = arith.cmpi ne, %1, %c0_i32_0 : i32
    scf.if %2 {
      %cst_9 = arith.constant 0.000000e+00 : f32
      %12 = vector.broadcast %cst_9 : f32 to vector<128x128xf32>
      %c0_10 = arith.constant 0 : index
      %c0_11 = arith.constant 0 : index
      %13 = vector.load %arg8[%c0_10, %c0_11] : memref<128x128xf32, #tpu.memory_space<vmem>>, vector<128x128xf32>
      tpu.vector_store %arg8[%c0_10, %c0_11], %12 {strides = array<i32>} : memref<128x128xf32, #tpu.memory_space<vmem>>, vector<128x128xf32>,
    } else {
    }
    %c0 = arith.constant 0 : index
    %c0_1 = arith.constant 0 : index
    %3 = vector.load %arg8[%c0, %c0_1] : memref<128x128xf32, #tpu.memory_space<vmem>>, vector<128x128xf32>
    %c0_2 = arith.constant 0 : index
    %c0_3 = arith.constant 0 : index
    %4 = vector.load %arg3[%c0_2, %c0_3] : memref<128x512xbf16, #tpu.memory_space<vmem>>, vector<128x512xbf16>
    %c0_4 = arith.constant 0 : index
    %c0_5 = arith.constant 0 : index
    %5 = vector.load %arg4[%c0_4, %c0_5] : memref<512x128xbf16, #tpu.memory_space<vmem>>, vector<512x128xbf16>
    %cst = arith.constant dense<0.000000e+00> : vector<128x128xf32>
    %6 = tpu.matmul %4, %5, %cst {dimension_numbers = #tpu.dot_dimension_numbers<[1], [0], [0], [1], [0, 0, 1, 1], [], []>} : vector<128x512xbf16>, vector<512x128xbf16>, vector<128x128xf32> -> vector<128x128xf32>
    %7 = arith.addf %3, %6 : vector<128x128xf32>
    %c0_6 = arith.constant 0 : index
    %c0_7 = arith.constant 0 : index
    %8 = vector.load %arg8[%c0_6, %c0_7] : memref<128x128xf32, #tpu.memory_space<vmem>>, vector<128x128xf32>
    tpu.vector_store %arg8[%c0_6, %c0_7], %7 {strides = array<i32>} : memref<128x128xf32, #tpu.memory_space<vmem>>, vector<128x128xf32>,
    %c1_i32 = arith.constant 1 : i32
    %9 = arith.cmpi eq, %arg2, %c1_i32 : i32
    %10 = arith.extui %9 : i1 to i32
    %c0_i32_8 = arith.constant 0 : i32
    %11 = arith.cmpi ne, %10, %c0_i32_8 : i32
    scf.if %11 {
      %c0_9 = arith.constant 0 : index
      %c0_10 = arith.constant 0 : index
      %12 = vector.load %arg8[%c0_9, %c0_10] : memref<128x128xf32, #tpu.memory_space<vmem>>, vector<128x128xf32>
      %13 = tpu.iota {dimensions = array<i32: 0>} : vector<128x1xi32>
      %c128_i32 = arith.constant 128 : i32
      %14 = vector.broadcast %c128_i32 : i32 to vector<128x1xi32>
      %15 = arith.cmpi slt, %13, %14 : vector<128x1xi32>
      %cst_11 = arith.constant 0.000000e+00 : f32
      %16 = vector.shape_cast %15 : vector<128x1xi1> to vector<128x1xi1>
      %17 = vector.broadcast %16 : vector<128x1xi1> to vector<128x128xi1>
      %18 = vector.broadcast %cst_11 : f32 to vector<128x128xf32>
      %19 = arith.select %17, %12, %18 : vector<128x128xi1>, vector<128x128xf32>
      %cst_12 = arith.constant dense<0.000000e+00> : vector<128xf32>
      %20 = vector.multi_reduction <add>, %19, %cst_12 [0] : vector<128x128xf32> to vector<128xf32>
      %21 = vector.shape_cast %20 : vector<128xf32> to vector<1x128xf32>
      %cst_13 = arith.constant 7.812500e-03 : f32
      %22 = vector.broadcast %cst_13 : f32 to vector<1x128xf32>
      %23 = arith.mulf %21, %22 : vector<1x128xf32>
      %24 = vector.broadcast %23 : vector<1x128xf32> to vector<128x128xf32>
      %25 = arith.subf %12, %24 : vector<128x128xf32>
      %26 = arith.mulf %25, %25 : vector<128x128xf32>
      %cst_14 = arith.constant 0.000000e+00 : f32
      %27 = vector.shape_cast %15 : vector<128x1xi1> to vector<128x1xi1>
      %28 = vector.broadcast %27 : vector<128x1xi1> to vector<128x128xi1>
      %29 = vector.broadcast %cst_14 : f32 to vector<128x128xf32>
      %30 = arith.select %28, %26, %29 : vector<128x128xi1>, vector<128x128xf32>
      %cst_15 = arith.constant dense<0.000000e+00> : vector<128xf32>
      %31 = vector.multi_reduction <add>, %30, %cst_15 [0] : vector<128x128xf32> to vector<128xf32>
      %32 = vector.shape_cast %31 : vector<128xf32> to vector<1x128xf32>
      %cst_16 = arith.constant 7.812500e-03 : f32
      %33 = vector.broadcast %cst_16 : f32 to vector<1x128xf32>
      %34 = arith.mulf %32, %33 : vector<1x128xf32>
      %cst_17 = arith.constant 9.99999974E-6 : f32
      %35 = vector.broadcast %cst_17 : f32 to vector<1x128xf32>
      %36 = arith.addf %34, %35 : vector<1x128xf32>
      %37 = math.rsqrt %36 : vector<1x128xf32>
      %38 = vector.broadcast %37 : vector<1x128xf32> to vector<128x128xf32>
      %39 = arith.mulf %25, %38 : vector<128x128xf32>
      %c0_18 = arith.constant 0 : index
      %c0_19 = arith.constant 0 : index
      %40 = vector.load %arg5[%c0_18, %c0_19] : memref<1x128xf32, #tpu.memory_space<vmem>>, vector<1x128xf32>
      %41 = vector.broadcast %40 : vector<1x128xf32> to vector<128x128xf32>
      %42 = arith.mulf %39, %41 : vector<128x128xf32>
      %c0_20 = arith.constant 0 : index
      %c0_21 = arith.constant 0 : index
      %43 = vector.load %arg6[%c0_20, %c0_21] : memref<1x128xf32, #tpu.memory_space<vmem>>, vector<1x128xf32>
      %44 = vector.broadcast %43 : vector<1x128xf32> to vector<128x128xf32>
      %45 = arith.addf %42, %44 : vector<128x128xf32>
      %cst_22 = arith.constant 0.000000e+00 : f32
      %46 = vector.broadcast %cst_22 : f32 to vector<128x128xf32>
      %47 = arith.cmpf oge, %45, %46 : vector<128x128xf32>
      %cst_23 = arith.constant 2.000000e-01 : f32
      %48 = vector.broadcast %cst_23 : f32 to vector<128x128xf32>
      %49 = arith.mulf %48, %45 : vector<128x128xf32>
      %50 = arith.select %47, %45, %49 : vector<128x128xi1>, vector<128x128xf32>
      %c0_24 = arith.constant 0 : index
      %c0_25 = arith.constant 0 : index
      %51 = vector.load %arg7[%c0_24, %c0_25] : memref<128x128xf32, #tpu.memory_space<vmem>>, vector<128x128xf32>
      tpu.vector_store %arg7[%c0_24, %c0_25], %50 {strides = array<i32>} : memref<128x128xf32, #tpu.memory_space<vmem>>, vector<128x128xf32>,
    } else {
    }
    return
  }
  func.func @transform_0(%arg0: i32, %arg1: i32, %arg2: i32) -> (i32, i32) {
    %c0_i32 = arith.constant 0 : i32
    return %arg0, %arg2 : i32, i32
  }
  func.func @transform_1(%arg0: i32, %arg1: i32, %arg2: i32) -> (i32, i32) {
    %c0_i32 = arith.constant 0 : i32
    return %arg2, %arg1 : i32, i32
  }
  func.func @transform_2(%arg0: i32, %arg1: i32, %arg2: i32) -> (i32, i32) {
    %c0_i32 = arith.constant 0 : i32
    %c0_i32_0 = arith.constant 0 : i32
    return %c0_i32, %arg1 : i32, i32
  }
  func.func @transform_3(%arg0: i32, %arg1: i32, %arg2: i32) -> (i32, i32) {
    %c0_i32 = arith.constant 0 : i32
    %c0_i32_0 = arith.constant 0 : i32
    return %c0_i32, %arg1 : i32, i32
  }
  func.func @transform_4(%arg0: i32, %arg1: i32, %arg2: i32) -> (i32, i32) {
    %c0_i32 = arith.constant 0 : i32
    return %arg0, %arg1 : i32, i32
  }
}

module attributes {stable_mosaic.version = 11 : i64} {
  func.func @kernel(%arg0: i32, %arg1: i32, %arg2: i32, %arg3: memref<32x512xbf16, #tpu.memory_space<vmem>>, %arg4: memref<512x256xbf16, #tpu.memory_space<vmem>>, %arg5: memref<1x256xf32, #tpu.memory_space<vmem>>, %arg6: memref<1x256xf32, #tpu.memory_space<vmem>>, %arg7: memref<32x256xf32, #tpu.memory_space<vmem>>, %arg8: memref<32x256xf32, #tpu.memory_space<vmem>>) attributes {dimension_semantics = [#tpu.dimension_semantics<parallel>, #tpu.dimension_semantics<parallel>, #tpu.dimension_semantics<arbitrary>], iteration_bounds = array<i64: 1, 1, 4>, scalar_prefetch = 0 : i64, scratch_operands = 1 : i64, tpu.core_type = #tpu.core_type<tc>, window_params = [{transform_indices = @transform_0, window_bounds = array<i64: 32, 512>}, {transform_indices = @transform_1, window_bounds = array<i64: 512, 256>}, {transform_indices = @transform_2, window_bounds = array<i64: 1, 256>}, {transform_indices = @transform_3, window_bounds = array<i64: 1, 256>}, {transform_indices = @transform_4, window_bounds = array<i64: 32, 256>}]} {
    %c0_i32 = arith.constant 0 : i32
    %0 = arith.cmpi eq, %arg2, %c0_i32 : i32
    %1 = arith.extui %0 : i1 to i32
    %c0_i32_0 = arith.constant 0 : i32
    %2 = arith.cmpi ne, %1, %c0_i32_0 : i32
    scf.if %2 {
      %cst_9 = arith.constant 0.000000e+00 : f32
      %12 = vector.broadcast %cst_9 : f32 to vector<32x256xf32>
      %c0_10 = arith.constant 0 : index
      %c0_11 = arith.constant 0 : index
      %13 = vector.load %arg8[%c0_10, %c0_11] : memref<32x256xf32, #tpu.memory_space<vmem>>, vector<32x256xf32>
      tpu.vector_store %arg8[%c0_10, %c0_11], %12 {strides = array<i32>} : memref<32x256xf32, #tpu.memory_space<vmem>>, vector<32x256xf32>,
    } else {
    }
    %c0 = arith.constant 0 : index
    %c0_1 = arith.constant 0 : index
    %3 = vector.load %arg8[%c0, %c0_1] : memref<32x256xf32, #tpu.memory_space<vmem>>, vector<32x256xf32>
    %c0_2 = arith.constant 0 : index
    %c0_3 = arith.constant 0 : index
    %4 = vector.load %arg3[%c0_2, %c0_3] : memref<32x512xbf16, #tpu.memory_space<vmem>>, vector<32x512xbf16>
    %c0_4 = arith.constant 0 : index
    %c0_5 = arith.constant 0 : index
    %5 = vector.load %arg4[%c0_4, %c0_5] : memref<512x256xbf16, #tpu.memory_space<vmem>>, vector<512x256xbf16>
    %cst = arith.constant dense<0.000000e+00> : vector<32x256xf32>
    %6 = tpu.matmul %4, %5, %cst {dimension_numbers = #tpu.dot_dimension_numbers<[1], [0], [0], [1], [0, 0, 1, 1], [], []>} : vector<32x512xbf16>, vector<512x256xbf16>, vector<32x256xf32> -> vector<32x256xf32>
    %7 = arith.addf %3, %6 : vector<32x256xf32>
    %c0_6 = arith.constant 0 : index
    %c0_7 = arith.constant 0 : index
    %8 = vector.load %arg8[%c0_6, %c0_7] : memref<32x256xf32, #tpu.memory_space<vmem>>, vector<32x256xf32>
    tpu.vector_store %arg8[%c0_6, %c0_7], %7 {strides = array<i32>} : memref<32x256xf32, #tpu.memory_space<vmem>>, vector<32x256xf32>,
    %c3_i32 = arith.constant 3 : i32
    %9 = arith.cmpi eq, %arg2, %c3_i32 : i32
    %10 = arith.extui %9 : i1 to i32
    %c0_i32_8 = arith.constant 0 : i32
    %11 = arith.cmpi ne, %10, %c0_i32_8 : i32
    scf.if %11 {
      %c0_9 = arith.constant 0 : index
      %c0_10 = arith.constant 0 : index
      %12 = vector.load %arg8[%c0_9, %c0_10] : memref<32x256xf32, #tpu.memory_space<vmem>>, vector<32x256xf32>
      %13 = tpu.iota {dimensions = array<i32: 0>} : vector<32x1xi32>
      %c32_i32 = arith.constant 32 : i32
      %14 = vector.broadcast %c32_i32 : i32 to vector<32x1xi32>
      %15 = arith.cmpi slt, %13, %14 : vector<32x1xi32>
      %cst_11 = arith.constant 0.000000e+00 : f32
      %16 = vector.shape_cast %15 : vector<32x1xi1> to vector<32x1xi1>
      %17 = vector.broadcast %16 : vector<32x1xi1> to vector<32x256xi1>
      %18 = vector.broadcast %cst_11 : f32 to vector<32x256xf32>
      %19 = arith.select %17, %12, %18 : vector<32x256xi1>, vector<32x256xf32>
      %cst_12 = arith.constant dense<0.000000e+00> : vector<256xf32>
      %20 = vector.multi_reduction <add>, %19, %cst_12 [0] : vector<32x256xf32> to vector<256xf32>
      %21 = vector.shape_cast %20 : vector<256xf32> to vector<1x256xf32>
      %cst_13 = arith.constant 3.125000e-02 : f32
      %22 = vector.broadcast %cst_13 : f32 to vector<1x256xf32>
      %23 = arith.mulf %21, %22 : vector<1x256xf32>
      %24 = vector.broadcast %23 : vector<1x256xf32> to vector<32x256xf32>
      %25 = arith.subf %12, %24 : vector<32x256xf32>
      %26 = arith.mulf %25, %25 : vector<32x256xf32>
      %cst_14 = arith.constant 0.000000e+00 : f32
      %27 = vector.shape_cast %15 : vector<32x1xi1> to vector<32x1xi1>
      %28 = vector.broadcast %27 : vector<32x1xi1> to vector<32x256xi1>
      %29 = vector.broadcast %cst_14 : f32 to vector<32x256xf32>
      %30 = arith.select %28, %26, %29 : vector<32x256xi1>, vector<32x256xf32>
      %cst_15 = arith.constant dense<0.000000e+00> : vector<256xf32>
      %31 = vector.multi_reduction <add>, %30, %cst_15 [0] : vector<32x256xf32> to vector<256xf32>
      %32 = vector.shape_cast %31 : vector<256xf32> to vector<1x256xf32>
      %cst_16 = arith.constant 3.125000e-02 : f32
      %33 = vector.broadcast %cst_16 : f32 to vector<1x256xf32>
      %34 = arith.mulf %32, %33 : vector<1x256xf32>
      %cst_17 = arith.constant 9.99999974E-6 : f32
      %35 = vector.broadcast %cst_17 : f32 to vector<1x256xf32>
      %36 = arith.addf %34, %35 : vector<1x256xf32>
      %37 = math.rsqrt %36 : vector<1x256xf32>
      %38 = vector.broadcast %37 : vector<1x256xf32> to vector<32x256xf32>
      %39 = arith.mulf %25, %38 : vector<32x256xf32>
      %c0_18 = arith.constant 0 : index
      %c0_19 = arith.constant 0 : index
      %40 = vector.load %arg5[%c0_18, %c0_19] : memref<1x256xf32, #tpu.memory_space<vmem>>, vector<1x256xf32>
      %41 = vector.broadcast %40 : vector<1x256xf32> to vector<32x256xf32>
      %42 = arith.mulf %39, %41 : vector<32x256xf32>
      %c0_20 = arith.constant 0 : index
      %c0_21 = arith.constant 0 : index
      %43 = vector.load %arg6[%c0_20, %c0_21] : memref<1x256xf32, #tpu.memory_space<vmem>>, vector<1x256xf32>
      %44 = vector.broadcast %43 : vector<1x256xf32> to vector<32x256xf32>
      %45 = arith.addf %42, %44 : vector<32x256xf32>
      %cst_22 = arith.constant 0.000000e+00 : f32
      %46 = vector.broadcast %cst_22 : f32 to vector<32x256xf32>
      %47 = arith.cmpf oge, %45, %46 : vector<32x256xf32>
      %cst_23 = arith.constant 2.000000e-01 : f32
      %48 = vector.broadcast %cst_23 : f32 to vector<32x256xf32>
      %49 = arith.mulf %48, %45 : vector<32x256xf32>
      %50 = arith.select %47, %45, %49 : vector<32x256xi1>, vector<32x256xf32>
      %c0_24 = arith.constant 0 : index
      %c0_25 = arith.constant 0 : index
      %51 = vector.load %arg7[%c0_24, %c0_25] : memref<32x256xf32, #tpu.memory_space<vmem>>, vector<32x256xf32>
      tpu.vector_store %arg7[%c0_24, %c0_25], %50 {strides = array<i32>} : memref<32x256xf32, #tpu.memory_space<vmem>>, vector<32x256xf32>,
    } else {
    }
    return
  }
  func.func @transform_0(%arg0: i32, %arg1: i32, %arg2: i32) -> (i32, i32) {
    %c0_i32 = arith.constant 0 : i32
    return %arg0, %arg2 : i32, i32
  }
  func.func @transform_1(%arg0: i32, %arg1: i32, %arg2: i32) -> (i32, i32) {
    %c0_i32 = arith.constant 0 : i32
    return %arg2, %arg1 : i32, i32
  }
  func.func @transform_2(%arg0: i32, %arg1: i32, %arg2: i32) -> (i32, i32) {
    %c0_i32 = arith.constant 0 : i32
    %c0_i32_0 = arith.constant 0 : i32
    return %c0_i32, %arg1 : i32, i32
  }
  func.func @transform_3(%arg0: i32, %arg1: i32, %arg2: i32) -> (i32, i32) {
    %c0_i32 = arith.constant 0 : i32
    %c0_i32_0 = arith.constant 0 : i32
    return %c0_i32, %arg1 : i32, i32
  }
  func.func @transform_4(%arg0: i32, %arg1: i32, %arg2: i32) -> (i32, i32) {
    %c0_i32 = arith.constant 0 : i32
    return %arg0, %arg1 : i32, i32
  }
}

module attributes {stable_mosaic.version = 11 : i64} {
  func.func @kernel(%arg0: i32, %arg1: i32, %arg2: i32, %arg3: memref<24x512xbf16, #tpu.memory_space<vmem>>, %arg4: memref<512x256xbf16, #tpu.memory_space<vmem>>, %arg5: memref<1x256xf32, #tpu.memory_space<vmem>>, %arg6: memref<1x256xf32, #tpu.memory_space<vmem>>, %arg7: memref<24x256xf32, #tpu.memory_space<vmem>>, %arg8: memref<24x256xf32, #tpu.memory_space<vmem>>) attributes {dimension_semantics = [#tpu.dimension_semantics<parallel>, #tpu.dimension_semantics<parallel>, #tpu.dimension_semantics<arbitrary>], iteration_bounds = array<i64: 1, 2, 8>, scalar_prefetch = 0 : i64, scratch_operands = 1 : i64, tpu.core_type = #tpu.core_type<tc>, window_params = [{transform_indices = @transform_0, window_bounds = array<i64: 24, 512>}, {transform_indices = @transform_1, window_bounds = array<i64: 512, 256>}, {transform_indices = @transform_2, window_bounds = array<i64: 1, 256>}, {transform_indices = @transform_3, window_bounds = array<i64: 1, 256>}, {transform_indices = @transform_4, window_bounds = array<i64: 24, 256>}]} {
    %c0_i32 = arith.constant 0 : i32
    %0 = arith.cmpi eq, %arg2, %c0_i32 : i32
    %1 = arith.extui %0 : i1 to i32
    %c0_i32_0 = arith.constant 0 : i32
    %2 = arith.cmpi ne, %1, %c0_i32_0 : i32
    scf.if %2 {
      %cst_9 = arith.constant 0.000000e+00 : f32
      %12 = vector.broadcast %cst_9 : f32 to vector<24x256xf32>
      %c0_10 = arith.constant 0 : index
      %c0_11 = arith.constant 0 : index
      %13 = vector.load %arg8[%c0_10, %c0_11] : memref<24x256xf32, #tpu.memory_space<vmem>>, vector<24x256xf32>
      tpu.vector_store %arg8[%c0_10, %c0_11], %12 {strides = array<i32>} : memref<24x256xf32, #tpu.memory_space<vmem>>, vector<24x256xf32>,
    } else {
    }
    %c0 = arith.constant 0 : index
    %c0_1 = arith.constant 0 : index
    %3 = vector.load %arg8[%c0, %c0_1] : memref<24x256xf32, #tpu.memory_space<vmem>>, vector<24x256xf32>
    %c0_2 = arith.constant 0 : index
    %c0_3 = arith.constant 0 : index
    %4 = vector.load %arg3[%c0_2, %c0_3] : memref<24x512xbf16, #tpu.memory_space<vmem>>, vector<24x512xbf16>
    %c0_4 = arith.constant 0 : index
    %c0_5 = arith.constant 0 : index
    %5 = vector.load %arg4[%c0_4, %c0_5] : memref<512x256xbf16, #tpu.memory_space<vmem>>, vector<512x256xbf16>
    %cst = arith.constant dense<0.000000e+00> : vector<24x256xf32>
    %6 = tpu.matmul %4, %5, %cst {dimension_numbers = #tpu.dot_dimension_numbers<[1], [0], [0], [1], [0, 0, 1, 1], [], []>} : vector<24x512xbf16>, vector<512x256xbf16>, vector<24x256xf32> -> vector<24x256xf32>
    %7 = arith.addf %3, %6 : vector<24x256xf32>
    %c0_6 = arith.constant 0 : index
    %c0_7 = arith.constant 0 : index
    %8 = vector.load %arg8[%c0_6, %c0_7] : memref<24x256xf32, #tpu.memory_space<vmem>>, vector<24x256xf32>
    tpu.vector_store %arg8[%c0_6, %c0_7], %7 {strides = array<i32>} : memref<24x256xf32, #tpu.memory_space<vmem>>, vector<24x256xf32>,
    %c7_i32 = arith.constant 7 : i32
    %9 = arith.cmpi eq, %arg2, %c7_i32 : i32
    %10 = arith.extui %9 : i1 to i32
    %c0_i32_8 = arith.constant 0 : i32
    %11 = arith.cmpi ne, %10, %c0_i32_8 : i32
    scf.if %11 {
      %c0_9 = arith.constant 0 : index
      %c0_10 = arith.constant 0 : index
      %12 = vector.load %arg8[%c0_9, %c0_10] : memref<24x256xf32, #tpu.memory_space<vmem>>, vector<24x256xf32>
      %13 = tpu.iota {dimensions = array<i32: 0>} : vector<24x1xi32>
      %c18_i32 = arith.constant 18 : i32
      %14 = vector.broadcast %c18_i32 : i32 to vector<24x1xi32>
      %15 = arith.cmpi slt, %13, %14 : vector<24x1xi32>
      %cst_11 = arith.constant 0.000000e+00 : f32
      %16 = vector.shape_cast %15 : vector<24x1xi1> to vector<24x1xi1>
      %17 = vector.broadcast %16 : vector<24x1xi1> to vector<24x256xi1>
      %18 = vector.broadcast %cst_11 : f32 to vector<24x256xf32>
      %19 = arith.select %17, %12, %18 : vector<24x256xi1>, vector<24x256xf32>
      %cst_12 = arith.constant dense<0.000000e+00> : vector<256xf32>
      %20 = vector.multi_reduction <add>, %19, %cst_12 [0] : vector<24x256xf32> to vector<256xf32>
      %21 = vector.shape_cast %20 : vector<256xf32> to vector<1x256xf32>
      %cst_13 = arith.constant 0.055555556 : f32
      %22 = vector.broadcast %cst_13 : f32 to vector<1x256xf32>
      %23 = arith.mulf %21, %22 : vector<1x256xf32>
      %24 = vector.broadcast %23 : vector<1x256xf32> to vector<24x256xf32>
      %25 = arith.subf %12, %24 : vector<24x256xf32>
      %26 = arith.mulf %25, %25 : vector<24x256xf32>
      %cst_14 = arith.constant 0.000000e+00 : f32
      %27 = vector.shape_cast %15 : vector<24x1xi1> to vector<24x1xi1>
      %28 = vector.broadcast %27 : vector<24x1xi1> to vector<24x256xi1>
      %29 = vector.broadcast %cst_14 : f32 to vector<24x256xf32>
      %30 = arith.select %28, %26, %29 : vector<24x256xi1>, vector<24x256xf32>
      %cst_15 = arith.constant dense<0.000000e+00> : vector<256xf32>
      %31 = vector.multi_reduction <add>, %30, %cst_15 [0] : vector<24x256xf32> to vector<256xf32>
      %32 = vector.shape_cast %31 : vector<256xf32> to vector<1x256xf32>
      %cst_16 = arith.constant 0.055555556 : f32
      %33 = vector.broadcast %cst_16 : f32 to vector<1x256xf32>
      %34 = arith.mulf %32, %33 : vector<1x256xf32>
      %cst_17 = arith.constant 9.99999974E-6 : f32
      %35 = vector.broadcast %cst_17 : f32 to vector<1x256xf32>
      %36 = arith.addf %34, %35 : vector<1x256xf32>
      %37 = math.rsqrt %36 : vector<1x256xf32>
      %38 = vector.broadcast %37 : vector<1x256xf32> to vector<24x256xf32>
      %39 = arith.mulf %25, %38 : vector<24x256xf32>
      %c0_18 = arith.constant 0 : index
      %c0_19 = arith.constant 0 : index
      %40 = vector.load %arg5[%c0_18, %c0_19] : memref<1x256xf32, #tpu.memory_space<vmem>>, vector<1x256xf32>
      %41 = vector.broadcast %40 : vector<1x256xf32> to vector<24x256xf32>
      %42 = arith.mulf %39, %41 : vector<24x256xf32>
      %c0_20 = arith.constant 0 : index
      %c0_21 = arith.constant 0 : index
      %43 = vector.load %arg6[%c0_20, %c0_21] : memref<1x256xf32, #tpu.memory_space<vmem>>, vector<1x256xf32>
      %44 = vector.broadcast %43 : vector<1x256xf32> to vector<24x256xf32>
      %45 = arith.addf %42, %44 : vector<24x256xf32>
      %cst_22 = arith.constant 0.000000e+00 : f32
      %46 = vector.broadcast %cst_22 : f32 to vector<24x256xf32>
      %47 = arith.cmpf oge, %45, %46 : vector<24x256xf32>
      %cst_23 = arith.constant 2.000000e-01 : f32
      %48 = vector.broadcast %cst_23 : f32 to vector<24x256xf32>
      %49 = arith.mulf %48, %45 : vector<24x256xf32>
      %50 = arith.select %47, %45, %49 : vector<24x256xi1>, vector<24x256xf32>
      %c0_24 = arith.constant 0 : index
      %c0_25 = arith.constant 0 : index
      %51 = vector.load %arg7[%c0_24, %c0_25] : memref<24x256xf32, #tpu.memory_space<vmem>>, vector<24x256xf32>
      tpu.vector_store %arg7[%c0_24, %c0_25], %50 {strides = array<i32>} : memref<24x256xf32, #tpu.memory_space<vmem>>, vector<24x256xf32>,
    } else {
    }
    return
  }
  func.func @transform_0(%arg0: i32, %arg1: i32, %arg2: i32) -> (i32, i32) {
    %c0_i32 = arith.constant 0 : i32
    return %arg0, %arg2 : i32, i32
  }
  func.func @transform_1(%arg0: i32, %arg1: i32, %arg2: i32) -> (i32, i32) {
    %c0_i32 = arith.constant 0 : i32
    return %arg2, %arg1 : i32, i32
  }
  func.func @transform_2(%arg0: i32, %arg1: i32, %arg2: i32) -> (i32, i32) {
    %c0_i32 = arith.constant 0 : i32
    %c0_i32_0 = arith.constant 0 : i32
    return %c0_i32, %arg1 : i32, i32
  }
  func.func @transform_3(%arg0: i32, %arg1: i32, %arg2: i32) -> (i32, i32) {
    %c0_i32 = arith.constant 0 : i32
    %c0_i32_0 = arith.constant 0 : i32
    return %c0_i32, %arg1 : i32, i32
  }
  func.func @transform_4(%arg0: i32, %arg1: i32, %arg2: i32) -> (i32, i32) {
    %c0_i32 = arith.constant 0 : i32
    return %arg0, %arg1 : i32, i32
  }
}

module attributes {stable_mosaic.version = 11 : i64} {
  func.func @kernel(%arg0: i32, %arg1: i32, %arg2: i32, %arg3: memref<8x512xbf16, #tpu.memory_space<vmem>>, %arg4: memref<512x128xbf16, #tpu.memory_space<vmem>>, %arg5: memref<1x128xf32, #tpu.memory_space<vmem>>, %arg6: memref<8x128xf32, #tpu.memory_space<vmem>>, %arg7: memref<8x128xf32, #tpu.memory_space<vmem>>) attributes {dimension_semantics = [#tpu.dimension_semantics<parallel>, #tpu.dimension_semantics<parallel>, #tpu.dimension_semantics<arbitrary>], iteration_bounds = array<i64: 1, 1, 16>, scalar_prefetch = 0 : i64, scratch_operands = 1 : i64, tpu.core_type = #tpu.core_type<tc>, window_params = [{transform_indices = @transform_0, window_bounds = array<i64: 8, 512>}, {transform_indices = @transform_1, window_bounds = array<i64: 512, 128>}, {transform_indices = @transform_2, window_bounds = array<i64: 1, 128>}, {transform_indices = @transform_3, window_bounds = array<i64: 8, 128>}]} {
    %c0_i32 = arith.constant 0 : i32
    %0 = arith.cmpi eq, %arg2, %c0_i32 : i32
    %1 = arith.extui %0 : i1 to i32
    %c0_i32_0 = arith.constant 0 : i32
    %2 = arith.cmpi ne, %1, %c0_i32_0 : i32
    scf.if %2 {
      %cst_9 = arith.constant 0.000000e+00 : f32
      %12 = vector.broadcast %cst_9 : f32 to vector<8x128xf32>
      %c0_10 = arith.constant 0 : index
      %c0_11 = arith.constant 0 : index
      %13 = vector.load %arg7[%c0_10, %c0_11] : memref<8x128xf32, #tpu.memory_space<vmem>>, vector<8x128xf32>
      tpu.vector_store %arg7[%c0_10, %c0_11], %12 {strides = array<i32>} : memref<8x128xf32, #tpu.memory_space<vmem>>, vector<8x128xf32>,
    } else {
    }
    %c0 = arith.constant 0 : index
    %c0_1 = arith.constant 0 : index
    %3 = vector.load %arg7[%c0, %c0_1] : memref<8x128xf32, #tpu.memory_space<vmem>>, vector<8x128xf32>
    %c0_2 = arith.constant 0 : index
    %c0_3 = arith.constant 0 : index
    %4 = vector.load %arg3[%c0_2, %c0_3] : memref<8x512xbf16, #tpu.memory_space<vmem>>, vector<8x512xbf16>
    %c0_4 = arith.constant 0 : index
    %c0_5 = arith.constant 0 : index
    %5 = vector.load %arg4[%c0_4, %c0_5] : memref<512x128xbf16, #tpu.memory_space<vmem>>, vector<512x128xbf16>
    %cst = arith.constant dense<0.000000e+00> : vector<8x128xf32>
    %6 = tpu.matmul %4, %5, %cst {dimension_numbers = #tpu.dot_dimension_numbers<[1], [0], [0], [1], [0, 0, 1, 1], [], []>} : vector<8x512xbf16>, vector<512x128xbf16>, vector<8x128xf32> -> vector<8x128xf32>
    %7 = arith.addf %3, %6 : vector<8x128xf32>
    %c0_6 = arith.constant 0 : index
    %c0_7 = arith.constant 0 : index
    %8 = vector.load %arg7[%c0_6, %c0_7] : memref<8x128xf32, #tpu.memory_space<vmem>>, vector<8x128xf32>
    tpu.vector_store %arg7[%c0_6, %c0_7], %7 {strides = array<i32>} : memref<8x128xf32, #tpu.memory_space<vmem>>, vector<8x128xf32>,
    %c15_i32 = arith.constant 15 : i32
    %9 = arith.cmpi eq, %arg2, %c15_i32 : i32
    %10 = arith.extui %9 : i1 to i32
    %c0_i32_8 = arith.constant 0 : i32
    %11 = arith.cmpi ne, %10, %c0_i32_8 : i32
    scf.if %11 {
      %c0_9 = arith.constant 0 : index
      %c0_10 = arith.constant 0 : index
      %12 = vector.load %arg7[%c0_9, %c0_10] : memref<8x128xf32, #tpu.memory_space<vmem>>, vector<8x128xf32>
      %c0_11 = arith.constant 0 : index
      %c0_12 = arith.constant 0 : index
      %13 = vector.load %arg5[%c0_11, %c0_12] : memref<1x128xf32, #tpu.memory_space<vmem>>, vector<1x128xf32>
      %14 = vector.broadcast %13 : vector<1x128xf32> to vector<8x128xf32>
      %15 = arith.addf %12, %14 : vector<8x128xf32>
      %c0_13 = arith.constant 0 : index
      %c0_14 = arith.constant 0 : index
      %16 = vector.load %arg6[%c0_13, %c0_14] : memref<8x128xf32, #tpu.memory_space<vmem>>, vector<8x128xf32>
      tpu.vector_store %arg6[%c0_13, %c0_14], %15 {strides = array<i32>} : memref<8x128xf32, #tpu.memory_space<vmem>>, vector<8x128xf32>,
    } else {
    }
    return
  }
  func.func @transform_0(%arg0: i32, %arg1: i32, %arg2: i32) -> (i32, i32) {
    %c0_i32 = arith.constant 0 : i32
    return %arg0, %arg2 : i32, i32
  }
  func.func @transform_1(%arg0: i32, %arg1: i32, %arg2: i32) -> (i32, i32) {
    %c0_i32 = arith.constant 0 : i32
    return %arg2, %arg1 : i32, i32
  }
  func.func @transform_2(%arg0: i32, %arg1: i32, %arg2: i32) -> (i32, i32) {
    %c0_i32 = arith.constant 0 : i32
    %c0_i32_0 = arith.constant 0 : i32
    return %c0_i32, %arg1 : i32, i32
  }
  func.func @transform_3(%arg0: i32, %arg1: i32, %arg2: i32) -> (i32, i32) {
    %c0_i32 = arith.constant 0 : i32
    return %arg0, %arg1 : i32, i32
  }
}

</mosaic_0001>

<llo_original>
// kernel: discriminator_forward.5
$region0: #{discriminator_forward.5}
  #allocation0 [shape = 'u32[]', space=smem, size = 0x4, offset = 0x4, fixed_abs, tag = 'smem constant byte address 0x4 - core index']
  #allocation1 [shape = 'u32[144,128]{1,0:T(1,128)}', space=vmem, size = 0x12000, scoped, tag = 'internal scratch']
  #allocation2 [shape = 'f32[256,128]{1,0:T(8,128)}', space=vmem, size = 0x20000, scoped, tag = 'scratch operand']
  %s0 = inlined_call_operand.vmem [shape: bf16[512,128], index: 0, kind: input, shape index: {}]
  %s1 = inlined_call_operand.vmem [shape: bf16[128,128], index: 1, kind: input, shape index: {}]
  %s2 = inlined_call_operand.vmem [shape: f32[1,128], index: 2, kind: input, shape index: {}]
  %s3 = inlined_call_operand.vmem [shape: f32[512,128], index: 3, kind: output, shape index: {}]
  %s4 = sld [smem:[#allocation0]]
  $region53: #{discriminator_forward.5} parent=0
    _
  %s6 = ssub.s32 1, %s4
  %s7 = scalar_select 0, %s6, %s4
  loop: start=0, step=1, limit=4
  $region2: #{discriminator_forward.5} parent=0 // loop_pre_header
    _
  $region3: #{discriminator_forward.5} parent=0 // loop_header
    %s9 = sphi 0, %s13
    %p10 = scmp.ge.s32.totalorder %s9, 4
    %s16 = sphi 0, %s35
    %s17 = sphi 0, %s31
    %s18 = sphi 0, %s27
    %s19 = sphi 0, %s16
    %s20 = sphi 0, %s17
    %s21 = sphi 0, %s18
    %s22 = sphi 0, %s19
    %s23 = sphi 0, %s20
    %s24 = sphi 0, %s21
    %s40 = sphi 0, %s42
    %s43 = sphi 0, %s40
    %s44 = sphi 0, %s43
    %s60 = sphi 0, %s44
    %s68 = sphi 0, %s70
    %s71 = sphi 0, %s68
    %s72 = sphi 0, %s71
    %s88 = sphi 0, %s72
    %s94 = sphi 0, %s96
    %s97 = sphi 0, %s94
    %s98 = sphi 0, %s97
    %s114 = sphi 0, %s98
    %s122 = sphi 0, %s124
    %s125 = sphi 0, %s122
    %s126 = sphi 0, %s125
    %s142 = sphi 0, %s126
  $region4: #{discriminator_forward.5} parent=0 // loop_header_branch
    %12 = sbr.rel (%p10) target = $region8
  $region5: #{discriminator_forward.5} parent=0 // loop_body
    %s14 = ssub.s32 %s9, 1
    %s15 = ssub.s32 %s9, 2
    %s25 = sadd.s32 1, %s18
    %p26 = scmp.ge.s32.totalorder %s25, 1
    %s27 = scalar_select %p26, 0, %s25
    %s28 = sadd.s32 1, %s17
    %s29 = scalar_select %p26, %s28, %s17
    %p30 = scmp.ge.s32.totalorder %s29, 1
    %s31 = scalar_select %p30, 0, %s29
    %s32 = sadd.s32 1, %s16
    %s33 = scalar_select %p30, %s32, %s16
    %p34 = scmp.ge.s32.totalorder %s33, 2
    %s35 = scalar_select %p34, 0, %s33
    %s36 = ssub.s32 %s16, %s35
    %s37 = ssub.s32 %s18, %s27
    %s38 = sor.u32 %s36, %s37
    %p39 = scmp.eq.s32.totalorder %s38, 0
    %s41 = sadd.s32 %s40, 1
    %s42 = scalar_select %p39, %s40, %s41
    %p45 = pneg %p39
    %p46 = scmp.eq.s32.totalorder %s9, 1
    %p47 = por %p45, %p46
    %p48 = scmp.ne.s32.totalorder %s40, %s43
    %p49 = scmp.eq.s32.totalorder %s9, 0
    %p50 = por %p48, %p49
    %p51 = scmp.ne.s32.totalorder %s40, %s43
    %p52 = scmp.eq.s32.totalorder %s14, 1
    %p53 = por %p51, %p52
    %p54 = scmp.ne.s32.totalorder %s43, %s44
    %p55 = scmp.eq.s32.totalorder %s14, 0
    %p56 = por %p54, %p55
    %p57 = scmp.ne.s32.totalorder %s43, %s44
    %p58 = scmp.eq.s32.totalorder %s15, 1
    %p59 = por %p57, %p58
    %p61 = scmp.ne.s32.totalorder %s44, %s60
    %p62 = scmp.eq.s32.totalorder %s15, 0
    %p63 = por %p61, %p62
    %s64 = ssub.s32 %s18, %s27
    %s65 = ssub.s32 %s17, %s31
    %s66 = sor.u32 %s64, %s65
    %p67 = scmp.eq.s32.totalorder %s66, 0
    %s69 = sadd.s32 %s68, 1
    %s70 = scalar_select %p67, %s68, %s69
    %p73 = pneg %p67
    %p74 = scmp.eq.s32.totalorder %s9, 1
    %p75 = por %p73, %p74
    %p76 = scmp.ne.s32.totalorder %s68, %s71
    %p77 = scmp.eq.s32.totalorder %s9, 0
    %p78 = por %p76, %p77
    %p79 = scmp.ne.s32.totalorder %s68, %s71
    %p80 = scmp.eq.s32.totalorder %s14, 1
    %p81 = por %p79, %p80
    %p82 = scmp.ne.s32.totalorder %s71, %s72
    %p83 = scmp.eq.s32.totalorder %s14, 0
    %p84 = por %p82, %p83
    %p85 = scmp.ne.s32.totalorder %s71, %s72
    %p86 = scmp.eq.s32.totalorder %s15, 1
    %p87 = por %p85, %p86
    %p89 = scmp.ne.s32.totalorder %s72, %s88
    %p90 = scmp.eq.s32.totalorder %s15, 0
    %p91 = por %p89, %p90
    %s92 = ssub.s32 %s17, %s31
    %p93 = scmp.eq.s32.totalorder %s92, 0
    %s95 = sadd.s32 %s94, 1
    %s96 = scalar_select %p93, %s94, %s95
    %p99 = pneg %p93
    %p100 = scmp.eq.s32.totalorder %s9, 1
    %p101 = por %p99, %p100
    %p102 = scmp.ne.s32.totalorder %s94, %s97
    %p103 = scmp.eq.s32.totalorder %s9, 0
    %p104 = por %p102, %p103
    %p105 = scmp.ne.s32.totalorder %s94, %s97
    %p106 = scmp.eq.s32.totalorder %s14, 1
    %p107 = por %p105, %p106
    %p108 = scmp.ne.s32.totalorder %s97, %s98
    %p109 = scmp.eq.s32.totalorder %s14, 0
    %p110 = por %p108, %p109
    %p111 = scmp.ne.s32.totalorder %s97, %s98
    %p112 = scmp.eq.s32.totalorder %s15, 1
    %p113 = por %p111, %p112
    %p115 = scmp.ne.s32.totalorder %s98, %s114
    %p116 = scmp.eq.s32.totalorder %s15, 0
    %p117 = por %p115, %p116
    %s118 = ssub.s32 %s16, %s35
    %s119 = ssub.s32 %s17, %s31
    %s120 = sor.u32 %s118, %s119
    %p121 = scmp.eq.s32.totalorder %s120, 0
    %s123 = sadd.s32 %s122, 1
    %s124 = scalar_select %p121, %s122, %s123
    %p127 = pneg %p121
    %p128 = scmp.eq.s32.totalorder %s9, 1
    %p129 = por %p127, %p128
    %p130 = scmp.ne.s32.totalorder %s122, %s125
    %p131 = scmp.eq.s32.totalorder %s9, 0
    %p132 = por %p130, %p131
    %p133 = scmp.ne.s32.totalorder %s122, %s125
    %p134 = scmp.eq.s32.totalorder %s14, 1
    %p135 = por %p133, %p134
    %p136 = scmp.ne.s32.totalorder %s125, %s126
    %p137 = scmp.eq.s32.totalorder %s14, 0
    %p138 = por %p136, %p137
    %p139 = scmp.ne.s32.totalorder %s125, %s126
    %p140 = scmp.eq.s32.totalorder %s15, 1
    %p141 = por %p139, %p140
    %p143 = scmp.ne.s32.totalorder %s126, %s142
    %p144 = scmp.eq.s32.totalorder %s15, 0
    %p145 = por %p143, %p144
    %p146 = scmp.le.s32.totalorder 1, %s9
    %p147 = scmp.lt.s32.totalorder %s9, 3
    %p148 = pnand %p146, %p147
    %p149 = pneg %p148
    // Predicated region
    $region9: #{discriminator_forward.5} parent=5 // pred_check
      _
    $region10: #{discriminator_forward.5} parent=5 // pred_check_branch
      %151 = sbr.rel (%p148) target = $region12
    $region11: #{discriminator_forward.5} parent=5 // pred_region
      %s152 = ssub.s32 %s9, 1
      // Predicated region
      $region13: #{discriminator_forward.5} parent=11 // pred_check
        %p153 = pneg %p84
      $region14: #{discriminator_forward.5} parent=11 // pred_check_branch
        %155 = sbr.rel (%p153) target = $region16
      $region15: #{discriminator_forward.5} parent=11 // pred_region
        %s156 = smul.u32 16, %s21
        %p157 = scmp.lt.s32.totalorder %s156, 15
        %s158 = scalar_select %p157, %s156, 15
        %p159 = scmp.lt.s32.totalorder %s20, 0
        %s160 = scalar_select %p159, %s20, 0
        %s161 = sadd.s32 %s160, %s158
        %s162 = smul.addr %s161, 4
        %s163 = scalar_lea.vmem %s1, %s162
        %s164 = smul.u32 16, %s21
      $region16: #{discriminator_forward.5} parent=11 // pred_fallthru
        _
      // Predicated region
      $region17: #{discriminator_forward.5} parent=11 // pred_check
        %p165 = pneg %p110
      $region18: #{discriminator_forward.5} parent=11 // pred_check_branch
        %167 = sbr.rel (%p165) target = $region20
      $region19: #{discriminator_forward.5} parent=11 // pred_region
        %p168 = scmp.lt.s32.totalorder %s20, 0
        %s169 = scalar_select %p168, %s20, 0
        %s170 = scalar_lea.vmem %s2, %s169
      $region20: #{discriminator_forward.5} parent=11 // pred_fallthru
        _
    $region12: #{discriminator_forward.5} parent=5 // pred_fallthru
      _
    %p171 = scmp.lt.s32.totalorder %s9, 2
    // Predicated region
    $region21: #{discriminator_forward.5} parent=5 // pred_check
      %p172 = pneg %p171
    $region22: #{discriminator_forward.5} parent=5 // pred_check_branch
      %174 = sbr.rel (%p172) target = $region24
    $region23: #{discriminator_forward.5} parent=5 // pred_region
      // Predicated region
      $region25: #{discriminator_forward.5} parent=23 // pred_check
        %p175 = pneg %p50
      $region26: #{discriminator_forward.5} parent=23 // pred_check_branch
        %177 = sbr.rel (%p175) target = $region28
      $region27: #{discriminator_forward.5} parent=23 // pred_region
        %s178 = smul.u32 32, %s16
        %p179 = scmp.lt.s32.totalorder %s178, 63
        %s180 = scalar_select %p179, %s178, 63
        %p181 = scmp.lt.s32.totalorder %s18, 0
        %s182 = scalar_select %p181, %s18, 0
        %s183 = sadd.s32 %s182, %s180
        %s184 = smul.addr %s183, 4
        %s185 = scalar_lea.vmem %s0, %s184
        %s186 = smul.u32 32, %s16
      $region28: #{discriminator_forward.5} parent=23 // pred_fallthru
        _
    $region24: #{discriminator_forward.5} parent=5 // pred_fallthru
      _
    %p187 = scmp.le.s32.totalorder 1, %s9
    %p188 = scmp.lt.s32.totalorder %s9, 3
    %p189 = pnand %p187, %p188
    %p190 = pneg %p189
    // Predicated region
    $region29: #{discriminator_forward.5} parent=5 // pred_check
      _
    $region30: #{discriminator_forward.5} parent=5 // pred_check_branch
      %192 = sbr.rel (%p189) target = $region32
    $region31: #{discriminator_forward.5} parent=5 // pred_region
      %s193 = ssub.s32 %s9, 1
      %s194 = smul.u32 32, %s19
      %p195 = scmp.lt.s32.totalorder %s194, 63
      %s196 = scalar_select %p195, %s194, 63
      %p197 = scmp.lt.s32.totalorder %s21, 0
      %s198 = scalar_select %p197, %s21, 0
      %s199 = sadd.s32 %s198, %s196
      %s200 = smul.addr %s199, 4
      %s201 = scalar_lea.vmem %s0, %s200
      %p202 = pneg %p56
      %p203 = pneg %p53
      %s204 = smul.u32 16, %s21
      %p205 = scmp.lt.s32.totalorder %s204, 15
      %s206 = scalar_select %p205, %s204, 15
      %p207 = scmp.lt.s32.totalorder %s20, 0
      %s208 = scalar_select %p207, %s20, 0
      %s209 = sadd.s32 %s208, %s206
      %s210 = smul.addr %s209, 4
      %s211 = scalar_lea.vmem %s1, %s210
      %p212 = pneg %p84
      %p213 = pneg %p81
      %p214 = scmp.lt.s32.totalorder %s20, 0
      %s215 = scalar_select %p214, %s20, 0
      %s216 = scalar_lea.vmem %s2, %s215
      %p217 = pneg %p110
      %p218 = pneg %p107
      %p219 = pneg %p138
      %p220 = pneg %p135
      %s221 = smul.u32 32, %s19
      %p222 = scmp.lt.s32.totalorder %s221, 63
      %s223 = scalar_select %p222, %s221, 63
      %p224 = scmp.lt.s32.totalorder %s20, 0
      %s225 = scalar_select %p224, %s20, 0
      %s226 = sadd.s32 %s225, %s223
      %s227 = smul.addr %s226, 8
      %s228 = scalar_lea.vmem %s3, %s227
      %s229 = smul.u32 32, %s19
      %p230 = scmp.lt.s32.totalorder %s229, 63
      %s231 = scalar_select %p230, %s229, 63
      %p232 = scmp.lt.s32.totalorder %s21, 0
      %s233 = scalar_select %p232, %s21, 0
      %s234 = sadd.s32 %s233, %s231
      %s235 = smul.addr %s234, 4
      %s236 = scalar_lea.vmem %s0, %s235
      %s237 = smul.u32 32, %s19
      %s238 = smul.u32 16, %s21
      %p239 = scmp.lt.s32.totalorder %s238, 15
      %s240 = scalar_select %p239, %s238, 15
      %p241 = scmp.lt.s32.totalorder %s20, 0
      %s242 = scalar_select %p241, %s20, 0
      %s243 = sadd.s32 %s242, %s240
      %s244 = smul.addr %s243, 4
      %s245 = scalar_lea.vmem %s1, %s244
      %s246 = smul.u32 16, %s21
      %p247 = scmp.lt.s32.totalorder %s20, 0
      %s248 = scalar_select %p247, %s20, 0
      %s249 = scalar_lea.vmem %s2, %s248
      %s250 = smul.u32 32, %s19
      %p251 = scmp.lt.s32.totalorder %s250, 63
      %s252 = scalar_select %p251, %s250, 63
      %p253 = scmp.lt.s32.totalorder %s20, 0
      %s254 = scalar_select %p253, %s20, 0
      %s255 = sadd.s32 %s254, %s252
      %s256 = smul.addr %s255, 8
      %s257 = scalar_lea.vmem %s3, %s256
      %s258 = smul.u32 32, %s19
      %p260 = scmp.eq.s32.totalorder %s21, 0
      // Predicated region
      $region33: #{discriminator_forward.5} parent=31 // pred_check
        %p261 = pneg %p260
      $region34: #{discriminator_forward.5} parent=31 // pred_check_branch
        %263 = sbr.rel (%p261) target = $region36
      $region35: #{discriminator_forward.5} parent=31 // pred_region
        %264 = vst [vmem:[#allocation2] sm:$0xff] 0.0
        %265 = vst [vmem:[#allocation2 + $0x8] sm:$0xff] 0.0
        %266 = vst [vmem:[#allocation2 + $0x10] sm:$0xff] 0.0
        %267 = vst [vmem:[#allocation2 + $0x18] sm:$0xff] 0.0
        %268 = vst [vmem:[#allocation2 + $0x20] sm:$0xff] 0.0
        %269 = vst [vmem:[#allocation2 + $0x28] sm:$0xff] 0.0
        %270 = vst [vmem:[#allocation2 + $0x30] sm:$0xff] 0.0
        %271 = vst [vmem:[#allocation2 + $0x38] sm:$0xff] 0.0
        %272 = vst [vmem:[#allocation2 + $0x40] sm:$0xff] 0.0
        %273 = vst [vmem:[#allocation2 + $0x48] sm:$0xff] 0.0
        %274 = vst [vmem:[#allocation2 + $0x50] sm:$0xff] 0.0
        %275 = vst [vmem:[#allocation2 + $0x58] sm:$0xff] 0.0
        %276 = vst [vmem:[#allocation2 + $0x60] sm:$0xff] 0.0
        %277 = vst [vmem:[#allocation2 + $0x68] sm:$0xff] 0.0
        %278 = vst [vmem:[#allocation2 + $0x70] sm:$0xff] 0.0
        %279 = vst [vmem:[#allocation2 + $0x78] sm:$0xff] 0.0
        %280 = vst [vmem:[#allocation2 + $0x80] sm:$0xff] 0.0
        %281 = vst [vmem:[#allocation2 + $0x88] sm:$0xff] 0.0
        %282 = vst [vmem:[#allocation2 + $0x90] sm:$0xff] 0.0
        %283 = vst [vmem:[#allocation2 + $0x98] sm:$0xff] 0.0
        %284 = vst [vmem:[#allocation2 + $0xa0] sm:$0xff] 0.0
        %285 = vst [vmem:[#allocation2 + $0xa8] sm:$0xff] 0.0
        %286 = vst [vmem:[#allocation2 + $0xb0] sm:$0xff] 0.0
        %287 = vst [vmem:[#allocation2 + $0xb8] sm:$0xff] 0.0
        %288 = vst [vmem:[#allocation2 + $0xc0] sm:$0xff] 0.0
        %289 = vst [vmem:[#allocation2 + $0xc8] sm:$0xff] 0.0
        %290 = vst [vmem:[#allocation2 + $0xd0] sm:$0xff] 0.0
        %291 = vst [vmem:[#allocation2 + $0xd8] sm:$0xff] 0.0
        %292 = vst [vmem:[#allocation2 + $0xe0] sm:$0xff] 0.0
        %293 = vst [vmem:[#allocation2 + $0xe8] sm:$0xff] 0.0
        %294 = vst [vmem:[#allocation2 + $0xf0] sm:$0xff] 0.0
        %295 = vst [vmem:[#allocation2 + $0xf8] sm:$0xff] 0.0
      $region36: #{discriminator_forward.5} parent=31 // pred_fallthru
        _
      %v296 = vld [vmem:[#allocation2] sm:$0xff]
      %v297 = vld [vmem:[#allocation2 + $0x8] sm:$0xff]
      %v298 = vld [vmem:[#allocation2 + $0x10] sm:$0xff]
      %v299 = vld [vmem:[#allocation2 + $0x18] sm:$0xff]
      %v300 = vld [vmem:[#allocation2 + $0x20] sm:$0xff]
      %v301 = vld [vmem:[#allocation2 + $0x28] sm:$0xff]
      %v302 = vld [vmem:[#allocation2 + $0x30] sm:$0xff]
      %v303 = vld [vmem:[#allocation2 + $0x38] sm:$0xff]
      %v304 = vld [vmem:[#allocation2 + $0x40] sm:$0xff]
      %v305 = vld [vmem:[#allocation2 + $0x48] sm:$0xff]
      %v306 = vld [vmem:[#allocation2 + $0x50] sm:$0xff]
      %v307 = vld [vmem:[#allocation2 + $0x58] sm:$0xff]
      %v308 = vld [vmem:[#allocation2 + $0x60] sm:$0xff]
      %v309 = vld [vmem:[#allocation2 + $0x68] sm:$0xff]
      %v310 = vld [vmem:[#allocation2 + $0x70] sm:$0xff]
      %v311 = vld [vmem:[#allocation2 + $0x78] sm:$0xff]
      %v312 = vld [vmem:[#allocation2 + $0x80] sm:$0xff]
      %v313 = vld [vmem:[#allocation2 + $0x88] sm:$0xff]
      %v314 = vld [vmem:[#allocation2 + $0x90] sm:$0xff]
      %v315 = vld [vmem:[#allocation2 + $0x98] sm:$0xff]
      %v316 = vld [vmem:[#allocation2 + $0xa0] sm:$0xff]
      %v317 = vld [vmem:[#allocation2 + $0xa8] sm:$0xff]
      %v318 = vld [vmem:[#allocation2 + $0xb0] sm:$0xff]
      %v319 = vld [vmem:[#allocation2 + $0xb8] sm:$0xff]
      %v320 = vld [vmem:[#allocation2 + $0xc0] sm:$0xff]
      %v321 = vld [vmem:[#allocation2 + $0xc8] sm:$0xff]
      %v322 = vld [vmem:[#allocation2 + $0xd0] sm:$0xff]
      %v323 = vld [vmem:[#allocation2 + $0xd8] sm:$0xff]
      %v324 = vld [vmem:[#allocation2 + $0xe0] sm:$0xff]
      %v325 = vld [vmem:[#allocation2 + $0xe8] sm:$0xff]
      %v326 = vld [vmem:[#allocation2 + $0xf0] sm:$0xff]
      %v327 = vld [vmem:[#allocation2 + $0xf8] sm:$0xff]
      %v328 = vld [vmem:[%s236] sm:$0xf]
      %v329 = vld [vmem:[%s236 + $0x4] sm:$0xf]
      %v330 = vld [vmem:[%s236 + $0x8] sm:$0xf]
      %v331 = vld [vmem:[%s236 + $0xc] sm:$0xf]
      %v332 = vld [vmem:[%s236 + $0x10] sm:$0xf]
      %v333 = vld [vmem:[%s236 + $0x14] sm:$0xf]
      %v334 = vld [vmem:[%s236 + $0x18] sm:$0xf]
      %v335 = vld [vmem:[%s236 + $0x1c] sm:$0xf]
      %v336 = vld [vmem:[%s236 + $0x20] sm:$0xf]
      %v337 = vld [vmem:[%s236 + $0x24] sm:$0xf]
      %v338 = vld [vmem:[%s236 + $0x28] sm:$0xf]
      %v339 = vld [vmem:[%s236 + $0x2c] sm:$0xf]
      %v340 = vld [vmem:[%s236 + $0x30] sm:$0xf]
      %v341 = vld [vmem:[%s236 + $0x34] sm:$0xf]
      %v342 = vld [vmem:[%s236 + $0x38] sm:$0xf]
      %v343 = vld [vmem:[%s236 + $0x3c] sm:$0xf]
      %v344 = vld [vmem:[%s236 + $0x40] sm:$0xf]
      %v345 = vld [vmem:[%s236 + $0x44] sm:$0xf]
      %v346 = vld [vmem:[%s236 + $0x48] sm:$0xf]
      %v347 = vld [vmem:[%s236 + $0x4c] sm:$0xf]
      %v348 = vld [vmem:[%s236 + $0x50] sm:$0xf]
      %v349 = vld [vmem:[%s236 + $0x54] sm:$0xf]
      %v350 = vld [vmem:[%s236 + $0x58] sm:$0xf]
      %v351 = vld [vmem:[%s236 + $0x5c] sm:$0xf]
      %v352 = vld [vmem:[%s236 + $0x60] sm:$0xf]
      %v353 = vld [vmem:[%s236 + $0x64] sm:$0xf]
      %v354 = vld [vmem:[%s236 + $0x68] sm:$0xf]
      %v355 = vld [vmem:[%s236 + $0x6c] sm:$0xf]
      %v356 = vld [vmem:[%s236 + $0x70] sm:$0xf]
      %v357 = vld [vmem:[%s236 + $0x74] sm:$0xf]
      %v358 = vld [vmem:[%s236 + $0x78] sm:$0xf]
      %v359 = vld [vmem:[%s236 + $0x7c] sm:$0xf]
      %v360 = vld [vmem:[%s245] sm:$0xf]
      %v361 = vld [vmem:[%s245 + $0x4] sm:$0xf]
      %v362 = vld [vmem:[%s245 + $0x8] sm:$0xf]
      %v363 = vld [vmem:[%s245 + $0xc] sm:$0xf]
      %v364 = vld [vmem:[%s245 + $0x10] sm:$0xf]
      %v365 = vld [vmem:[%s245 + $0x14] sm:$0xf]
      %v366 = vld [vmem:[%s245 + $0x18] sm:$0xf]
      %v367 = vld [vmem:[%s245 + $0x1c] sm:$0xf]
      %v368 = vld [vmem:[%s245 + $0x20] sm:$0xf]
      %v369 = vld [vmem:[%s245 + $0x24] sm:$0xf]
      %v370 = vld [vmem:[%s245 + $0x28] sm:$0xf]
      %v371 = vld [vmem:[%s245 + $0x2c] sm:$0xf]
      %v372 = vld [vmem:[%s245 + $0x30] sm:$0xf]
      %v373 = vld [vmem:[%s245 + $0x34] sm:$0xf]
      %v374 = vld [vmem:[%s245 + $0x38] sm:$0xf]
      %v375 = vld [vmem:[%s245 + $0x3c] sm:$0xf]
      %v408 = vunpack.c.l.b16 %v328
      %v409 = vunpack.c.l.b16 %v329
      %v410 = vunpack.c.l.b16 %v330
      %v411 = vunpack.c.l.b16 %v331
      %v412 = vunpack.c.l.b16 %v332
      %v413 = vunpack.c.l.b16 %v333
      %v414 = vunpack.c.l.b16 %v334
      %v415 = vunpack.c.l.b16 %v335
      %v416 = vunpack.c.l.b16 %v336
      %v417 = vunpack.c.l.b16 %v337
      %v418 = vunpack.c.l.b16 %v338
      %v419 = vunpack.c.l.b16 %v339
      %v420 = vunpack.c.l.b16 %v340
      %v421 = vunpack.c.l.b16 %v341
      %v422 = vunpack.c.l.b16 %v342
      %v423 = vunpack.c.l.b16 %v343
      %v424 = vunpack.c.l.b16 %v344
      %v425 = vunpack.c.l.b16 %v345
      %v426 = vunpack.c.l.b16 %v346
      %v427 = vunpack.c.l.b16 %v347
      %v428 = vunpack.c.l.b16 %v348
      %v429 = vunpack.c.l.b16 %v349
      %v430 = vunpack.c.l.b16 %v350
      %v431 = vunpack.c.l.b16 %v351
      %v432 = vunpack.c.l.b16 %v352
      %v433 = vunpack.c.l.b16 %v353
      %v434 = vunpack.c.l.b16 %v354
      %v435 = vunpack.c.l.b16 %v355
      %v436 = vunpack.c.l.b16 %v356
      %v437 = vunpack.c.l.b16 %v357
      %v438 = vunpack.c.l.b16 %v358
      %v439 = vunpack.c.l.b16 %v359
      %v440 = vpack.c.b16 %v409, %v408
      %v441 = vpack.c.b16 %v411, %v410
      %v442 = vpack.c.b16 %v413, %v412
      %v443 = vpack.c.b16 %v415, %v414
      %v444 = vpack.c.b16 %v417, %v416
      %v445 = vpack.c.b16 %v419, %v418
      %v446 = vpack.c.b16 %v421, %v420
      %v447 = vpack.c.b16 %v423, %v422
      %v448 = vpack.c.b16 %v425, %v424
      %v449 = vpack.c.b16 %v427, %v426
      %v450 = vpack.c.b16 %v429, %v428
      %v451 = vpack.c.b16 %v431, %v430
      %v452 = vpack.c.b16 %v433, %v432
      %v453 = vpack.c.b16 %v435, %v434
      %v454 = vpack.c.b16 %v437, %v436
      %v455 = vpack.c.b16 %v439, %v438
      %v488 = vunpack.c.l.b16 %v360
      %v489 = vunpack.c.l.b16 %v361
      %v490 = vunpack.c.l.b16 %v362
      %v491 = vunpack.c.l.b16 %v363
      %v492 = vunpack.c.l.b16 %v364
      %v493 = vunpack.c.l.b16 %v365
      %v494 = vunpack.c.l.b16 %v366
      %v495 = vunpack.c.l.b16 %v367
      %v496 = vunpack.c.l.b16 %v368
      %v497 = vunpack.c.l.b16 %v369
      %v498 = vunpack.c.l.b16 %v370
      %v499 = vunpack.c.l.b16 %v371
      %v500 = vunpack.c.l.b16 %v372
      %v501 = vunpack.c.l.b16 %v373
      %v502 = vunpack.c.l.b16 %v374
      %v503 = vunpack.c.l.b16 %v375
      %v504 = vpack.c.b16 %v489, %v488
      %v505 = vpack.c.b16 %v491, %v490
      %v506 = vpack.c.b16 %v493, %v492
      %v507 = vpack.c.b16 %v495, %v494
      %v508 = vpack.c.b16 %v497, %v496
      %v509 = vpack.c.b16 %v499, %v498
      %v510 = vpack.c.b16 %v501, %v500
      %v511 = vpack.c.b16 %v503, %v502
      %520 = vmatprep.subr.bf16.mxu0 0
      %521 = vmatpush1.bf16.msra.mxu0 %v504
      %522 = vmatprep.subr.bf16.mxu0 0
      %523 = vmatpush1.bf16.msra.mxu0 %v505
      %524 = vmatprep.subr.bf16.mxu0 0
      %525 = vmatpush1.bf16.msra.mxu0 %v506
      %526 = vmatprep.subr.bf16.mxu0 0
      %527 = vmatpush1.bf16.msra.mxu0 %v507
      %528 = vmatprep.subr.bf16.mxu0 0
      %529 = vmatpush1.bf16.msra.mxu0 %v508
      %530 = vmatprep.subr.bf16.mxu0 0
      %531 = vmatpush1.bf16.msra.mxu0 %v509
      %532 = vmatprep.subr.bf16.mxu0 0
      %533 = vmatpush1.bf16.msra.mxu0 %v510
      %534 = vmatprep.subr.bf16.mxu0 0
      %535 = vmatpush1.bf16.msra.mxu0 %v511
      %536 = vmatprep.subr.bf16.mxu0 0
      %537 = vmatpush1.bf16.msra.mxu0 0
      %538 = vmatprep.subr.bf16.mxu0 0
      %539 = vmatpush1.bf16.msra.mxu0 0
      %540 = vmatprep.subr.bf16.mxu0 0
      %541 = vmatpush1.bf16.msra.mxu0 0
      %542 = vmatprep.subr.bf16.mxu0 0
      %543 = vmatpush1.bf16.msra.mxu0 0
      %544 = vmatprep.subr.bf16.mxu0 0
      %545 = vmatpush1.bf16.msra.mxu0 0
      %546 = vmatprep.subr.bf16.mxu0 0
      %547 = vmatpush1.bf16.msra.mxu0 0
      %548 = vmatprep.subr.bf16.mxu0 0
      %549 = vmatpush1.bf16.msra.mxu0 0
      %550 = vmatprep.subr.bf16.mxu0 0
      %551 = vmatpush1.bf16.msra.mxu0 0
      %552 = vmatprep.mubr.bf16.mxu0 0
      %553 = vmatmul.mubr.bf16.gmra.mrb[0].mxu0 %v440
      %v554 = vpop.f32.mrb[0].mxu0
      %v555 = vadd.f32 0.0, %v554
      %v556 = vpop.f32.mrb[0].mxu0
      %v557 = vpop.f32.mrb[0].mxu0
      %v558 = vadd.f32 0.0, %v557
      %v559 = vpop.f32.mrb[0].mxu0
      %560 = vmatprep.mubr.bf16.mxu0 0
      %561 = vmatmul.mubr.bf16.gmra.mrb[0].mxu0 %v441
      %v562 = vpop.f32.mrb[0].mxu0
      %v563 = vadd.f32 0.0, %v562
      %v564 = vpop.f32.mrb[0].mxu0
      %v565 = vpop.f32.mrb[0].mxu0
      %v566 = vadd.f32 0.0, %v565
      %v567 = vpop.f32.mrb[0].mxu0
      %568 = vmatprep.mubr.bf16.mxu0 0
      %569 = vmatmul.mubr.bf16.gmra.mrb[0].mxu0 %v442
      %v570 = vpop.f32.mrb[0].mxu0
      %v571 = vadd.f32 0.0, %v570
      %v572 = vpop.f32.mrb[0].mxu0
      %v573 = vpop.f32.mrb[0].mxu0
      %v574 = vadd.f32 0.0, %v573
      %v575 = vpop.f32.mrb[0].mxu0
      %576 = vmatprep.mubr.bf16.mxu0 0
      %577 = vmatmul.mubr.bf16.gmra.mrb[0].mxu0 %v443
      %v578 = vpop.f32.mrb[0].mxu0
      %v579 = vadd.f32 0.0, %v578
      %v580 = vpop.f32.mrb[0].mxu0
      %v581 = vpop.f32.mrb[0].mxu0
      %v582 = vadd.f32 0.0, %v581
      %v583 = vpop.f32.mrb[0].mxu0
      %584 = vmatprep.mubr.bf16.mxu0 0
      %585 = vmatmul.mubr.bf16.gmra.mrb[0].mxu0 %v444
      %v586 = vpop.f32.mrb[0].mxu0
      %v587 = vadd.f32 0.0, %v586
      %v588 = vpop.f32.mrb[0].mxu0
      %v589 = vpop.f32.mrb[0].mxu0
      %v590 = vadd.f32 0.0, %v589
      %v591 = vpop.f32.mrb[0].mxu0
      %592 = vmatprep.mubr.bf16.mxu0 0
      %593 = vmatmul.mubr.bf16.gmra.mrb[0].mxu0 %v445
      %v594 = vpop.f32.mrb[0].mxu0
      %v595 = vadd.f32 0.0, %v594
      %v596 = vpop.f32.mrb[0].mxu0
      %v597 = vpop.f32.mrb[0].mxu0
      %v598 = vadd.f32 0.0, %v597
      %v599 = vpop.f32.mrb[0].mxu0
      %600 = vmatprep.mubr.bf16.mxu0 0
      %601 = vmatmul.mubr.bf16.gmra.mrb[0].mxu0 %v446
      %v602 = vpop.f32.mrb[0].mxu0
      %v603 = vadd.f32 0.0, %v602
      %v604 = vpop.f32.mrb[0].mxu0
      %v605 = vpop.f32.mrb[0].mxu0
      %v606 = vadd.f32 0.0, %v605
      %v607 = vpop.f32.mrb[0].mxu0
      %608 = vmatprep.mubr.bf16.mxu0 0
      %609 = vmatmul.mubr.bf16.gmra.mrb[0].mxu0 %v447
      %v610 = vpop.f32.mrb[0].mxu0
      %v611 = vadd.f32 0.0, %v610
      %v612 = vpop.f32.mrb[0].mxu0
      %v613 = vpop.f32.mrb[0].mxu0
      %v614 = vadd.f32 0.0, %v613
      %v615 = vpop.f32.mrb[0].mxu0
      %616 = vmatprep.mubr.bf16.mxu0 0
      %617 = vmatmul.mubr.bf16.gmra.mrb[0].mxu0 %v448
      %v618 = vpop.f32.mrb[0].mxu0
      %v619 = vadd.f32 0.0, %v618
      %v620 = vpop.f32.mrb[0].mxu0
      %v621 = vpop.f32.mrb[0].mxu0
      %v622 = vadd.f32 0.0, %v621
      %v623 = vpop.f32.mrb[0].mxu0
      %624 = vmatprep.mubr.bf16.mxu0 0
      %625 = vmatmul.mubr.bf16.gmra.mrb[0].mxu0 %v449
      %v626 = vpop.f32.mrb[0].mxu0
      %v627 = vadd.f32 0.0, %v626
      %v628 = vpop.f32.mrb[0].mxu0
      %v629 = vpop.f32.mrb[0].mxu0
      %v630 = vadd.f32 0.0, %v629
      %v631 = vpop.f32.mrb[0].mxu0
      %632 = vmatprep.mubr.bf16.mxu0 0
      %633 = vmatmul.mubr.bf16.gmra.mrb[0].mxu0 %v450
      %v634 = vpop.f32.mrb[0].mxu0
      %v635 = vadd.f32 0.0, %v634
      %v636 = vpop.f32.mrb[0].mxu0
      %v637 = vpop.f32.mrb[0].mxu0
      %v638 = vadd.f32 0.0, %v637
      %v639 = vpop.f32.mrb[0].mxu0
      %640 = vmatprep.mubr.bf16.mxu0 0
      %641 = vmatmul.mubr.bf16.gmra.mrb[0].mxu0 %v451
      %v642 = vpop.f32.mrb[0].mxu0
      %v643 = vadd.f32 0.0, %v642
      %v644 = vpop.f32.mrb[0].mxu0
      %v645 = vpop.f32.mrb[0].mxu0
      %v646 = vadd.f32 0.0, %v645
      %v647 = vpop.f32.mrb[0].mxu0
      %648 = vmatprep.mubr.bf16.mxu0 0
      %649 = vmatmul.mubr.bf16.gmra.mrb[0].mxu0 %v452
      %v650 = vpop.f32.mrb[0].mxu0
      %v651 = vadd.f32 0.0, %v650
      %v652 = vpop.f32.mrb[0].mxu0
      %v653 = vpop.f32.mrb[0].mxu0
      %v654 = vadd.f32 0.0, %v653
      %v655 = vpop.f32.mrb[0].mxu0
      %656 = vmatprep.mubr.bf16.mxu0 0
      %657 = vmatmul.mubr.bf16.gmra.mrb[0].mxu0 %v453
      %v658 = vpop.f32.mrb[0].mxu0
      %v659 = vadd.f32 0.0, %v658
      %v660 = vpop.f32.mrb[0].mxu0
      %v661 = vpop.f32.mrb[0].mxu0
      %v662 = vadd.f32 0.0, %v661
      %v663 = vpop.f32.mrb[0].mxu0
      %664 = vmatprep.mubr.bf16.mxu0 0
      %665 = vmatmul.mubr.bf16.gmra.mrb[0].mxu0 %v454
      %v666 = vpop.f32.mrb[0].mxu0
      %v667 = vadd.f32 0.0, %v666
      %v668 = vpop.f32.mrb[0].mxu0
      %v669 = vpop.f32.mrb[0].mxu0
      %v670 = vadd.f32 0.0, %v669
      %v671 = vpop.f32.mrb[0].mxu0
      %672 = vmatprep.mubr.bf16.mxu0 0
      %673 = vmatmul.mubr.bf16.gmra.mrb[0].mxu0 %v455
      %v674 = vpop.f32.mrb[0].mxu0
      %v675 = vadd.f32 0.0, %v674
      %v676 = vpop.f32.mrb[0].mxu0
      %v677 = vpop.f32.mrb[0].mxu0
      %v678 = vadd.f32 0.0, %v677
      %v679 = vpop.f32.mrb[0].mxu0
      %680 = vdwg.mxu0
      %v681 = vadd.f32 %v296, %v555
      %v682 = vadd.f32 %v297, %v558
      %v683 = vadd.f32 %v298, %v563
      %v684 = vadd.f32 %v299, %v566
      %v685 = vadd.f32 %v300, %v571
      %v686 = vadd.f32 %v301, %v574
      %v687 = vadd.f32 %v302, %v579
      %v688 = vadd.f32 %v303, %v582
      %v689 = vadd.f32 %v304, %v587
      %v690 = vadd.f32 %v305, %v590
      %v691 = vadd.f32 %v306, %v595
      %v692 = vadd.f32 %v307, %v598
      %v693 = vadd.f32 %v308, %v603
      %v694 = vadd.f32 %v309, %v606
      %v695 = vadd.f32 %v310, %v611
      %v696 = vadd.f32 %v311, %v614
      %v697 = vadd.f32 %v312, %v619
      %v698 = vadd.f32 %v313, %v622
      %v699 = vadd.f32 %v314, %v627
      %v700 = vadd.f32 %v315, %v630
      %v701 = vadd.f32 %v316, %v635
      %v702 = vadd.f32 %v317, %v638
      %v703 = vadd.f32 %v318, %v643
      %v704 = vadd.f32 %v319, %v646
      %v705 = vadd.f32 %v320, %v651
      %v706 = vadd.f32 %v321, %v654
      %v707 = vadd.f32 %v322, %v659
      %v708 = vadd.f32 %v323, %v662
      %v709 = vadd.f32 %v324, %v667
      %v710 = vadd.f32 %v325, %v670
      %v711 = vadd.f32 %v326, %v675
      %v712 = vadd.f32 %v327, %v678
      %713 = vst [vmem:[#allocation2] sm:$0xff] %v681
      %714 = vst [vmem:[#allocation2 + $0x8] sm:$0xff] %v682
      %715 = vst [vmem:[#allocation2 + $0x10] sm:$0xff] %v683
      %716 = vst [vmem:[#allocation2 + $0x18] sm:$0xff] %v684
      %717 = vst [vmem:[#allocation2 + $0x20] sm:$0xff] %v685
      %718 = vst [vmem:[#allocation2 + $0x28] sm:$0xff] %v686
      %719 = vst [vmem:[#allocation2 + $0x30] sm:$0xff] %v687
      %720 = vst [vmem:[#allocation2 + $0x38] sm:$0xff] %v688
      %721 = vst [vmem:[#allocation2 + $0x40] sm:$0xff] %v689
      %722 = vst [vmem:[#allocation2 + $0x48] sm:$0xff] %v690
      %723 = vst [vmem:[#allocation2 + $0x50] sm:$0xff] %v691
      %724 = vst [vmem:[#allocation2 + $0x58] sm:$0xff] %v692
      %725 = vst [vmem:[#allocation2 + $0x60] sm:$0xff] %v693
      %726 = vst [vmem:[#allocation2 + $0x68] sm:$0xff] %v694
      %727 = vst [vmem:[#allocation2 + $0x70] sm:$0xff] %v695
      %728 = vst [vmem:[#allocation2 + $0x78] sm:$0xff] %v696
      %729 = vst [vmem:[#allocation2 + $0x80] sm:$0xff] %v697
      %730 = vst [vmem:[#allocation2 + $0x88] sm:$0xff] %v698
      %731 = vst [vmem:[#allocation2 + $0x90] sm:$0xff] %v699
      %732 = vst [vmem:[#allocation2 + $0x98] sm:$0xff] %v700
      %733 = vst [vmem:[#allocation2 + $0xa0] sm:$0xff] %v701
      %734 = vst [vmem:[#allocation2 + $0xa8] sm:$0xff] %v702
      %735 = vst [vmem:[#allocation2 + $0xb0] sm:$0xff] %v703
      %736 = vst [vmem:[#allocation2 + $0xb8] sm:$0xff] %v704
      %737 = vst [vmem:[#allocation2 + $0xc0] sm:$0xff] %v705
      %738 = vst [vmem:[#allocation2 + $0xc8] sm:$0xff] %v706
      %739 = vst [vmem:[#allocation2 + $0xd0] sm:$0xff] %v707
      %740 = vst [vmem:[#allocation2 + $0xd8] sm:$0xff] %v708
      %741 = vst [vmem:[#allocation2 + $0xe0] sm:$0xff] %v709
      %742 = vst [vmem:[#allocation2 + $0xe8] sm:$0xff] %v710
      %743 = vst [vmem:[#allocation2 + $0xf0] sm:$0xff] %v711
      %744 = vst [vmem:[#allocation2 + $0xf8] sm:$0xff] %v712
      // Predicated region
      $region37: #{discriminator_forward.5} parent=31 // pred_check
        %p745 = pneg %p260
      $region38: #{discriminator_forward.5} parent=31 // pred_check_branch
        %747 = sbr.rel (%p745) target = $region40
      $region39: #{discriminator_forward.5} parent=31 // pred_region
        %v748 = vld [vmem:[#allocation2] sm:$0xff]
        %v749 = vld [vmem:[#allocation2 + $0x8] sm:$0xff]
        %v750 = vld [vmem:[#allocation2 + $0x10] sm:$0xff]
        %v751 = vld [vmem:[#allocation2 + $0x18] sm:$0xff]
        %v752 = vld [vmem:[#allocation2 + $0x20] sm:$0xff]
        %v753 = vld [vmem:[#allocation2 + $0x28] sm:$0xff]
        %v754 = vld [vmem:[#allocation2 + $0x30] sm:$0xff]
        %v755 = vld [vmem:[#allocation2 + $0x38] sm:$0xff]
        %v756 = vld [vmem:[#allocation2 + $0x40] sm:$0xff]
        %v757 = vld [vmem:[#allocation2 + $0x48] sm:$0xff]
        %v758 = vld [vmem:[#allocation2 + $0x50] sm:$0xff]
        %v759 = vld [vmem:[#allocation2 + $0x58] sm:$0xff]
        %v760 = vld [vmem:[#allocation2 + $0x60] sm:$0xff]
        %v761 = vld [vmem:[#allocation2 + $0x68] sm:$0xff]
        %v762 = vld [vmem:[#allocation2 + $0x70] sm:$0xff]
        %v763 = vld [vmem:[#allocation2 + $0x78] sm:$0xff]
        %v764 = vld [vmem:[#allocation2 + $0x80] sm:$0xff]
        %v765 = vld [vmem:[#allocation2 + $0x88] sm:$0xff]
        %v766 = vld [vmem:[#allocation2 + $0x90] sm:$0xff]
        %v767 = vld [vmem:[#allocation2 + $0x98] sm:$0xff]
        %v768 = vld [vmem:[#allocation2 + $0xa0] sm:$0xff]
        %v769 = vld [vmem:[#allocation2 + $0xa8] sm:$0xff]
        %v770 = vld [vmem:[#allocation2 + $0xb0] sm:$0xff]
        %v771 = vld [vmem:[#allocation2 + $0xb8] sm:$0xff]
        %v772 = vld [vmem:[#allocation2 + $0xc0] sm:$0xff]
        %v773 = vld [vmem:[#allocation2 + $0xc8] sm:$0xff]
        %v774 = vld [vmem:[#allocation2 + $0xd0] sm:$0xff]
        %v775 = vld [vmem:[#allocation2 + $0xd8] sm:$0xff]
        %v776 = vld [vmem:[#allocation2 + $0xe0] sm:$0xff]
        %v777 = vld [vmem:[#allocation2 + $0xe8] sm:$0xff]
        %v778 = vld [vmem:[#allocation2 + $0xf0] sm:$0xff]
        %v779 = vld [vmem:[#allocation2 + $0xf8] sm:$0xff]
        %v780 = vld [vmem:[%s249] sm:$0x1]
        %v782 = vlaneseq
        %v783 = vshrl.u32 %v782, 7
        %v784 = vsub.s32 0, %v783
        %v785 = vrot.slane %v780, %v784
        %v787 = vadd.f32 %v748, %v785
        %v788 = vadd.f32 %v749, %v785
        %v789 = vadd.f32 %v750, %v785
        %v790 = vadd.f32 %v751, %v785
        %v791 = vadd.f32 %v752, %v785
        %v792 = vadd.f32 %v753, %v785
        %v793 = vadd.f32 %v754, %v785
        %v794 = vadd.f32 %v755, %v785
        %v795 = vadd.f32 %v756, %v785
        %v796 = vadd.f32 %v757, %v785
        %v797 = vadd.f32 %v758, %v785
        %v798 = vadd.f32 %v759, %v785
        %v799 = vadd.f32 %v760, %v785
        %v800 = vadd.f32 %v761, %v785
        %v801 = vadd.f32 %v762, %v785
        %v802 = vadd.f32 %v763, %v785
        %v803 = vadd.f32 %v764, %v785
        %v804 = vadd.f32 %v765, %v785
        %v805 = vadd.f32 %v766, %v785
        %v806 = vadd.f32 %v767, %v785
        %v807 = vadd.f32 %v768, %v785
        %v808 = vadd.f32 %v769, %v785
        %v809 = vadd.f32 %v770, %v785
        %v810 = vadd.f32 %v771, %v785
        %v811 = vadd.f32 %v772, %v785
        %v812 = vadd.f32 %v773, %v785
        %v813 = vadd.f32 %v774, %v785
        %v814 = vadd.f32 %v775, %v785
        %v815 = vadd.f32 %v776, %v785
        %v816 = vadd.f32 %v777, %v785
        %v817 = vadd.f32 %v778, %v785
        %v818 = vadd.f32 %v779, %v785
        %vm819 = vcmp.ge.f32.partialorder %v787, 0.0
        %vm820 = vcmp.ge.f32.partialorder %v788, 0.0
        %vm821 = vcmp.ge.f32.partialorder %v789, 0.0
        %vm822 = vcmp.ge.f32.partialorder %v790, 0.0
        %vm823 = vcmp.ge.f32.partialorder %v791, 0.0
        %vm824 = vcmp.ge.f32.partialorder %v792, 0.0
        %vm825 = vcmp.ge.f32.partialorder %v793, 0.0
        %vm826 = vcmp.ge.f32.partialorder %v794, 0.0
        %vm827 = vcmp.ge.f32.partialorder %v795, 0.0
        %vm828 = vcmp.ge.f32.partialorder %v796, 0.0
        %vm829 = vcmp.ge.f32.partialorder %v797, 0.0
        %vm830 = vcmp.ge.f32.partialorder %v798, 0.0
        %vm831 = vcmp.ge.f32.partialorder %v799, 0.0
        %vm832 = vcmp.ge.f32.partialorder %v800, 0.0
        %vm833 = vcmp.ge.f32.partialorder %v801, 0.0
        %vm834 = vcmp.ge.f32.partialorder %v802, 0.0
        %vm835 = vcmp.ge.f32.partialorder %v803, 0.0
        %vm836 = vcmp.ge.f32.partialorder %v804, 0.0
        %vm837 = vcmp.ge.f32.partialorder %v805, 0.0
        %vm838 = vcmp.ge.f32.partialorder %v806, 0.0
        %vm839 = vcmp.ge.f32.partialorder %v807, 0.0
        %vm840 = vcmp.ge.f32.partialorder %v808, 0.0
        %vm841 = vcmp.ge.f32.partialorder %v809, 0.0
        %vm842 = vcmp.ge.f32.partialorder %v810, 0.0
        %vm843 = vcmp.ge.f32.partialorder %v811, 0.0
        %vm844 = vcmp.ge.f32.partialorder %v812, 0.0
        %vm845 = vcmp.ge.f32.partialorder %v813, 0.0
        %vm846 = vcmp.ge.f32.partialorder %v814, 0.0
        %vm847 = vcmp.ge.f32.partialorder %v815, 0.0
        %vm848 = vcmp.ge.f32.partialorder %v816, 0.0
        %vm849 = vcmp.ge.f32.partialorder %v817, 0.0
        %vm850 = vcmp.ge.f32.partialorder %v818, 0.0
        %v851 = vmul.f32 %v787, 0.2
        %v852 = vmul.f32 %v788, 0.2
        %v853 = vmul.f32 %v789, 0.2
        %v854 = vmul.f32 %v790, 0.2
        %v855 = vmul.f32 %v791, 0.2
        %v856 = vmul.f32 %v792, 0.2
        %v857 = vmul.f32 %v793, 0.2
        %v858 = vmul.f32 %v794, 0.2
        %v859 = vmul.f32 %v795, 0.2
        %v860 = vmul.f32 %v796, 0.2
        %v861 = vmul.f32 %v797, 0.2
        %v862 = vmul.f32 %v798, 0.2
        %v863 = vmul.f32 %v799, 0.2
        %v864 = vmul.f32 %v800, 0.2
        %v865 = vmul.f32 %v801, 0.2
        %v866 = vmul.f32 %v802, 0.2
        %v867 = vmul.f32 %v803, 0.2
        %v868 = vmul.f32 %v804, 0.2
        %v869 = vmul.f32 %v805, 0.2
        %v870 = vmul.f32 %v806, 0.2
        %v871 = vmul.f32 %v807, 0.2
        %v872 = vmul.f32 %v808, 0.2
        %v873 = vmul.f32 %v809, 0.2
        %v874 = vmul.f32 %v810, 0.2
        %v875 = vmul.f32 %v811, 0.2
        %v876 = vmul.f32 %v812, 0.2
        %v877 = vmul.f32 %v813, 0.2
        %v878 = vmul.f32 %v814, 0.2
        %v879 = vmul.f32 %v815, 0.2
        %v880 = vmul.f32 %v816, 0.2
        %v881 = vmul.f32 %v817, 0.2
        %v882 = vmul.f32 %v818, 0.2
        %v883 = vsel %vm819, %v787, %v851
        %v884 = vsel %vm820, %v788, %v852
        %v885 = vsel %vm821, %v789, %v853
        %v886 = vsel %vm822, %v790, %v854
        %v887 = vsel %vm823, %v791, %v855
        %v888 = vsel %vm824, %v792, %v856
        %v889 = vsel %vm825, %v793, %v857
        %v890 = vsel %vm826, %v794, %v858
        %v891 = vsel %vm827, %v795, %v859
        %v892 = vsel %vm828, %v796, %v860
        %v893 = vsel %vm829, %v797, %v861
        %v894 = vsel %vm830, %v798, %v862
        %v895 = vsel %vm831, %v799, %v863
        %v896 = vsel %vm832, %v800, %v864
        %v897 = vsel %vm833, %v801, %v865
        %v898 = vsel %vm834, %v802, %v866
        %v899 = vsel %vm835, %v803, %v867
        %v900 = vsel %vm836, %v804, %v868
        %v901 = vsel %vm837, %v805, %v869
        %v902 = vsel %vm838, %v806, %v870
        %v903 = vsel %vm839, %v807, %v871
        %v904 = vsel %vm840, %v808, %v872
        %v905 = vsel %vm841, %v809, %v873
        %v906 = vsel %vm842, %v810, %v874
        %v907 = vsel %vm843, %v811, %v875
        %v908 = vsel %vm844, %v812, %v876
        %v909 = vsel %vm845, %v813, %v877
        %v910 = vsel %vm846, %v814, %v878
        %v911 = vsel %vm847, %v815, %v879
        %v912 = vsel %vm848, %v816, %v880
        %v913 = vsel %vm849, %v817, %v881
        %v914 = vsel %vm850, %v818, %v882
        %915 = vst [vmem:[%s257] sm:$0xff] %v883
        %916 = vst [vmem:[%s257 + $0x8] sm:$0xff] %v884
        %917 = vst [vmem:[%s257 + $0x10] sm:$0xff] %v885
        %918 = vst [vmem:[%s257 + $0x18] sm:$0xff] %v886
        %919 = vst [vmem:[%s257 + $0x20] sm:$0xff] %v887
        %920 = vst [vmem:[%s257 + $0x28] sm:$0xff] %v888
        %921 = vst [vmem:[%s257 + $0x30] sm:$0xff] %v889
        %922 = vst [vmem:[%s257 + $0x38] sm:$0xff] %v890
        %923 = vst [vmem:[%s257 + $0x40] sm:$0xff] %v891
        %924 = vst [vmem:[%s257 + $0x48] sm:$0xff] %v892
        %925 = vst [vmem:[%s257 + $0x50] sm:$0xff] %v893
        %926 = vst [vmem:[%s257 + $0x58] sm:$0xff] %v894
        %927 = vst [vmem:[%s257 + $0x60] sm:$0xff] %v895
        %928 = vst [vmem:[%s257 + $0x68] sm:$0xff] %v896
        %929 = vst [vmem:[%s257 + $0x70] sm:$0xff] %v897
        %930 = vst [vmem:[%s257 + $0x78] sm:$0xff] %v898
        %931 = vst [vmem:[%s257 + $0x80] sm:$0xff] %v899
        %932 = vst [vmem:[%s257 + $0x88] sm:$0xff] %v900
        %933 = vst [vmem:[%s257 + $0x90] sm:$0xff] %v901
        %934 = vst [vmem:[%s257 + $0x98] sm:$0xff] %v902
        %935 = vst [vmem:[%s257 + $0xa0] sm:$0xff] %v903
        %936 = vst [vmem:[%s257 + $0xa8] sm:$0xff] %v904
        %937 = vst [vmem:[%s257 + $0xb0] sm:$0xff] %v905
        %938 = vst [vmem:[%s257 + $0xb8] sm:$0xff] %v906
        %939 = vst [vmem:[%s257 + $0xc0] sm:$0xff] %v907
        %940 = vst [vmem:[%s257 + $0xc8] sm:$0xff] %v908
        %941 = vst [vmem:[%s257 + $0xd0] sm:$0xff] %v909
        %942 = vst [vmem:[%s257 + $0xd8] sm:$0xff] %v910
        %943 = vst [vmem:[%s257 + $0xe0] sm:$0xff] %v911
        %944 = vst [vmem:[%s257 + $0xe8] sm:$0xff] %v912
        %945 = vst [vmem:[%s257 + $0xf0] sm:$0xff] %v913
        %946 = vst [vmem:[%s257 + $0xf8] sm:$0xff] %v914
      $region40: #{discriminator_forward.5} parent=31 // pred_fallthru
        _
      %s947 = smul.u32 32, %s19
      %p948 = scmp.lt.s32.totalorder %s947, 63
      %s949 = scalar_select %p948, %s947, 63
      %p950 = scmp.lt.s32.totalorder %s20, 0
      %s951 = scalar_select %p950, %s20, 0
      %s952 = sadd.s32 %s951, %s949
      %s953 = smul.addr %s952, 8
      %s954 = scalar_lea.vmem %s3, %s953
      // Predicated region
      $region41: #{discriminator_forward.5} parent=31 // pred_check
        %p955 = pneg %p135
      $region42: #{discriminator_forward.5} parent=31 // pred_check_branch
        %957 = sbr.rel (%p955) target = $region44
      $region43: #{discriminator_forward.5} parent=31 // pred_region
        %s958 = smul.u32 32, %s19
      $region44: #{discriminator_forward.5} parent=31 // pred_fallthru
        _
    $region32: #{discriminator_forward.5} parent=5 // pred_fallthru
      _
    %p959 = scmp.le.s32.totalorder 2, %s9
    // Predicated region
    $region45: #{discriminator_forward.5} parent=5 // pred_check
      %p960 = pneg %p959
    $region46: #{discriminator_forward.5} parent=5 // pred_check_branch
      %962 = sbr.rel (%p960) target = $region48
    $region47: #{discriminator_forward.5} parent=5 // pred_region
      %s963 = ssub.s32 %s9, 2
      // Predicated region
      $region49: #{discriminator_forward.5} parent=47 // pred_check
        %p964 = pneg %p141
      $region50: #{discriminator_forward.5} parent=47 // pred_check_branch
        %966 = sbr.rel (%p964) target = $region52
      $region51: #{discriminator_forward.5} parent=47 // pred_region
        %s967 = smul.u32 32, %s22
        %p968 = scmp.lt.s32.totalorder %s967, 63
        %s969 = scalar_select %p968, %s967, 63
        %p970 = scmp.lt.s32.totalorder %s23, 0
        %s971 = scalar_select %p970, %s23, 0
        %s972 = sadd.s32 %s971, %s969
        %s973 = smul.addr %s972, 8
        %s974 = scalar_lea.vmem %s3, %s973
      $region52: #{discriminator_forward.5} parent=47 // pred_fallthru
        _
    $region48: #{discriminator_forward.5} parent=5 // pred_fallthru
      _
  $region6: #{discriminator_forward.5} parent=0 // loop_footer
    %s13 = sadd.s32 1, %s9
  $region7: #{discriminator_forward.5} parent=0 // loop_footer_branch
    %8 = sbr.rel target = $region3
  $region8: #{discriminator_forward.5} parent=0 // loop_exit
    _

// kernel: discriminator_forward.6
$region0: #{discriminator_forward.6}
  #allocation0 [shape = 'u32[]', space=smem, size = 0x4, offset = 0x4, fixed_abs, tag = 'smem constant byte address 0x4 - core index']
  #allocation1 [shape = 'u32[144,128]{1,0:T(1,128)}', space=vmem, size = 0x12000, scoped, tag = 'internal scratch']
  #allocation2 [shape = 'f32[128,128]{1,0:T(8,128)}', space=vmem, size = 0x10000, scoped, tag = 'scratch operand']
  %s0 = inlined_call_operand.vmem [shape: bf16[128,1024], index: 0, kind: input, shape index: {}]
  %s1 = inlined_call_operand.vmem [shape: bf16[1024,128], index: 1, kind: input, shape index: {}]
  %s2 = inlined_call_operand.vmem [shape: f32[1,128], index: 2, kind: input, shape index: {}]
  %s3 = inlined_call_operand.vmem [shape: f32[1,128], index: 3, kind: input, shape index: {}]
  %s4 = inlined_call_operand.vmem [shape: f32[128,128], index: 4, kind: output, shape index: {}]
  %s5 = sld [smem:[#allocation0]]
  $region80: #{discriminator_forward.6} parent=0
    _
  %s7 = ssub.s32 1, %s5
  %s8 = scalar_select 0, %s7, %s5
  $region1: #{discriminator_forward.6} parent=0
    #allocation3 [shape = 'u8[262144]{0}', space=vmem, size = 0x40000, scoped, tag = 'input window, operand 0']
    loop: start=0, step=1, limit=4
    $region2: #{discriminator_forward.6} parent=1 // loop_pre_header
      _
    $region3: #{discriminator_forward.6} parent=1 // loop_header
      %s10 = sphi 0, %s14
      %p11 = scmp.ge.s32.totalorder %s10, 4
      %s17 = sphi 0, %s36
      %s18 = sphi 0, %s32
      %s19 = sphi 0, %s28
      %s20 = sphi 0, %s17
      %s21 = sphi 0, %s18
      %s22 = sphi 0, %s19
      %s23 = sphi 0, %s20
      %s24 = sphi 0, %s21
      %s25 = sphi 0, %s22
      %s41 = sphi 0, %s43
      %s44 = sphi 0, %s41
      %s45 = sphi 0, %s44
      %s61 = sphi 0, %s45
      %s69 = sphi 0, %s71
      %s72 = sphi 0, %s69
      %s73 = sphi 0, %s72
      %s89 = sphi 0, %s73
      %s95 = sphi 0, %s97
      %s98 = sphi 0, %s95
      %s99 = sphi 0, %s98
      %s115 = sphi 0, %s99
      %s121 = sphi 0, %s123
      %s124 = sphi 0, %s121
      %s125 = sphi 0, %s124
      %s141 = sphi 0, %s125
      %s149 = sphi 0, %s151
      %s152 = sphi 0, %s149
      %s153 = sphi 0, %s152
      %s169 = sphi 0, %s153
    $region4: #{discriminator_forward.6} parent=1 // loop_header_branch
      %13 = sbr.rel (%p11) target = $region8
    $region5: #{discriminator_forward.6} parent=1 // loop_body
      %s15 = ssub.s32 %s10, 1
      %s16 = ssub.s32 %s10, 2
      %s26 = sadd.s32 1, %s19
      %p27 = scmp.ge.s32.totalorder %s26, 2
      %s28 = scalar_select %p27, 0, %s26
      %s29 = sadd.s32 1, %s18
      %s30 = scalar_select %p27, %s29, %s18
      %p31 = scmp.ge.s32.totalorder %s30, 1
      %s32 = scalar_select %p31, 0, %s30
      %s33 = sadd.s32 1, %s17
      %s34 = scalar_select %p31, %s33, %s17
      %p35 = scmp.ge.s32.totalorder %s34, 1
      %s36 = scalar_select %p35, 0, %s34
      %s37 = ssub.s32 %s17, %s36
      %s38 = ssub.s32 %s19, %s28
      %s39 = sor.u32 %s37, %s38
      %p40 = scmp.eq.s32.totalorder %s39, 0
      %s42 = sadd.s32 %s41, 1
      %s43 = scalar_select %p40, %s41, %s42
      %p46 = pneg %p40
      %p47 = scmp.eq.s32.totalorder %s10, 1
      %p48 = por %p46, %p47
      %p49 = scmp.ne.s32.totalorder %s41, %s44
      %p50 = scmp.eq.s32.totalorder %s10, 0
      %p51 = por %p49, %p50
      %p52 = scmp.ne.s32.totalorder %s41, %s44
      %p53 = scmp.eq.s32.totalorder %s15, 1
      %p54 = por %p52, %p53
      %p55 = scmp.ne.s32.totalorder %s44, %s45
      %p56 = scmp.eq.s32.totalorder %s15, 0
      %p57 = por %p55, %p56
      %p58 = scmp.ne.s32.totalorder %s44, %s45
      %p59 = scmp.eq.s32.totalorder %s16, 1
      %p60 = por %p58, %p59
      %p62 = scmp.ne.s32.totalorder %s45, %s61
      %p63 = scmp.eq.s32.totalorder %s16, 0
      %p64 = por %p62, %p63
      %s65 = ssub.s32 %s19, %s28
      %s66 = ssub.s32 %s18, %s32
      %s67 = sor.u32 %s65, %s66
      %p68 = scmp.eq.s32.totalorder %s67, 0
      %s70 = sadd.s32 %s69, 1
      %s71 = scalar_select %p68, %s69, %s70
      %p74 = pneg %p68
      %p75 = scmp.eq.s32.totalorder %s10, 1
      %p76 = por %p74, %p75
      %p77 = scmp.ne.s32.totalorder %s69, %s72
      %p78 = scmp.eq.s32.totalorder %s10, 0
      %p79 = por %p77, %p78
      %p80 = scmp.ne.s32.totalorder %s69, %s72
      %p81 = scmp.eq.s32.totalorder %s15, 1
      %p82 = por %p80, %p81
      %p83 = scmp.ne.s32.totalorder %s72, %s73
      %p84 = scmp.eq.s32.totalorder %s15, 0
      %p85 = por %p83, %p84
      %p86 = scmp.ne.s32.totalorder %s72, %s73
      %p87 = scmp.eq.s32.totalorder %s16, 1
      %p88 = por %p86, %p87
      %p90 = scmp.ne.s32.totalorder %s73, %s89
      %p91 = scmp.eq.s32.totalorder %s16, 0
      %p92 = por %p90, %p91
      %s93 = ssub.s32 %s18, %s32
      %p94 = scmp.eq.s32.totalorder %s93, 0
      %s96 = sadd.s32 %s95, 1
      %s97 = scalar_select %p94, %s95, %s96
      %p100 = pneg %p94
      %p101 = scmp.eq.s32.totalorder %s10, 1
      %p102 = por %p100, %p101
      %p103 = scmp.ne.s32.totalorder %s95, %s98
      %p104 = scmp.eq.s32.totalorder %s10, 0
      %p105 = por %p103, %p104
      %p106 = scmp.ne.s32.totalorder %s95, %s98
      %p107 = scmp.eq.s32.totalorder %s15, 1
      %p108 = por %p106, %p107
      %p109 = scmp.ne.s32.totalorder %s98, %s99
      %p110 = scmp.eq.s32.totalorder %s15, 0
      %p111 = por %p109, %p110
      %p112 = scmp.ne.s32.totalorder %s98, %s99
      %p113 = scmp.eq.s32.totalorder %s16, 1
      %p114 = por %p112, %p113
      %p116 = scmp.ne.s32.totalorder %s99, %s115
      %p117 = scmp.eq.s32.totalorder %s16, 0
      %p118 = por %p116, %p117
      %s119 = ssub.s32 %s18, %s32
      %p120 = scmp.eq.s32.totalorder %s119, 0
      %s122 = sadd.s32 %s121, 1
      %s123 = scalar_select %p120, %s121, %s122
      %p126 = pneg %p120
      %p127 = scmp.eq.s32.totalorder %s10, 1
      %p128 = por %p126, %p127
      %p129 = scmp.ne.s32.totalorder %s121, %s124
      %p130 = scmp.eq.s32.totalorder %s10, 0
      %p131 = por %p129, %p130
      %p132 = scmp.ne.s32.totalorder %s121, %s124
      %p133 = scmp.eq.s32.totalorder %s15, 1
      %p134 = por %p132, %p133
      %p135 = scmp.ne.s32.totalorder %s124, %s125
      %p136 = scmp.eq.s32.totalorder %s15, 0
      %p137 = por %p135, %p136
      %p138 = scmp.ne.s32.totalorder %s124, %s125
      %p139 = scmp.eq.s32.totalorder %s16, 1
      %p140 = por %p138, %p139
      %p142 = scmp.ne.s32.totalorder %s125, %s141
      %p143 = scmp.eq.s32.totalorder %s16, 0
      %p144 = por %p142, %p143
      %s145 = ssub.s32 %s17, %s36
      %s146 = ssub.s32 %s18, %s32
      %s147 = sor.u32 %s145, %s146
      %p148 = scmp.eq.s32.totalorder %s147, 0
      %s150 = sadd.s32 %s149, 1
      %s151 = scalar_select %p148, %s149, %s150
      %p154 = pneg %p148
      %p155 = scmp.eq.s32.totalorder %s10, 1
      %p156 = por %p154, %p155
      %p157 = scmp.ne.s32.totalorder %s149, %s152
      %p158 = scmp.eq.s32.totalorder %s10, 0
      %p159 = por %p157, %p158
      %p160 = scmp.ne.s32.totalorder %s149, %s152
      %p161 = scmp.eq.s32.totalorder %s15, 1
      %p162 = por %p160, %p161
      %p163 = scmp.ne.s32.totalorder %s152, %s153
      %p164 = scmp.eq.s32.totalorder %s15, 0
      %p165 = por %p163, %p164
      %p166 = scmp.ne.s32.totalorder %s152, %s153
      %p167 = scmp.eq.s32.totalorder %s16, 1
      %p168 = por %p166, %p167
      %p170 = scmp.ne.s32.totalorder %s153, %s169
      %p171 = scmp.eq.s32.totalorder %s16, 0
      %p172 = por %p170, %p171
      %p173 = scmp.le.s32.totalorder 1, %s10
      %p174 = scmp.lt.s32.totalorder %s10, 3
      %p175 = pnand %p173, %p174
      %p176 = pneg %p175
      // Predicated region
      $region9: #{discriminator_forward.6} parent=5 // pred_check
        _
      $region10: #{discriminator_forward.6} parent=5 // pred_check_branch
        %178 = sbr.rel (%p175) target = $region12
      $region11: #{discriminator_forward.6} parent=5 // pred_region
        %s179 = ssub.s32 %s10, 1
        // Predicated region
        $region13: #{discriminator_forward.6} parent=11 // pred_check
          %p180 = pneg %p111
        $region14: #{discriminator_forward.6} parent=11 // pred_check_branch
          %182 = sbr.rel (%p180) target = $region16
        $region15: #{discriminator_forward.6} parent=11 // pred_region
          %p183 = scmp.lt.s32.totalorder %s21, 0
          %s184 = scalar_select %p183, %s21, 0
          %s185 = scalar_lea.vmem %s2, %s184
        $region16: #{discriminator_forward.6} parent=11 // pred_fallthru
          _
        // Predicated region
        $region17: #{discriminator_forward.6} parent=11 // pred_check
          %p186 = pneg %p137
        $region18: #{discriminator_forward.6} parent=11 // pred_check_branch
          %188 = sbr.rel (%p186) target = $region20
        $region19: #{discriminator_forward.6} parent=11 // pred_region
          %p189 = scmp.lt.s32.totalorder %s21, 0
          %s190 = scalar_select %p189, %s21, 0
          %s191 = scalar_lea.vmem %s3, %s190
        $region20: #{discriminator_forward.6} parent=11 // pred_fallthru
          _
      $region12: #{discriminator_forward.6} parent=5 // pred_fallthru
        _
      %p192 = scmp.lt.s32.totalorder %s10, 2
      // Predicated region
      $region21: #{discriminator_forward.6} parent=5 // pred_check
        %p193 = pneg %p192
      $region22: #{discriminator_forward.6} parent=5 // pred_check_branch
        %195 = sbr.rel (%p193) target = $region24
      $region23: #{discriminator_forward.6} parent=5 // pred_region
        // Predicated region
        $region25: #{discriminator_forward.6} parent=23 // pred_check
          %p196 = pneg %p51
        $region26: #{discriminator_forward.6} parent=23 // pred_check_branch
          %198 = sbr.rel (%p196) target = $region28
        $region27: #{discriminator_forward.6} parent=23 // pred_region
          %s199 = sand.u32 %s41, 1
          %s200 = sand.u32 %s41, 1
          %s201 = smul.addr %s200, 256
          %s202 = scalar_lea.vmem [#allocation3], %s201
          %s203 = smul.u32 16, %s17
          %s204 = smul.u32 4, %s19
          %s205 = smul.addr %s203, 8
          %s206 = sadd.s32 %s204, %s205
          %s207 = smul.addr %s206, 4
          %s208 = scalar_lea.vmem %s0, %s207
          // Predicated region
          $region29: #{discriminator_forward.6} parent=27 // pred_check
            _
          $region30: #{discriminator_forward.6} parent=27 // pred_check_branch
            %210 = sbr.rel (0) target = $region32
          $region31: #{discriminator_forward.6} parent=27 // pred_region
            // Predicated region
            $region33: #{discriminator_forward.6} parent=31 // pred_check
              _
            $region34: #{discriminator_forward.6} parent=31 // pred_check_branch
              %212 = sbr.rel (0) target = $region36
            $region35: #{discriminator_forward.6} parent=31 // pred_region
              loop: start=0, step=1, limit=1
              $region37: #{discriminator_forward.6} parent=35 // loop_pre_header
                _
              $region38: #{discriminator_forward.6} parent=35 // loop_header
                %s214 = sphi 0, %s218
                %p215 = scmp.ge.s32.totalorder %s214, 1
                %s219 = sphi %s208, %s208
                %s220 = sphi %s202, %s202
              $region39: #{discriminator_forward.6} parent=35 // loop_header_branch
                %217 = sbr.rel (%p215) target = $region43
              $region40: #{discriminator_forward.6} parent=35 // loop_body
                %v221 = vld [vmem:[%s219] sm:$0xff]
                %222 = vst [vmem:[%s220] sm:$0xff] %v221
                %v223 = vld [vmem:[%s219 + $0x8] sm:$0xff]
                %224 = vst [vmem:[%s220 + $0x8] sm:$0xff] %v223
                %v225 = vld [vmem:[%s219 + $0x20] sm:$0xff]
                %226 = vst [vmem:[%s220 + $0x10] sm:$0xff] %v225
                %v227 = vld [vmem:[%s219 + $0x28] sm:$0xff]
                %228 = vst [vmem:[%s220 + $0x18] sm:$0xff] %v227
                %v229 = vld [vmem:[%s219 + $0x40] sm:$0xff]
                %230 = vst [vmem:[%s220 + $0x20] sm:$0xff] %v229
                %v231 = vld [vmem:[%s219 + $0x48] sm:$0xff]
                %232 = vst [vmem:[%s220 + $0x28] sm:$0xff] %v231
                %v233 = vld [vmem:[%s219 + $0x60] sm:$0xff]
                %234 = vst [vmem:[%s220 + $0x30] sm:$0xff] %v233
                %v235 = vld [vmem:[%s219 + $0x68] sm:$0xff]
                %236 = vst [vmem:[%s220 + $0x38] sm:$0xff] %v235
                %v237 = vld [vmem:[%s219 + $0x80] sm:$0xff]
                %238 = vst [vmem:[%s220 + $0x40] sm:$0xff] %v237
                %v239 = vld [vmem:[%s219 + $0x88] sm:$0xff]
                %240 = vst [vmem:[%s220 + $0x48] sm:$0xff] %v239
                %v241 = vld [vmem:[%s219 + $0xa0] sm:$0xff]
                %242 = vst [vmem:[%s220 + $0x50] sm:$0xff] %v241
                %v243 = vld [vmem:[%s219 + $0xa8] sm:$0xff]
                %244 = vst [vmem:[%s220 + $0x58] sm:$0xff] %v243
                %v245 = vld [vmem:[%s219 + $0xc0] sm:$0xff]
                %246 = vst [vmem:[%s220 + $0x60] sm:$0xff] %v245
                %v247 = vld [vmem:[%s219 + $0xc8] sm:$0xff]
                %248 = vst [vmem:[%s220 + $0x68] sm:$0xff] %v247
                %v249 = vld [vmem:[%s219 + $0xe0] sm:$0xff]
                %250 = vst [vmem:[%s220 + $0x70] sm:$0xff] %v249
                %v251 = vld [vmem:[%s219 + $0xe8] sm:$0xff]
                %252 = vst [vmem:[%s220 + $0x78] sm:$0xff] %v251
                %v253 = vld [vmem:[%s219 + $0x100] sm:$0xff]
                %254 = vst [vmem:[%s220 + $0x80] sm:$0xff] %v253
                %v255 = vld [vmem:[%s219 + $0x108] sm:$0xff]
                %256 = vst [vmem:[%s220 + $0x88] sm:$0xff] %v255
                %v257 = vld [vmem:[%s219 + $0x120] sm:$0xff]
                %258 = vst [vmem:[%s220 + $0x90] sm:$0xff] %v257
                %v259 = vld [vmem:[%s219 + $0x128] sm:$0xff]
                %260 = vst [vmem:[%s220 + $0x98] sm:$0xff] %v259
                %v261 = vld [vmem:[%s219 + $0x140] sm:$0xff]
                %262 = vst [vmem:[%s220 + $0xa0] sm:$0xff] %v261
                %v263 = vld [vmem:[%s219 + $0x148] sm:$0xff]
                %264 = vst [vmem:[%s220 + $0xa8] sm:$0xff] %v263
                %v265 = vld [vmem:[%s219 + $0x160] sm:$0xff]
                %266 = vst [vmem:[%s220 + $0xb0] sm:$0xff] %v265
                %v267 = vld [vmem:[%s219 + $0x168] sm:$0xff]
                %268 = vst [vmem:[%s220 + $0xb8] sm:$0xff] %v267
                %v269 = vld [vmem:[%s219 + $0x180] sm:$0xff]
                %270 = vst [vmem:[%s220 + $0xc0] sm:$0xff] %v269
                %v271 = vld [vmem:[%s219 + $0x188] sm:$0xff]
                %272 = vst [vmem:[%s220 + $0xc8] sm:$0xff] %v271
                %v273 = vld [vmem:[%s219 + $0x1a0] sm:$0xff]
                %274 = vst [vmem:[%s220 + $0xd0] sm:$0xff] %v273
                %v275 = vld [vmem:[%s219 + $0x1a8] sm:$0xff]
                %276 = vst [vmem:[%s220 + $0xd8] sm:$0xff] %v275
                %v277 = vld [vmem:[%s219 + $0x1c0] sm:$0xff]
                %278 = vst [vmem:[%s220 + $0xe0] sm:$0xff] %v277
                %v279 = vld [vmem:[%s219 + $0x1c8] sm:$0xff]
                %280 = vst [vmem:[%s220 + $0xe8] sm:$0xff] %v279
                %v281 = vld [vmem:[%s219 + $0x1e0] sm:$0xff]
                %282 = vst [vmem:[%s220 + $0xf0] sm:$0xff] %v281
                %v283 = vld [vmem:[%s219 + $0x1e8] sm:$0xff]
                %284 = vst [vmem:[%s220 + $0xf8] sm:$0xff] %v283
              $region41: #{discriminator_forward.6} parent=35 // loop_footer
                %s218 = sadd.s32 1, %s214
              $region42: #{discriminator_forward.6} parent=35 // loop_footer_branch
                %213 = sbr.rel target = $region38
              $region43: #{discriminator_forward.6} parent=35 // loop_exit
                _
            $region36: #{discriminator_forward.6} parent=31 // pred_fallthru
              _
            // Predicated region
            $region44: #{discriminator_forward.6} parent=31 // pred_check
              _
            $region45: #{discriminator_forward.6} parent=31 // pred_check_branch
              %286 = sbr.rel target = $region47
            $region46: #{discriminator_forward.6} parent=31 // pred_region
              _
            $region47: #{discriminator_forward.6} parent=31 // pred_fallthru
              _
          $region32: #{discriminator_forward.6} parent=27 // pred_fallthru
            _
          %287 = vnop
        $region28: #{discriminator_forward.6} parent=23 // pred_fallthru
          _
        // Predicated region
        $region48: #{discriminator_forward.6} parent=23 // pred_check
          %p288 = pneg %p79
        $region49: #{discriminator_forward.6} parent=23 // pred_check_branch
          %290 = sbr.rel (%p288) target = $region51
        $region50: #{discriminator_forward.6} parent=23 // pred_region
          %s291 = smul.u32 64, %s19
          %p292 = scmp.lt.s32.totalorder %s291, 127
          %s293 = scalar_select %p292, %s291, 127
          %p294 = scmp.lt.s32.totalorder %s18, 0
          %s295 = scalar_select %p294, %s18, 0
          %s296 = sadd.s32 %s295, %s293
          %s297 = smul.addr %s296, 4
          %s298 = scalar_lea.vmem %s1, %s297
          %s299 = smul.u32 64, %s19
        $region51: #{discriminator_forward.6} parent=23 // pred_fallthru
          _
      $region24: #{discriminator_forward.6} parent=5 // pred_fallthru
        _
      %p300 = scmp.le.s32.totalorder 1, %s10
      %p301 = scmp.lt.s32.totalorder %s10, 3
      %p302 = pnand %p300, %p301
      %p303 = pneg %p302
      // Predicated region
      $region52: #{discriminator_forward.6} parent=5 // pred_check
        _
      $region53: #{discriminator_forward.6} parent=5 // pred_check_branch
        %305 = sbr.rel (%p302) target = $region55
      $region54: #{discriminator_forward.6} parent=5 // pred_region
        %s306 = ssub.s32 %s10, 1
        %s307 = sand.u32 %s44, 1
        %s308 = sand.u32 %s44, 1
        %s309 = smul.addr %s308, 256
        %s310 = scalar_lea.vmem [#allocation3], %s309
        // Predicated region
        $region56: #{discriminator_forward.6} parent=54 // pred_check
          %p311 = pneg %p57
        $region57: #{discriminator_forward.6} parent=54 // pred_check_branch
          %313 = sbr.rel (%p311) target = $region59
        $region58: #{discriminator_forward.6} parent=54 // pred_region
          _
        $region59: #{discriminator_forward.6} parent=54 // pred_fallthru
          _
        %s314 = sand.u32 %s44, 1
        %s315 = sand.u32 %s44, 1
        %s316 = smul.addr %s315, 256
        %s317 = scalar_lea.vmem [#allocation3], %s316
        %p318 = pneg %p57
        %p319 = pneg %p54
        %s320 = smul.u32 64, %s22
        %p321 = scmp.lt.s32.totalorder %s320, 127
        %s322 = scalar_select %p321, %s320, 127
        %p323 = scmp.lt.s32.totalorder %s21, 0
        %s324 = scalar_select %p323, %s21, 0
        %s325 = sadd.s32 %s324, %s322
        %s326 = smul.addr %s325, 4
        %s327 = scalar_lea.vmem %s1, %s326
        %p328 = pneg %p85
        %p329 = pneg %p82
        %p330 = scmp.lt.s32.totalorder %s21, 0
        %s331 = scalar_select %p330, %s21, 0
        %s332 = scalar_lea.vmem %s2, %s331
        %p333 = pneg %p111
        %p334 = pneg %p108
        %p335 = scmp.lt.s32.totalorder %s21, 0
        %s336 = scalar_select %p335, %s21, 0
        %s337 = scalar_lea.vmem %s3, %s336
        %p338 = pneg %p137
        %p339 = pneg %p134
        %p340 = pneg %p165
        %p341 = pneg %p162
        %s342 = smul.u32 16, %s20
        %p343 = scmp.lt.s32.totalorder %s342, 15
        %s344 = scalar_select %p343, %s342, 15
        %p345 = scmp.lt.s32.totalorder %s21, 0
        %s346 = scalar_select %p345, %s21, 0
        %s347 = sadd.s32 %s346, %s344
        %s348 = smul.addr %s347, 8
        %s349 = scalar_lea.vmem %s4, %s348
        %s350 = smul.u32 16, %s20
        %s351 = smul.u32 4, %s22
        %s352 = smul.u32 64, %s22
        %p353 = scmp.lt.s32.totalorder %s352, 127
        %s354 = scalar_select %p353, %s352, 127
        %p355 = scmp.lt.s32.totalorder %s21, 0
        %s356 = scalar_select %p355, %s21, 0
        %s357 = sadd.s32 %s356, %s354
        %s358 = smul.addr %s357, 4
        %s359 = scalar_lea.vmem %s1, %s358
        %s360 = smul.u32 64, %s22
        %p361 = scmp.lt.s32.totalorder %s21, 0
        %s362 = scalar_select %p361, %s21, 0
        %s363 = scalar_lea.vmem %s2, %s362
        %p364 = scmp.lt.s32.totalorder %s21, 0
        %s365 = scalar_select %p364, %s21, 0
        %s366 = scalar_lea.vmem %s3, %s365
        %s367 = smul.u32 16, %s20
        %p368 = scmp.lt.s32.totalorder %s367, 15
        %s369 = scalar_select %p368, %s367, 15
        %p370 = scmp.lt.s32.totalorder %s21, 0
        %s371 = scalar_select %p370, %s21, 0
        %s372 = sadd.s32 %s371, %s369
        %s373 = smul.addr %s372, 8
        %s374 = scalar_lea.vmem %s4, %s373
        %s375 = smul.u32 16, %s20
        %p377 = scmp.eq.s32.totalorder %s22, 0
        // Predicated region
        $region60: #{discriminator_forward.6} parent=54 // pred_check
          %p378 = pneg %p377
        $region61: #{discriminator_forward.6} parent=54 // pred_check_branch
          %380 = sbr.rel (%p378) target = $region63
        $region62: #{discriminator_forward.6} parent=54 // pred_region
          %381 = vst [vmem:[#allocation2] sm:$0xff] 0.0
          %382 = vst [vmem:[#allocation2 + $0x8] sm:$0xff] 0.0
          %383 = vst [vmem:[#allocation2 + $0x10] sm:$0xff] 0.0
          %384 = vst [vmem:[#allocation2 + $0x18] sm:$0xff] 0.0
          %385 = vst [vmem:[#allocation2 + $0x20] sm:$0xff] 0.0
          %386 = vst [vmem:[#allocation2 + $0x28] sm:$0xff] 0.0
          %387 = vst [vmem:[#allocation2 + $0x30] sm:$0xff] 0.0
          %388 = vst [vmem:[#allocation2 + $0x38] sm:$0xff] 0.0
          %389 = vst [vmem:[#allocation2 + $0x40] sm:$0xff] 0.0
          %390 = vst [vmem:[#allocation2 + $0x48] sm:$0xff] 0.0
          %391 = vst [vmem:[#allocation2 + $0x50] sm:$0xff] 0.0
          %392 = vst [vmem:[#allocation2 + $0x58] sm:$0xff] 0.0
          %393 = vst [vmem:[#allocation2 + $0x60] sm:$0xff] 0.0
          %394 = vst [vmem:[#allocation2 + $0x68] sm:$0xff] 0.0
          %395 = vst [vmem:[#allocation2 + $0x70] sm:$0xff] 0.0
          %396 = vst [vmem:[#allocation2 + $0x78] sm:$0xff] 0.0
        $region63: #{discriminator_forward.6} parent=54 // pred_fallthru
          _
        %v397 = vld [vmem:[#allocation2] sm:$0xff]
        %v398 = vld [vmem:[#allocation2 + $0x8] sm:$0xff]
        %v399 = vld [vmem:[#allocation2 + $0x10] sm:$0xff]
        %v400 = vld [vmem:[#allocation2 + $0x18] sm:$0xff]
        %v401 = vld [vmem:[#allocation2 + $0x20] sm:$0xff]
        %v402 = vld [vmem:[#allocation2 + $0x28] sm:$0xff]
        %v403 = vld [vmem:[#allocation2 + $0x30] sm:$0xff]
        %v404 = vld [vmem:[#allocation2 + $0x38] sm:$0xff]
        %v405 = vld [vmem:[#allocation2 + $0x40] sm:$0xff]
        %v406 = vld [vmem:[#allocation2 + $0x48] sm:$0xff]
        %v407 = vld [vmem:[#allocation2 + $0x50] sm:$0xff]
        %v408 = vld [vmem:[#allocation2 + $0x58] sm:$0xff]
        %v409 = vld [vmem:[#allocation2 + $0x60] sm:$0xff]
        %v410 = vld [vmem:[#allocation2 + $0x68] sm:$0xff]
        %v411 = vld [vmem:[#allocation2 + $0x70] sm:$0xff]
        %v412 = vld [vmem:[#allocation2 + $0x78] sm:$0xff]
        %v413 = vld [vmem:[%s310] sm:$0xff]
        %v414 = vld [vmem:[%s310 + $0x8] sm:$0xff]
        %v415 = vld [vmem:[%s310 + $0x10] sm:$0xff]
        %v416 = vld [vmem:[%s310 + $0x18] sm:$0xff]
        %v417 = vld [vmem:[%s310 + $0x20] sm:$0xff]
        %v418 = vld [vmem:[%s310 + $0x28] sm:$0xff]
        %v419 = vld [vmem:[%s310 + $0x30] sm:$0xff]
        %v420 = vld [vmem:[%s310 + $0x38] sm:$0xff]
        %v421 = vld [vmem:[%s310 + $0x40] sm:$0xff]
        %v422 = vld [vmem:[%s310 + $0x48] sm:$0xff]
        %v423 = vld [vmem:[%s310 + $0x50] sm:$0xff]
        %v424 = vld [vmem:[%s310 + $0x58] sm:$0xff]
        %v425 = vld [vmem:[%s310 + $0x60] sm:$0xff]
        %v426 = vld [vmem:[%s310 + $0x68] sm:$0xff]
        %v427 = vld [vmem:[%s310 + $0x70] sm:$0xff]
        %v428 = vld [vmem:[%s310 + $0x78] sm:$0xff]
        %v429 = vld [vmem:[%s310 + $0x80] sm:$0xff]
        %v430 = vld [vmem:[%s310 + $0x88] sm:$0xff]
        %v431 = vld [vmem:[%s310 + $0x90] sm:$0xff]
        %v432 = vld [vmem:[%s310 + $0x98] sm:$0xff]
        %v433 = vld [vmem:[%s310 + $0xa0] sm:$0xff]
        %v434 = vld [vmem:[%s310 + $0xa8] sm:$0xff]
        %v435 = vld [vmem:[%s310 + $0xb0] sm:$0xff]
        %v436 = vld [vmem:[%s310 + $0xb8] sm:$0xff]
        %v437 = vld [vmem:[%s310 + $0xc0] sm:$0xff]
        %v438 = vld [vmem:[%s310 + $0xc8] sm:$0xff]
        %v439 = vld [vmem:[%s310 + $0xd0] sm:$0xff]
        %v440 = vld [vmem:[%s310 + $0xd8] sm:$0xff]
        %v441 = vld [vmem:[%s310 + $0xe0] sm:$0xff]
        %v442 = vld [vmem:[%s310 + $0xe8] sm:$0xff]
        %v443 = vld [vmem:[%s310 + $0xf0] sm:$0xff]
        %v444 = vld [vmem:[%s310 + $0xf8] sm:$0xff]
        %v445 = vld [vmem:[%s359] sm:$0xf]
        %v446 = vld [vmem:[%s359 + $0x4] sm:$0xf]
        %v447 = vld [vmem:[%s359 + $0x8] sm:$0xf]
        %v448 = vld [vmem:[%s359 + $0xc] sm:$0xf]
        %v449 = vld [vmem:[%s359 + $0x10] sm:$0xf]
        %v450 = vld [vmem:[%s359 + $0x14] sm:$0xf]
        %v451 = vld [vmem:[%s359 + $0x18] sm:$0xf]
        %v452 = vld [vmem:[%s359 + $0x1c] sm:$0xf]
        %v453 = vld [vmem:[%s359 + $0x20] sm:$0xf]
        %v454 = vld [vmem:[%s359 + $0x24] sm:$0xf]
        %v455 = vld [vmem:[%s359 + $0x28] sm:$0xf]
        %v456 = vld [vmem:[%s359 + $0x2c] sm:$0xf]
        %v457 = vld [vmem:[%s359 + $0x30] sm:$0xf]
        %v458 = vld [vmem:[%s359 + $0x34] sm:$0xf]
        %v459 = vld [vmem:[%s359 + $0x38] sm:$0xf]
        %v460 = vld [vmem:[%s359 + $0x3c] sm:$0xf]
        %v461 = vld [vmem:[%s359 + $0x40] sm:$0xf]
        %v462 = vld [vmem:[%s359 + $0x44] sm:$0xf]
        %v463 = vld [vmem:[%s359 + $0x48] sm:$0xf]
        %v464 = vld [vmem:[%s359 + $0x4c] sm:$0xf]
        %v465 = vld [vmem:[%s359 + $0x50] sm:$0xf]
        %v466 = vld [vmem:[%s359 + $0x54] sm:$0xf]
        %v467 = vld [vmem:[%s359 + $0x58] sm:$0xf]
        %v468 = vld [vmem:[%s359 + $0x5c] sm:$0xf]
        %v469 = vld [vmem:[%s359 + $0x60] sm:$0xf]
        %v470 = vld [vmem:[%s359 + $0x64] sm:$0xf]
        %v471 = vld [vmem:[%s359 + $0x68] sm:$0xf]
        %v472 = vld [vmem:[%s359 + $0x6c] sm:$0xf]
        %v473 = vld [vmem:[%s359 + $0x70] sm:$0xf]
        %v474 = vld [vmem:[%s359 + $0x74] sm:$0xf]
        %v475 = vld [vmem:[%s359 + $0x78] sm:$0xf]
        %v476 = vld [vmem:[%s359 + $0x7c] sm:$0xf]
        %v477 = vld [vmem:[%s359 + $0x80] sm:$0xf]
        %v478 = vld [vmem:[%s359 + $0x84] sm:$0xf]
        %v479 = vld [vmem:[%s359 + $0x88] sm:$0xf]
        %v480 = vld [vmem:[%s359 + $0x8c] sm:$0xf]
        %v481 = vld [vmem:[%s359 + $0x90] sm:$0xf]
        %v482 = vld [vmem:[%s359 + $0x94] sm:$0xf]
        %v483 = vld [vmem:[%s359 + $0x98] sm:$0xf]
        %v484 = vld [vmem:[%s359 + $0x9c] sm:$0xf]
        %v485 = vld [vmem:[%s359 + $0xa0] sm:$0xf]
        %v486 = vld [vmem:[%s359 + $0xa4] sm:$0xf]
        %v487 = vld [vmem:[%s359 + $0xa8] sm:$0xf]
        %v488 = vld [vmem:[%s359 + $0xac] sm:$0xf]
        %v489 = vld [vmem:[%s359 + $0xb0] sm:$0xf]
        %v490 = vld [vmem:[%s359 + $0xb4] sm:$0xf]
        %v491 = vld [vmem:[%s359 + $0xb8] sm:$0xf]
        %v492 = vld [vmem:[%s359 + $0xbc] sm:$0xf]
        %v493 = vld [vmem:[%s359 + $0xc0] sm:$0xf]
        %v494 = vld [vmem:[%s359 + $0xc4] sm:$0xf]
        %v495 = vld [vmem:[%s359 + $0xc8] sm:$0xf]
        %v496 = vld [vmem:[%s359 + $0xcc] sm:$0xf]
        %v497 = vld [vmem:[%s359 + $0xd0] sm:$0xf]
        %v498 = vld [vmem:[%s359 + $0xd4] sm:$0xf]
        %v499 = vld [vmem:[%s359 + $0xd8] sm:$0xf]
        %v500 = vld [vmem:[%s359 + $0xdc] sm:$0xf]
        %v501 = vld [vmem:[%s359 + $0xe0] sm:$0xf]
        %v502 = vld [vmem:[%s359 + $0xe4] sm:$0xf]
        %v503 = vld [vmem:[%s359 + $0xe8] sm:$0xf]
        %v504 = vld [vmem:[%s359 + $0xec] sm:$0xf]
        %v505 = vld [vmem:[%s359 + $0xf0] sm:$0xf]
        %v506 = vld [vmem:[%s359 + $0xf4] sm:$0xf]
        %v507 = vld [vmem:[%s359 + $0xf8] sm:$0xf]
        %v508 = vld [vmem:[%s359 + $0xfc] sm:$0xf]
        %v541 = vunpack.c.l.b16 %v413
        %v542 = vunpack.c.h.b16 %v413
        %v543 = vunpack.c.l.b16 %v414
        %v544 = vunpack.c.h.b16 %v414
        %v545 = vunpack.c.l.b16 %v415
        %v546 = vunpack.c.h.b16 %v415
        %v547 = vunpack.c.l.b16 %v416
        %v548 = vunpack.c.h.b16 %v416
        %v549 = vunpack.c.l.b16 %v417
        %v550 = vunpack.c.h.b16 %v417
        %v551 = vunpack.c.l.b16 %v418
        %v552 = vunpack.c.h.b16 %v418
        %v553 = vunpack.c.l.b16 %v419
        %v554 = vunpack.c.h.b16 %v419
        %v555 = vunpack.c.l.b16 %v420
        %v556 = vunpack.c.h.b16 %v420
        %v557 = vunpack.c.l.b16 %v421
        %v558 = vunpack.c.h.b16 %v421
        %v559 = vunpack.c.l.b16 %v422
        %v560 = vunpack.c.h.b16 %v422
        %v561 = vunpack.c.l.b16 %v423
        %v562 = vunpack.c.h.b16 %v423
        %v563 = vunpack.c.l.b16 %v424
        %v564 = vunpack.c.h.b16 %v424
        %v565 = vunpack.c.l.b16 %v425
        %v566 = vunpack.c.h.b16 %v425
        %v567 = vunpack.c.l.b16 %v426
        %v568 = vunpack.c.h.b16 %v426
        %v569 = vunpack.c.l.b16 %v427
        %v570 = vunpack.c.h.b16 %v427
        %v571 = vunpack.c.l.b16 %v428
        %v572 = vunpack.c.h.b16 %v428
        %v573 = vunpack.c.l.b16 %v429
        %v574 = vunpack.c.h.b16 %v429
        %v575 = vunpack.c.l.b16 %v430
        %v576 = vunpack.c.h.b16 %v430
        %v577 = vunpack.c.l.b16 %v431
        %v578 = vunpack.c.h.b16 %v431
        %v579 = vunpack.c.l.b16 %v432
        %v580 = vunpack.c.h.b16 %v432
        %v581 = vunpack.c.l.b16 %v433
        %v582 = vunpack.c.h.b16 %v433
        %v583 = vunpack.c.l.b16 %v434
        %v584 = vunpack.c.h.b16 %v434
        %v585 = vunpack.c.l.b16 %v435
        %v586 = vunpack.c.h.b16 %v435
        %v587 = vunpack.c.l.b16 %v436
        %v588 = vunpack.c.h.b16 %v436
        %v589 = vunpack.c.l.b16 %v437
        %v590 = vunpack.c.h.b16 %v437
        %v591 = vunpack.c.l.b16 %v438
        %v592 = vunpack.c.h.b16 %v438
        %v593 = vunpack.c.l.b16 %v439
        %v594 = vunpack.c.h.b16 %v439
        %v595 = vunpack.c.l.b16 %v440
        %v596 = vunpack.c.h.b16 %v440
        %v597 = vunpack.c.l.b16 %v441
        %v598 = vunpack.c.h.b16 %v441
        %v599 = vunpack.c.l.b16 %v442
        %v600 = vunpack.c.h.b16 %v442
        %v601 = vunpack.c.l.b16 %v443
        %v602 = vunpack.c.h.b16 %v443
        %v603 = vunpack.c.l.b16 %v444
        %v604 = vunpack.c.h.b16 %v444
        %v605 = vpack.c.b16 %v545, %v541
        %v606 = vpack.c.b16 %v546, %v542
        %v607 = vpack.c.b16 %v547, %v543
        %v608 = vpack.c.b16 %v548, %v544
        %v609 = vpack.c.b16 %v553, %v549
        %v610 = vpack.c.b16 %v554, %v550
        %v611 = vpack.c.b16 %v555, %v551
        %v612 = vpack.c.b16 %v556, %v552
        %v613 = vpack.c.b16 %v561, %v557
        %v614 = vpack.c.b16 %v562, %v558
        %v615 = vpack.c.b16 %v563, %v559
        %v616 = vpack.c.b16 %v564, %v560
        %v617 = vpack.c.b16 %v569, %v565
        %v618 = vpack.c.b16 %v570, %v566
        %v619 = vpack.c.b16 %v571, %v567
        %v620 = vpack.c.b16 %v572, %v568
        %v621 = vpack.c.b16 %v577, %v573
        %v622 = vpack.c.b16 %v578, %v574
        %v623 = vpack.c.b16 %v579, %v575
        %v624 = vpack.c.b16 %v580, %v576
        %v625 = vpack.c.b16 %v585, %v581
        %v626 = vpack.c.b16 %v586, %v582
        %v627 = vpack.c.b16 %v587, %v583
        %v628 = vpack.c.b16 %v588, %v584
        %v629 = vpack.c.b16 %v593, %v589
        %v630 = vpack.c.b16 %v594, %v590
        %v631 = vpack.c.b16 %v595, %v591
        %v632 = vpack.c.b16 %v596, %v592
        %v633 = vpack.c.b16 %v601, %v597
        %v634 = vpack.c.b16 %v602, %v598
        %v635 = vpack.c.b16 %v603, %v599
        %v636 = vpack.c.b16 %v604, %v600
        %v733 = vunpack.c.l.b16 %v445
        %v734 = vunpack.c.l.b16 %v446
        %v735 = vunpack.c.l.b16 %v447
        %v736 = vunpack.c.l.b16 %v448
        %v737 = vunpack.c.l.b16 %v449
        %v738 = vunpack.c.l.b16 %v450
        %v739 = vunpack.c.l.b16 %v451
        %v740 = vunpack.c.l.b16 %v452
        %v741 = vunpack.c.l.b16 %v453
        %v742 = vunpack.c.l.b16 %v454
        %v743 = vunpack.c.l.b16 %v455
        %v744 = vunpack.c.l.b16 %v456
        %v745 = vunpack.c.l.b16 %v457
        %v746 = vunpack.c.l.b16 %v458
        %v747 = vunpack.c.l.b16 %v459
        %v748 = vunpack.c.l.b16 %v460
        %v749 = vunpack.c.l.b16 %v461
        %v750 = vunpack.c.l.b16 %v462
        %v751 = vunpack.c.l.b16 %v463
        %v752 = vunpack.c.l.b16 %v464
        %v753 = vunpack.c.l.b16 %v465
        %v754 = vunpack.c.l.b16 %v466
        %v755 = vunpack.c.l.b16 %v467
        %v756 = vunpack.c.l.b16 %v468
        %v757 = vunpack.c.l.b16 %v469
        %v758 = vunpack.c.l.b16 %v470
        %v759 = vunpack.c.l.b16 %v471
        %v760 = vunpack.c.l.b16 %v472
        %v761 = vunpack.c.l.b16 %v473
        %v762 = vunpack.c.l.b16 %v474
        %v763 = vunpack.c.l.b16 %v475
        %v764 = vunpack.c.l.b16 %v476
        %v765 = vunpack.c.l.b16 %v477
        %v766 = vunpack.c.l.b16 %v478
        %v767 = vunpack.c.l.b16 %v479
        %v768 = vunpack.c.l.b16 %v480
        %v769 = vunpack.c.l.b16 %v481
        %v770 = vunpack.c.l.b16 %v482
        %v771 = vunpack.c.l.b16 %v483
        %v772 = vunpack.c.l.b16 %v484
        %v773 = vunpack.c.l.b16 %v485
        %v774 = vunpack.c.l.b16 %v486
        %v775 = vunpack.c.l.b16 %v487
        %v776 = vunpack.c.l.b16 %v488
        %v777 = vunpack.c.l.b16 %v489
        %v778 = vunpack.c.l.b16 %v490
        %v779 = vunpack.c.l.b16 %v491
        %v780 = vunpack.c.l.b16 %v492
        %v781 = vunpack.c.l.b16 %v493
        %v782 = vunpack.c.l.b16 %v494
        %v783 = vunpack.c.l.b16 %v495
        %v784 = vunpack.c.l.b16 %v496
        %v785 = vunpack.c.l.b16 %v497
        %v786 = vunpack.c.l.b16 %v498
        %v787 = vunpack.c.l.b16 %v499
        %v788 = vunpack.c.l.b16 %v500
        %v789 = vunpack.c.l.b16 %v501
        %v790 = vunpack.c.l.b16 %v502
        %v791 = vunpack.c.l.b16 %v503
        %v792 = vunpack.c.l.b16 %v504
        %v793 = vunpack.c.l.b16 %v505
        %v794 = vunpack.c.l.b16 %v506
        %v795 = vunpack.c.l.b16 %v507
        %v796 = vunpack.c.l.b16 %v508
        %v797 = vpack.c.b16 %v734, %v733
        %v798 = vpack.c.b16 %v736, %v735
        %v799 = vpack.c.b16 %v738, %v737
        %v800 = vpack.c.b16 %v740, %v739
        %v801 = vpack.c.b16 %v742, %v741
        %v802 = vpack.c.b16 %v744, %v743
        %v803 = vpack.c.b16 %v746, %v745
        %v804 = vpack.c.b16 %v748, %v747
        %v805 = vpack.c.b16 %v750, %v749
        %v806 = vpack.c.b16 %v752, %v751
        %v807 = vpack.c.b16 %v754, %v753
        %v808 = vpack.c.b16 %v756, %v755
        %v809 = vpack.c.b16 %v758, %v757
        %v810 = vpack.c.b16 %v760, %v759
        %v811 = vpack.c.b16 %v762, %v761
        %v812 = vpack.c.b16 %v764, %v763
        %v813 = vpack.c.b16 %v766, %v765
        %v814 = vpack.c.b16 %v768, %v767
        %v815 = vpack.c.b16 %v770, %v769
        %v816 = vpack.c.b16 %v772, %v771
        %v817 = vpack.c.b16 %v774, %v773
        %v818 = vpack.c.b16 %v776, %v775
        %v819 = vpack.c.b16 %v778, %v777
        %v820 = vpack.c.b16 %v780, %v779
        %v821 = vpack.c.b16 %v782, %v781
        %v822 = vpack.c.b16 %v784, %v783
        %v823 = vpack.c.b16 %v786, %v785
        %v824 = vpack.c.b16 %v788, %v787
        %v825 = vpack.c.b16 %v790, %v789
        %v826 = vpack.c.b16 %v792, %v791
        %v827 = vpack.c.b16 %v794, %v793
        %v828 = vpack.c.b16 %v796, %v795
        %861 = vmatprep.subr.bf16.mxu0 0
        %862 = vmatpush1.bf16.msra.mxu0 %v797
        %863 = vmatprep.subr.bf16.mxu0 0
        %864 = vmatpush1.bf16.msra.mxu0 %v798
        %865 = vmatprep.subr.bf16.mxu0 0
        %866 = vmatpush1.bf16.msra.mxu0 %v799
        %867 = vmatprep.subr.bf16.mxu0 0
        %868 = vmatpush1.bf16.msra.mxu0 %v800
        %869 = vmatprep.subr.bf16.mxu0 0
        %870 = vmatpush1.bf16.msra.mxu0 %v801
        %871 = vmatprep.subr.bf16.mxu0 0
        %872 = vmatpush1.bf16.msra.mxu0 %v802
        %873 = vmatprep.subr.bf16.mxu0 0
        %874 = vmatpush1.bf16.msra.mxu0 %v803
        %875 = vmatprep.subr.bf16.mxu0 0
        %876 = vmatpush1.bf16.msra.mxu0 %v804
        %877 = vmatprep.subr.bf16.mxu0 0
        %878 = vmatpush1.bf16.msra.mxu0 %v805
        %879 = vmatprep.subr.bf16.mxu0 0
        %880 = vmatpush1.bf16.msra.mxu0 %v806
        %881 = vmatprep.subr.bf16.mxu0 0
        %882 = vmatpush1.bf16.msra.mxu0 %v807
        %883 = vmatprep.subr.bf16.mxu0 0
        %884 = vmatpush1.bf16.msra.mxu0 %v808
        %885 = vmatprep.subr.bf16.mxu0 0
        %886 = vmatpush1.bf16.msra.mxu0 %v809
        %887 = vmatprep.subr.bf16.mxu0 0
        %888 = vmatpush1.bf16.msra.mxu0 %v810
        %889 = vmatprep.subr.bf16.mxu0 0
        %890 = vmatpush1.bf16.msra.mxu0 %v811
        %891 = vmatprep.subr.bf16.mxu0 0
        %892 = vmatpush1.bf16.msra.mxu0 %v812
        %893 = vmatprep.mubr.bf16.mxu0 %v606
        %894 = vmatmul.mubr.bf16.gmra.mrb[0].mxu0 %v605
        %v895 = vpop.f32.mrb[0].mxu0
        %v896 = vadd.f32 0.0, %v895
        %v897 = vpop.f32.mrb[0].mxu0
        %v898 = vpop.f32.mrb[0].mxu0
        %v899 = vadd.f32 0.0, %v898
        %v900 = vpop.f32.mrb[0].mxu0
        %901 = vmatprep.mubr.bf16.mxu0 %v610
        %902 = vmatmul.mubr.bf16.gmra.mrb[0].mxu0 %v609
        %v903 = vpop.f32.mrb[0].mxu0
        %v904 = vadd.f32 0.0, %v903
        %v905 = vpop.f32.mrb[0].mxu0
        %v906 = vpop.f32.mrb[0].mxu0
        %v907 = vadd.f32 0.0, %v906
        %v908 = vpop.f32.mrb[0].mxu0
        %909 = vmatprep.mubr.bf16.mxu0 %v614
        %910 = vmatmul.mubr.bf16.gmra.mrb[0].mxu0 %v613
        %v911 = vpop.f32.mrb[0].mxu0
        %v912 = vadd.f32 0.0, %v911
        %v913 = vpop.f32.mrb[0].mxu0
        %v914 = vpop.f32.mrb[0].mxu0
        %v915 = vadd.f32 0.0, %v914
        %v916 = vpop.f32.mrb[0].mxu0
        %917 = vmatprep.mubr.bf16.mxu0 %v618
        %918 = vmatmul.mubr.bf16.gmra.mrb[0].mxu0 %v617
        %v919 = vpop.f32.mrb[0].mxu0
        %v920 = vadd.f32 0.0, %v919
        %v921 = vpop.f32.mrb[0].mxu0
        %v922 = vpop.f32.mrb[0].mxu0
        %v923 = vadd.f32 0.0, %v922
        %v924 = vpop.f32.mrb[0].mxu0
        %925 = vmatprep.mubr.bf16.mxu0 %v622
        %926 = vmatmul.mubr.bf16.gmra.mrb[0].mxu0 %v621
        %v927 = vpop.f32.mrb[0].mxu0
        %v928 = vadd.f32 0.0, %v927
        %v929 = vpop.f32.mrb[0].mxu0
        %v930 = vpop.f32.mrb[0].mxu0
        %v931 = vadd.f32 0.0, %v930
        %v932 = vpop.f32.mrb[0].mxu0
        %933 = vmatprep.mubr.bf16.mxu0 %v626
        %934 = vmatmul.mubr.bf16.gmra.mrb[0].mxu0 %v625
        %v935 = vpop.f32.mrb[0].mxu0
        %v936 = vadd.f32 0.0, %v935
        %v937 = vpop.f32.mrb[0].mxu0
        %v938 = vpop.f32.mrb[0].mxu0
        %v939 = vadd.f32 0.0, %v938
        %v940 = vpop.f32.mrb[0].mxu0
        %941 = vmatprep.mubr.bf16.mxu0 %v630
        %942 = vmatmul.mubr.bf16.gmra.mrb[0].mxu0 %v629
        %v943 = vpop.f32.mrb[0].mxu0
        %v944 = vadd.f32 0.0, %v943
        %v945 = vpop.f32.mrb[0].mxu0
        %v946 = vpop.f32.mrb[0].mxu0
        %v947 = vadd.f32 0.0, %v946
        %v948 = vpop.f32.mrb[0].mxu0
        %949 = vmatprep.mubr.bf16.mxu0 %v634
        %950 = vmatmul.mubr.bf16.gmra.mrb[0].mxu0 %v633
        %v951 = vpop.f32.mrb[0].mxu0
        %v952 = vadd.f32 0.0, %v951
        %v953 = vpop.f32.mrb[0].mxu0
        %v954 = vpop.f32.mrb[0].mxu0
        %v955 = vadd.f32 0.0, %v954
        %v956 = vpop.f32.mrb[0].mxu0
        %957 = vdwg.mxu0
        %958 = vmatprep.subr.bf16.mxu0 0
        %959 = vmatpush1.bf16.msra.mxu0 %v813
        %960 = vmatprep.subr.bf16.mxu0 0
        %961 = vmatpush1.bf16.msra.mxu0 %v814
        %962 = vmatprep.subr.bf16.mxu0 0
        %963 = vmatpush1.bf16.msra.mxu0 %v815
        %964 = vmatprep.subr.bf16.mxu0 0
        %965 = vmatpush1.bf16.msra.mxu0 %v816
        %966 = vmatprep.subr.bf16.mxu0 0
        %967 = vmatpush1.bf16.msra.mxu0 %v817
        %968 = vmatprep.subr.bf16.mxu0 0
        %969 = vmatpush1.bf16.msra.mxu0 %v818
        %970 = vmatprep.subr.bf16.mxu0 0
        %971 = vmatpush1.bf16.msra.mxu0 %v819
        %972 = vmatprep.subr.bf16.mxu0 0
        %973 = vmatpush1.bf16.msra.mxu0 %v820
        %974 = vmatprep.subr.bf16.mxu0 0
        %975 = vmatpush1.bf16.msra.mxu0 %v821
        %976 = vmatprep.subr.bf16.mxu0 0
        %977 = vmatpush1.bf16.msra.mxu0 %v822
        %978 = vmatprep.subr.bf16.mxu0 0
        %979 = vmatpush1.bf16.msra.mxu0 %v823
        %980 = vmatprep.subr.bf16.mxu0 0
        %981 = vmatpush1.bf16.msra.mxu0 %v824
        %982 = vmatprep.subr.bf16.mxu0 0
        %983 = vmatpush1.bf16.msra.mxu0 %v825
        %984 = vmatprep.subr.bf16.mxu0 0
        %985 = vmatpush1.bf16.msra.mxu0 %v826
        %986 = vmatprep.subr.bf16.mxu0 0
        %987 = vmatpush1.bf16.msra.mxu0 %v827
        %988 = vmatprep.subr.bf16.mxu0 0
        %989 = vmatpush1.bf16.msra.mxu0 %v828
        %990 = vmatprep.mubr.bf16.mxu0 %v608
        %991 = vmatmul.mubr.bf16.gmra.mrb[0].mxu0 %v607
        %v992 = vpop.f32.mrb[0].mxu0
        %v993 = vadd.f32 %v896, %v992
        %v994 = vpop.f32.mrb[0].mxu0
        %v995 = vpop.f32.mrb[0].mxu0
        %v996 = vadd.f32 %v899, %v995
        %v997 = vpop.f32.mrb[0].mxu0
        %998 = vmatprep.mubr.bf16.mxu0 %v612
        %999 = vmatmul.mubr.bf16.gmra.mrb[0].mxu0 %v611
        %v1000 = vpop.f32.mrb[0].mxu0
        %v1001 = vadd.f32 %v904, %v1000
        %v1002 = vpop.f32.mrb[0].mxu0
        %v1003 = vpop.f32.mrb[0].mxu0
        %v1004 = vadd.f32 %v907, %v1003
        %v1005 = vpop.f32.mrb[0].mxu0
        %1006 = vmatprep.mubr.bf16.mxu0 %v616
        %1007 = vmatmul.mubr.bf16.gmra.mrb[0].mxu0 %v615
        %v1008 = vpop.f32.mrb[0].mxu0
        %v1009 = vadd.f32 %v912, %v1008
        %v1010 = vpop.f32.mrb[0].mxu0
        %v1011 = vpop.f32.mrb[0].mxu0
        %v1012 = vadd.f32 %v915, %v1011
        %v1013 = vpop.f32.mrb[0].mxu0
        %1014 = vmatprep.mubr.bf16.mxu0 %v620
        %1015 = vmatmul.mubr.bf16.gmra.mrb[0].mxu0 %v619
        %v1016 = vpop.f32.mrb[0].mxu0
        %v1017 = vadd.f32 %v920, %v1016
        %v1018 = vpop.f32.mrb[0].mxu0
        %v1019 = vpop.f32.mrb[0].mxu0
        %v1020 = vadd.f32 %v923, %v1019
        %v1021 = vpop.f32.mrb[0].mxu0
        %1022 = vmatprep.mubr.bf16.mxu0 %v624
        %1023 = vmatmul.mubr.bf16.gmra.mrb[0].mxu0 %v623
        %v1024 = vpop.f32.mrb[0].mxu0
        %v1025 = vadd.f32 %v928, %v1024
        %v1026 = vpop.f32.mrb[0].mxu0
        %v1027 = vpop.f32.mrb[0].mxu0
        %v1028 = vadd.f32 %v931, %v1027
        %v1029 = vpop.f32.mrb[0].mxu0
        %1030 = vmatprep.mubr.bf16.mxu0 %v628
        %1031 = vmatmul.mubr.bf16.gmra.mrb[0].mxu0 %v627
        %v1032 = vpop.f32.mrb[0].mxu0
        %v1033 = vadd.f32 %v936, %v1032
        %v1034 = vpop.f32.mrb[0].mxu0
        %v1035 = vpop.f32.mrb[0].mxu0
        %v1036 = vadd.f32 %v939, %v1035
        %v1037 = vpop.f32.mrb[0].mxu0
        %1038 = vmatprep.mubr.bf16.mxu0 %v632
        %1039 = vmatmul.mubr.bf16.gmra.mrb[0].mxu0 %v631
        %v1040 = vpop.f32.mrb[0].mxu0
        %v1041 = vadd.f32 %v944, %v1040
        %v1042 = vpop.f32.mrb[0].mxu0
        %v1043 = vpop.f32.mrb[0].mxu0
        %v1044 = vadd.f32 %v947, %v1043
        %v1045 = vpop.f32.mrb[0].mxu0
        %1046 = vmatprep.mubr.bf16.mxu0 %v636
        %1047 = vmatmul.mubr.bf16.gmra.mrb[0].mxu0 %v635
        %v1048 = vpop.f32.mrb[0].mxu0
        %v1049 = vadd.f32 %v952, %v1048
        %v1050 = vpop.f32.mrb[0].mxu0
        %v1051 = vpop.f32.mrb[0].mxu0
        %v1052 = vadd.f32 %v955, %v1051
        %v1053 = vpop.f32.mrb[0].mxu0
        %1054 = vdwg.mxu0
        %v1055 = vadd.f32 %v397, %v993
        %v1056 = vadd.f32 %v398, %v996
        %v1057 = vadd.f32 %v399, %v1001
        %v1058 = vadd.f32 %v400, %v1004
        %v1059 = vadd.f32 %v401, %v1009
        %v1060 = vadd.f32 %v402, %v1012
        %v1061 = vadd.f32 %v403, %v1017
        %v1062 = vadd.f32 %v404, %v1020
        %v1063 = vadd.f32 %v405, %v1025
        %v1064 = vadd.f32 %v406, %v1028
        %v1065 = vadd.f32 %v407, %v1033
        %v1066 = vadd.f32 %v408, %v1036
        %v1067 = vadd.f32 %v409, %v1041
        %v1068 = vadd.f32 %v410, %v1044
        %v1069 = vadd.f32 %v411, %v1049
        %v1070 = vadd.f32 %v412, %v1052
        %1071 = vst [vmem:[#allocation2] sm:$0xff] %v1055
        %1072 = vst [vmem:[#allocation2 + $0x8] sm:$0xff] %v1056
        %1073 = vst [vmem:[#allocation2 + $0x10] sm:$0xff] %v1057
        %1074 = vst [vmem:[#allocation2 + $0x18] sm:$0xff] %v1058
        %1075 = vst [vmem:[#allocation2 + $0x20] sm:$0xff] %v1059
        %1076 = vst [vmem:[#allocation2 + $0x28] sm:$0xff] %v1060
        %1077 = vst [vmem:[#allocation2 + $0x30] sm:$0xff] %v1061
        %1078 = vst [vmem:[#allocation2 + $0x38] sm:$0xff] %v1062
        %1079 = vst [vmem:[#allocation2 + $0x40] sm:$0xff] %v1063
        %1080 = vst [vmem:[#allocation2 + $0x48] sm:$0xff] %v1064
        %1081 = vst [vmem:[#allocation2 + $0x50] sm:$0xff] %v1065
        %1082 = vst [vmem:[#allocation2 + $0x58] sm:$0xff] %v1066
        %1083 = vst [vmem:[#allocation2 + $0x60] sm:$0xff] %v1067
        %1084 = vst [vmem:[#allocation2 + $0x68] sm:$0xff] %v1068
        %1085 = vst [vmem:[#allocation2 + $0x70] sm:$0xff] %v1069
        %1086 = vst [vmem:[#allocation2 + $0x78] sm:$0xff] %v1070
        %p1087 = scmp.eq.s32.totalorder %s22, 1
        // Predicated region
        $region64: #{discriminator_forward.6} parent=54 // pred_check
          %p1088 = pneg %p1087
        $region65: #{discriminator_forward.6} parent=54 // pred_check_branch
          %1090 = sbr.rel (%p1088) target = $region67
        $region66: #{discriminator_forward.6} parent=54 // pred_region
          %v1091 = vld [vmem:[#allocation2] sm:$0xff]
          %v1092 = vld [vmem:[#allocation2 + $0x8] sm:$0xff]
          %v1093 = vld [vmem:[#allocation2 + $0x10] sm:$0xff]
          %v1094 = vld [vmem:[#allocation2 + $0x18] sm:$0xff]
          %v1095 = vld [vmem:[#allocation2 + $0x20] sm:$0xff]
          %v1096 = vld [vmem:[#allocation2 + $0x28] sm:$0xff]
          %v1097 = vld [vmem:[#allocation2 + $0x30] sm:$0xff]
          %v1098 = vld [vmem:[#allocation2 + $0x38] sm:$0xff]
          %v1099 = vld [vmem:[#allocation2 + $0x40] sm:$0xff]
          %v1100 = vld [vmem:[#allocation2 + $0x48] sm:$0xff]
          %v1101 = vld [vmem:[#allocation2 + $0x50] sm:$0xff]
          %v1102 = vld [vmem:[#allocation2 + $0x58] sm:$0xff]
          %v1103 = vld [vmem:[#allocation2 + $0x60] sm:$0xff]
          %v1104 = vld [vmem:[#allocation2 + $0x68] sm:$0xff]
          %v1105 = vld [vmem:[#allocation2 + $0x70] sm:$0xff]
          %v1106 = vld [vmem:[#allocation2 + $0x78] sm:$0xff]
          %v1107 = vlaneseq
          %v1108 = vshrl.u32 %v1107, 7
          %v1109 = vadd.s32 %v1108, 8
          %v1110 = vadd.s32 %v1108, 16
          %v1111 = vadd.s32 %v1108, 24
          %v1112 = vadd.s32 %v1108, 32
          %v1113 = vadd.s32 %v1108, 40
          %v1114 = vadd.s32 %v1108, 48
          %v1115 = vadd.s32 %v1108, 56
          %v1116 = vadd.s32 %v1108, 64
          %v1117 = vadd.s32 %v1108, 72
          %v1118 = vadd.s32 %v1108, 80
          %v1119 = vadd.s32 %v1108, 88
          %v1120 = vadd.s32 %v1108, 96
          %v1121 = vadd.s32 %v1108, 104
          %v1122 = vadd.s32 %v1108, 112
          %v1123 = vadd.s32 %v1108, 120
          %vm1124 = vcmp.lt.s32.totalorder %v1108, 128
          %vm1125 = vcmp.lt.s32.totalorder %v1109, 128
          %vm1126 = vcmp.lt.s32.totalorder %v1110, 128
          %vm1127 = vcmp.lt.s32.totalorder %v1111, 128
          %vm1128 = vcmp.lt.s32.totalorder %v1112, 128
          %vm1129 = vcmp.lt.s32.totalorder %v1113, 128
          %vm1130 = vcmp.lt.s32.totalorder %v1114, 128
          %vm1131 = vcmp.lt.s32.totalorder %v1115, 128
          %vm1132 = vcmp.lt.s32.totalorder %v1116, 128
          %vm1133 = vcmp.lt.s32.totalorder %v1117, 128
          %vm1134 = vcmp.lt.s32.totalorder %v1118, 128
          %vm1135 = vcmp.lt.s32.totalorder %v1119, 128
          %vm1136 = vcmp.lt.s32.totalorder %v1120, 128
          %vm1137 = vcmp.lt.s32.totalorder %v1121, 128
          %vm1138 = vcmp.lt.s32.totalorder %v1122, 128
          %vm1139 = vcmp.lt.s32.totalorder %v1123, 128
          %v1140 = vsel %vm1124, 1, 0
          %v1141 = vsel %vm1125, 1, 0
          %v1142 = vsel %vm1126, 1, 0
          %v1143 = vsel %vm1127, 1, 0
          %v1144 = vsel %vm1128, 1, 0
          %v1145 = vsel %vm1129, 1, 0
          %v1146 = vsel %vm1130, 1, 0
          %v1147 = vsel %vm1131, 1, 0
          %v1148 = vsel %vm1132, 1, 0
          %v1149 = vsel %vm1133, 1, 0
          %v1150 = vsel %vm1134, 1, 0
          %v1151 = vsel %vm1135, 1, 0
          %v1152 = vsel %vm1136, 1, 0
          %v1153 = vsel %vm1137, 1, 0
          %v1154 = vsel %vm1138, 1, 0
          %v1155 = vsel %vm1139, 1, 0
          %vm1156 = vcmp.eq.s32.totalorder %v1140, 1
          %vm1157 = vcmp.eq.s32.totalorder %v1141, 1
          %vm1158 = vcmp.eq.s32.totalorder %v1142, 1
          %vm1159 = vcmp.eq.s32.totalorder %v1143, 1
          %vm1160 = vcmp.eq.s32.totalorder %v1144, 1
          %vm1161 = vcmp.eq.s32.totalorder %v1145, 1
          %vm1162 = vcmp.eq.s32.totalorder %v1146, 1
          %vm1163 = vcmp.eq.s32.totalorder %v1147, 1
          %vm1164 = vcmp.eq.s32.totalorder %v1148, 1
          %vm1165 = vcmp.eq.s32.totalorder %v1149, 1
          %vm1166 = vcmp.eq.s32.totalorder %v1150, 1
          %vm1167 = vcmp.eq.s32.totalorder %v1151, 1
          %vm1168 = vcmp.eq.s32.totalorder %v1152, 1
          %vm1169 = vcmp.eq.s32.totalorder %v1153, 1
          %vm1170 = vcmp.eq.s32.totalorder %v1154, 1
          %vm1171 = vcmp.eq.s32.totalorder %v1155, 1
          %v1172 = vsel %vm1156, %v1091, 0.0
          %v1173 = vsel %vm1157, %v1092, 0.0
          %v1174 = vsel %vm1158, %v1093, 0.0
          %v1175 = vsel %vm1159, %v1094, 0.0
          %v1176 = vsel %vm1160, %v1095, 0.0
          %v1177 = vsel %vm1161, %v1096, 0.0
          %v1178 = vsel %vm1162, %v1097, 0.0
          %v1179 = vsel %vm1163, %v1098, 0.0
          %v1180 = vsel %vm1164, %v1099, 0.0
          %v1181 = vsel %vm1165, %v1100, 0.0
          %v1182 = vsel %vm1166, %v1101, 0.0
          %v1183 = vsel %vm1167, %v1102, 0.0
          %v1184 = vsel %vm1168, %v1103, 0.0
          %v1185 = vsel %vm1169, %v1104, 0.0
          %v1186 = vsel %vm1170, %v1105, 0.0
          %v1187 = vsel %vm1171, %v1106, 0.0
          %v1188 = vadd.f32 %v1172, %v1173
          %v1189 = vadd.f32 %v1188, %v1174
          %v1190 = vadd.f32 %v1189, %v1175
          %v1191 = vadd.f32 %v1190, %v1176
          %v1192 = vadd.f32 %v1191, %v1177
          %v1193 = vadd.f32 %v1192, %v1178
          %v1194 = vadd.f32 %v1193, %v1179
          %v1195 = vadd.f32 %v1194, %v1180
          %v1196 = vadd.f32 %v1195, %v1181
          %v1197 = vadd.f32 %v1196, %v1182
          %v1198 = vadd.f32 %v1197, %v1183
          %v1199 = vadd.f32 %v1198, %v1184
          %v1200 = vadd.f32 %v1199, %v1185
          %v1201 = vadd.f32 %v1200, %v1186
          %v1202 = vadd.f32 %v1201, %v1187
          %v1203 = vrot.slane %v1202, 4
          %v1204 = vadd.f32 %v1202, %v1203
          %v1205 = vrot.slane %v1204, 2
          %v1206 = vadd.f32 %v1204, %v1205
          %v1207 = vrot.slane %v1206, 1
          %v1208 = vadd.f32 %v1206, %v1207
          %v1209 = vmul.f32 %v1208, 0.0078125
          %v1210 = vsub.f32 %v1091, %v1209
          %v1211 = vsub.f32 %v1092, %v1209
          %v1212 = vsub.f32 %v1093, %v1209
          %v1213 = vsub.f32 %v1094, %v1209
          %v1214 = vsub.f32 %v1095, %v1209
          %v1215 = vsub.f32 %v1096, %v1209
          %v1216 = vsub.f32 %v1097, %v1209
          %v1217 = vsub.f32 %v1098, %v1209
          %v1218 = vsub.f32 %v1099, %v1209
          %v1219 = vsub.f32 %v1100, %v1209
          %v1220 = vsub.f32 %v1101, %v1209
          %v1221 = vsub.f32 %v1102, %v1209
          %v1222 = vsub.f32 %v1103, %v1209
          %v1223 = vsub.f32 %v1104, %v1209
          %v1224 = vsub.f32 %v1105, %v1209
          %v1225 = vsub.f32 %v1106, %v1209
          %v1226 = vmul.f32 %v1210, %v1210
          %v1227 = vmul.f32 %v1211, %v1211
          %v1228 = vmul.f32 %v1212, %v1212
          %v1229 = vmul.f32 %v1213, %v1213
          %v1230 = vmul.f32 %v1214, %v1214
          %v1231 = vmul.f32 %v1215, %v1215
          %v1232 = vmul.f32 %v1216, %v1216
          %v1233 = vmul.f32 %v1217, %v1217
          %v1234 = vmul.f32 %v1218, %v1218
          %v1235 = vmul.f32 %v1219, %v1219
          %v1236 = vmul.f32 %v1220, %v1220
          %v1237 = vmul.f32 %v1221, %v1221
          %v1238 = vmul.f32 %v1222, %v1222
          %v1239 = vmul.f32 %v1223, %v1223
          %v1240 = vmul.f32 %v1224, %v1224
          %v1241 = vmul.f32 %v1225, %v1225
          %v1242 = vsel %vm1156, %v1226, 0.0
          %v1243 = vsel %vm1157, %v1227, 0.0
          %v1244 = vsel %vm1158, %v1228, 0.0
          %v1245 = vsel %vm1159, %v1229, 0.0
          %v1246 = vsel %vm1160, %v1230, 0.0
          %v1247 = vsel %vm1161, %v1231, 0.0
          %v1248 = vsel %vm1162, %v1232, 0.0
          %v1249 = vsel %vm1163, %v1233, 0.0
          %v1250 = vsel %vm1164, %v1234, 0.0
          %v1251 = vsel %vm1165, %v1235, 0.0
          %v1252 = vsel %vm1166, %v1236, 0.0
          %v1253 = vsel %vm1167, %v1237, 0.0
          %v1254 = vsel %vm1168, %v1238, 0.0
          %v1255 = vsel %vm1169, %v1239, 0.0
          %v1256 = vsel %vm1170, %v1240, 0.0
          %v1257 = vsel %vm1171, %v1241, 0.0
          %v1258 = vadd.f32 %v1242, %v1243
          %v1259 = vadd.f32 %v1258, %v1244
          %v1260 = vadd.f32 %v1259, %v1245
          %v1261 = vadd.f32 %v1260, %v1246
          %v1262 = vadd.f32 %v1261, %v1247
          %v1263 = vadd.f32 %v1262, %v1248
          %v1264 = vadd.f32 %v1263, %v1249
          %v1265 = vadd.f32 %v1264, %v1250
          %v1266 = vadd.f32 %v1265, %v1251
          %v1267 = vadd.f32 %v1266, %v1252
          %v1268 = vadd.f32 %v1267, %v1253
          %v1269 = vadd.f32 %v1268, %v1254
          %v1270 = vadd.f32 %v1269, %v1255
          %v1271 = vadd.f32 %v1270, %v1256
          %v1272 = vadd.f32 %v1271, %v1257
          %v1273 = vrot.slane %v1272, 4
          %v1274 = vadd.f32 %v1272, %v1273
          %v1275 = vrot.slane %v1274, 2
          %v1276 = vadd.f32 %v1274, %v1275
          %v1277 = vrot.slane %v1276, 1
          %v1278 = vadd.f32 %v1276, %v1277
          %v1279 = vmul.f32 %v1278, 0.0078125
          %v1280 = vadd.f32 %v1279, 1e-05
          %v1281 = vrsqrt.pop %v1280
          %v1282 = vmul.f32 %v1210, %v1281
          %v1283 = vmul.f32 %v1211, %v1281
          %v1284 = vmul.f32 %v1212, %v1281
          %v1285 = vmul.f32 %v1213, %v1281
          %v1286 = vmul.f32 %v1214, %v1281
          %v1287 = vmul.f32 %v1215, %v1281
          %v1288 = vmul.f32 %v1216, %v1281
          %v1289 = vmul.f32 %v1217, %v1281
          %v1290 = vmul.f32 %v1218, %v1281
          %v1291 = vmul.f32 %v1219, %v1281
          %v1292 = vmul.f32 %v1220, %v1281
          %v1293 = vmul.f32 %v1221, %v1281
          %v1294 = vmul.f32 %v1222, %v1281
          %v1295 = vmul.f32 %v1223, %v1281
          %v1296 = vmul.f32 %v1224, %v1281
          %v1297 = vmul.f32 %v1225, %v1281
          %v1298 = vld [vmem:[%s363] sm:$0x1]
          %v1300 = vlaneseq
          %v1301 = vshrl.u32 %v1300, 7
          %v1302 = vsub.s32 0, %v1301
          %v1303 = vrot.slane %v1298, %v1302
          %v1305 = vmul.f32 %v1282, %v1303
          %v1306 = vmul.f32 %v1283, %v1303
          %v1307 = vmul.f32 %v1284, %v1303
          %v1308 = vmul.f32 %v1285, %v1303
          %v1309 = vmul.f32 %v1286, %v1303
          %v1310 = vmul.f32 %v1287, %v1303
          %v1311 = vmul.f32 %v1288, %v1303
          %v1312 = vmul.f32 %v1289, %v1303
          %v1313 = vmul.f32 %v1290, %v1303
          %v1314 = vmul.f32 %v1291, %v1303
          %v1315 = vmul.f32 %v1292, %v1303
          %v1316 = vmul.f32 %v1293, %v1303
          %v1317 = vmul.f32 %v1294, %v1303
          %v1318 = vmul.f32 %v1295, %v1303
          %v1319 = vmul.f32 %v1296, %v1303
          %v1320 = vmul.f32 %v1297, %v1303
          %v1321 = vld [vmem:[%s366] sm:$0x1]
          %v1323 = vlaneseq
          %v1324 = vshrl.u32 %v1323, 7
          %v1325 = vsub.s32 0, %v1324
          %v1326 = vrot.slane %v1321, %v1325
          %v1328 = vadd.f32 %v1305, %v1326
          %v1329 = vadd.f32 %v1306, %v1326
          %v1330 = vadd.f32 %v1307, %v1326
          %v1331 = vadd.f32 %v1308, %v1326
          %v1332 = vadd.f32 %v1309, %v1326
          %v1333 = vadd.f32 %v1310, %v1326
          %v1334 = vadd.f32 %v1311, %v1326
          %v1335 = vadd.f32 %v1312, %v1326
          %v1336 = vadd.f32 %v1313, %v1326
          %v1337 = vadd.f32 %v1314, %v1326
          %v1338 = vadd.f32 %v1315, %v1326
          %v1339 = vadd.f32 %v1316, %v1326
          %v1340 = vadd.f32 %v1317, %v1326
          %v1341 = vadd.f32 %v1318, %v1326
          %v1342 = vadd.f32 %v1319, %v1326
          %v1343 = vadd.f32 %v1320, %v1326
          %vm1344 = vcmp.ge.f32.partialorder %v1328, 0.0
          %vm1345 = vcmp.ge.f32.partialorder %v1329, 0.0
          %vm1346 = vcmp.ge.f32.partialorder %v1330, 0.0
          %vm1347 = vcmp.ge.f32.partialorder %v1331, 0.0
          %vm1348 = vcmp.ge.f32.partialorder %v1332, 0.0
          %vm1349 = vcmp.ge.f32.partialorder %v1333, 0.0
          %vm1350 = vcmp.ge.f32.partialorder %v1334, 0.0
          %vm1351 = vcmp.ge.f32.partialorder %v1335, 0.0
          %vm1352 = vcmp.ge.f32.partialorder %v1336, 0.0
          %vm1353 = vcmp.ge.f32.partialorder %v1337, 0.0
          %vm1354 = vcmp.ge.f32.partialorder %v1338, 0.0
          %vm1355 = vcmp.ge.f32.partialorder %v1339, 0.0
          %vm1356 = vcmp.ge.f32.partialorder %v1340, 0.0
          %vm1357 = vcmp.ge.f32.partialorder %v1341, 0.0
          %vm1358 = vcmp.ge.f32.partialorder %v1342, 0.0
          %vm1359 = vcmp.ge.f32.partialorder %v1343, 0.0
          %v1360 = vmul.f32 %v1328, 0.2
          %v1361 = vmul.f32 %v1329, 0.2
          %v1362 = vmul.f32 %v1330, 0.2
          %v1363 = vmul.f32 %v1331, 0.2
          %v1364 = vmul.f32 %v1332, 0.2
          %v1365 = vmul.f32 %v1333, 0.2
          %v1366 = vmul.f32 %v1334, 0.2
          %v1367 = vmul.f32 %v1335, 0.2
          %v1368 = vmul.f32 %v1336, 0.2
          %v1369 = vmul.f32 %v1337, 0.2
          %v1370 = vmul.f32 %v1338, 0.2
          %v1371 = vmul.f32 %v1339, 0.2
          %v1372 = vmul.f32 %v1340, 0.2
          %v1373 = vmul.f32 %v1341, 0.2
          %v1374 = vmul.f32 %v1342, 0.2
          %v1375 = vmul.f32 %v1343, 0.2
          %v1376 = vsel %vm1344, %v1328, %v1360
          %v1377 = vsel %vm1345, %v1329, %v1361
          %v1378 = vsel %vm1346, %v1330, %v1362
          %v1379 = vsel %vm1347, %v1331, %v1363
          %v1380 = vsel %vm1348, %v1332, %v1364
          %v1381 = vsel %vm1349, %v1333, %v1365
          %v1382 = vsel %vm1350, %v1334, %v1366
          %v1383 = vsel %vm1351, %v1335, %v1367
          %v1384 = vsel %vm1352, %v1336, %v1368
          %v1385 = vsel %vm1353, %v1337, %v1369
          %v1386 = vsel %vm1354, %v1338, %v1370
          %v1387 = vsel %vm1355, %v1339, %v1371
          %v1388 = vsel %vm1356, %v1340, %v1372
          %v1389 = vsel %vm1357, %v1341, %v1373
          %v1390 = vsel %vm1358, %v1342, %v1374
          %v1391 = vsel %vm1359, %v1343, %v1375
          %1392 = vst [vmem:[%s374] sm:$0xff] %v1376
          %1393 = vst [vmem:[%s374 + $0x8] sm:$0xff] %v1377
          %1394 = vst [vmem:[%s374 + $0x10] sm:$0xff] %v1378
          %1395 = vst [vmem:[%s374 + $0x18] sm:$0xff] %v1379
          %1396 = vst [vmem:[%s374 + $0x20] sm:$0xff] %v1380
          %1397 = vst [vmem:[%s374 + $0x28] sm:$0xff] %v1381
          %1398 = vst [vmem:[%s374 + $0x30] sm:$0xff] %v1382
          %1399 = vst [vmem:[%s374 + $0x38] sm:$0xff] %v1383
          %1400 = vst [vmem:[%s374 + $0x40] sm:$0xff] %v1384
          %1401 = vst [vmem:[%s374 + $0x48] sm:$0xff] %v1385
          %1402 = vst [vmem:[%s374 + $0x50] sm:$0xff] %v1386
          %1403 = vst [vmem:[%s374 + $0x58] sm:$0xff] %v1387
          %1404 = vst [vmem:[%s374 + $0x60] sm:$0xff] %v1388
          %1405 = vst [vmem:[%s374 + $0x68] sm:$0xff] %v1389
          %1406 = vst [vmem:[%s374 + $0x70] sm:$0xff] %v1390
          %1407 = vst [vmem:[%s374 + $0x78] sm:$0xff] %v1391
        $region67: #{discriminator_forward.6} parent=54 // pred_fallthru
          _
        %s1408 = smul.u32 16, %s20
        %p1409 = scmp.lt.s32.totalorder %s1408, 15
        %s1410 = scalar_select %p1409, %s1408, 15
        %p1411 = scmp.lt.s32.totalorder %s21, 0
        %s1412 = scalar_select %p1411, %s21, 0
        %s1413 = sadd.s32 %s1412, %s1410
        %s1414 = smul.addr %s1413, 8
        %s1415 = scalar_lea.vmem %s4, %s1414
        // Predicated region
        $region68: #{discriminator_forward.6} parent=54 // pred_check
          %p1416 = pneg %p162
        $region69: #{discriminator_forward.6} parent=54 // pred_check_branch
          %1418 = sbr.rel (%p1416) target = $region71
        $region70: #{discriminator_forward.6} parent=54 // pred_region
          %s1419 = smul.u32 16, %s20
        $region71: #{discriminator_forward.6} parent=54 // pred_fallthru
          _
        // Predicated region
        $region72: #{discriminator_forward.6} parent=54 // pred_check
          %p1420 = pneg %p162
        $region73: #{discriminator_forward.6} parent=54 // pred_check_branch
          %1422 = sbr.rel (%p1420) target = $region75
        $region74: #{discriminator_forward.6} parent=54 // pred_region
          %s1423 = smul.u32 16, %s20
          %p1424 = scmp.lt.s32.totalorder %s1423, 15
          %s1425 = scalar_select %p1424, %s1423, 15
          %p1426 = scmp.lt.s32.totalorder %s21, 0
          %s1427 = scalar_select %p1426, %s21, 0
          %s1428 = sadd.s32 %s1427, %s1425
          %s1429 = smul.addr %s1428, 8
          %s1430 = scalar_lea.vmem %s4, %s1429
        $region75: #{discriminator_forward.6} parent=54 // pred_fallthru
          _
      $region55: #{discriminator_forward.6} parent=5 // pred_fallthru
        _
      %p1431 = scmp.le.s32.totalorder 2, %s10
      // Predicated region
      $region76: #{discriminator_forward.6} parent=5 // pred_check
        %p1432 = pneg %p1431
      $region77: #{discriminator_forward.6} parent=5 // pred_check_branch
        %1434 = sbr.rel (%p1432) target = $region79
      $region78: #{discriminator_forward.6} parent=5 // pred_region
        %s1435 = ssub.s32 %s10, 2
      $region79: #{discriminator_forward.6} parent=5 // pred_fallthru
        _
    $region6: #{discriminator_forward.6} parent=1 // loop_footer
      %s14 = sadd.s32 1, %s10
    $region7: #{discriminator_forward.6} parent=1 // loop_footer_branch
      %9 = sbr.rel target = $region3
    $region8: #{discriminator_forward.6} parent=1 // loop_exit
      _

// kernel: discriminator_forward.7
$region0: #{discriminator_forward.7}
  #allocation0 [shape = 'u32[]', space=smem, size = 0x4, offset = 0x4, fixed_abs, tag = 'smem constant byte address 0x4 - core index']
  #allocation1 [shape = 'u32[144,128]{1,0:T(1,128)}', space=vmem, size = 0x12000, scoped, tag = 'internal scratch']
  #allocation2 [shape = 'f32[32,256]{1,0:T(8,128)}', space=vmem, size = 0x8000, scoped, tag = 'scratch operand']
  %s0 = inlined_call_operand.vmem [shape: bf16[32,2048], index: 0, kind: input, shape index: {}]
  %s1 = inlined_call_operand.vmem [shape: bf16[2048,256], index: 1, kind: input, shape index: {}]
  %s2 = inlined_call_operand.vmem [shape: f32[1,256], index: 2, kind: input, shape index: {}]
  %s3 = inlined_call_operand.vmem [shape: f32[1,256], index: 3, kind: input, shape index: {}]
  %s4 = inlined_call_operand.vmem [shape: f32[32,256], index: 4, kind: output, shape index: {}]
  %s5 = sld [smem:[#allocation0]]
  $region80: #{discriminator_forward.7} parent=0
    _
  %s7 = ssub.s32 1, %s5
  %s8 = scalar_select 0, %s7, %s5
  $region1: #{discriminator_forward.7} parent=0
    #allocation3 [shape = 'u8[65536]{0}', space=vmem, size = 0x10000, scoped, tag = 'input window, operand 0']
    loop: start=0, step=1, limit=6
    $region2: #{discriminator_forward.7} parent=1 // loop_pre_header
      _
    $region3: #{discriminator_forward.7} parent=1 // loop_header
      %s10 = sphi 0, %s14
      %p11 = scmp.ge.s32.totalorder %s10, 6
      %s17 = sphi 0, %s36
      %s18 = sphi 0, %s32
      %s19 = sphi 0, %s28
      %s20 = sphi 0, %s17
      %s21 = sphi 0, %s18
      %s22 = sphi 0, %s19
      %s23 = sphi 0, %s20
      %s24 = sphi 0, %s21
      %s25 = sphi 0, %s22
      %s41 = sphi 0, %s43
      %s44 = sphi 0, %s41
      %s45 = sphi 0, %s44
      %s61 = sphi 0, %s45
      %s69 = sphi 0, %s71
      %s72 = sphi 0, %s69
      %s73 = sphi 0, %s72
      %s89 = sphi 0, %s73
      %s95 = sphi 0, %s97
      %s98 = sphi 0, %s95
      %s99 = sphi 0, %s98
      %s115 = sphi 0, %s99
      %s121 = sphi 0, %s123
      %s124 = sphi 0, %s121
      %s125 = sphi 0, %s124
      %s141 = sphi 0, %s125
      %s149 = sphi 0, %s151
      %s152 = sphi 0, %s149
      %s153 = sphi 0, %s152
      %s169 = sphi 0, %s153
    $region4: #{discriminator_forward.7} parent=1 // loop_header_branch
      %13 = sbr.rel (%p11) target = $region8
    $region5: #{discriminator_forward.7} parent=1 // loop_body
      %s15 = ssub.s32 %s10, 1
      %s16 = ssub.s32 %s10, 2
      %s26 = sadd.s32 1, %s19
      %p27 = scmp.ge.s32.totalorder %s26, 4
      %s28 = scalar_select %p27, 0, %s26
      %s29 = sadd.s32 1, %s18
      %s30 = scalar_select %p27, %s29, %s18
      %p31 = scmp.ge.s32.totalorder %s30, 1
      %s32 = scalar_select %p31, 0, %s30
      %s33 = sadd.s32 1, %s17
      %s34 = scalar_select %p31, %s33, %s17
      %p35 = scmp.ge.s32.totalorder %s34, 1
      %s36 = scalar_select %p35, 0, %s34
      %s37 = ssub.s32 %s17, %s36
      %s38 = ssub.s32 %s19, %s28
      %s39 = sor.u32 %s37, %s38
      %p40 = scmp.eq.s32.totalorder %s39, 0
      %s42 = sadd.s32 %s41, 1
      %s43 = scalar_select %p40, %s41, %s42
      %p46 = pneg %p40
      %p47 = scmp.eq.s32.totalorder %s10, 3
      %p48 = por %p46, %p47
      %p49 = scmp.ne.s32.totalorder %s41, %s44
      %p50 = scmp.eq.s32.totalorder %s10, 0
      %p51 = por %p49, %p50
      %p52 = scmp.ne.s32.totalorder %s41, %s44
      %p53 = scmp.eq.s32.totalorder %s15, 3
      %p54 = por %p52, %p53
      %p55 = scmp.ne.s32.totalorder %s44, %s45
      %p56 = scmp.eq.s32.totalorder %s15, 0
      %p57 = por %p55, %p56
      %p58 = scmp.ne.s32.totalorder %s44, %s45
      %p59 = scmp.eq.s32.totalorder %s16, 3
      %p60 = por %p58, %p59
      %p62 = scmp.ne.s32.totalorder %s45, %s61
      %p63 = scmp.eq.s32.totalorder %s16, 0
      %p64 = por %p62, %p63
      %s65 = ssub.s32 %s19, %s28
      %s66 = ssub.s32 %s18, %s32
      %s67 = sor.u32 %s65, %s66
      %p68 = scmp.eq.s32.totalorder %s67, 0
      %s70 = sadd.s32 %s69, 1
      %s71 = scalar_select %p68, %s69, %s70
      %p74 = pneg %p68
      %p75 = scmp.eq.s32.totalorder %s10, 3
      %p76 = por %p74, %p75
      %p77 = scmp.ne.s32.totalorder %s69, %s72
      %p78 = scmp.eq.s32.totalorder %s10, 0
      %p79 = por %p77, %p78
      %p80 = scmp.ne.s32.totalorder %s69, %s72
      %p81 = scmp.eq.s32.totalorder %s15, 3
      %p82 = por %p80, %p81
      %p83 = scmp.ne.s32.totalorder %s72, %s73
      %p84 = scmp.eq.s32.totalorder %s15, 0
      %p85 = por %p83, %p84
      %p86 = scmp.ne.s32.totalorder %s72, %s73
      %p87 = scmp.eq.s32.totalorder %s16, 3
      %p88 = por %p86, %p87
      %p90 = scmp.ne.s32.totalorder %s73, %s89
      %p91 = scmp.eq.s32.totalorder %s16, 0
      %p92 = por %p90, %p91
      %s93 = ssub.s32 %s18, %s32
      %p94 = scmp.eq.s32.totalorder %s93, 0
      %s96 = sadd.s32 %s95, 1
      %s97 = scalar_select %p94, %s95, %s96
      %p100 = pneg %p94
      %p101 = scmp.eq.s32.totalorder %s10, 3
      %p102 = por %p100, %p101
      %p103 = scmp.ne.s32.totalorder %s95, %s98
      %p104 = scmp.eq.s32.totalorder %s10, 0
      %p105 = por %p103, %p104
      %p106 = scmp.ne.s32.totalorder %s95, %s98
      %p107 = scmp.eq.s32.totalorder %s15, 3
      %p108 = por %p106, %p107
      %p109 = scmp.ne.s32.totalorder %s98, %s99
      %p110 = scmp.eq.s32.totalorder %s15, 0
      %p111 = por %p109, %p110
      %p112 = scmp.ne.s32.totalorder %s98, %s99
      %p113 = scmp.eq.s32.totalorder %s16, 3
      %p114 = por %p112, %p113
      %p116 = scmp.ne.s32.totalorder %s99, %s115
      %p117 = scmp.eq.s32.totalorder %s16, 0
      %p118 = por %p116, %p117
      %s119 = ssub.s32 %s18, %s32
      %p120 = scmp.eq.s32.totalorder %s119, 0
      %s122 = sadd.s32 %s121, 1
      %s123 = scalar_select %p120, %s121, %s122
      %p126 = pneg %p120
      %p127 = scmp.eq.s32.totalorder %s10, 3
      %p128 = por %p126, %p127
      %p129 = scmp.ne.s32.totalorder %s121, %s124
      %p130 = scmp.eq.s32.totalorder %s10, 0
      %p131 = por %p129, %p130
      %p132 = scmp.ne.s32.totalorder %s121, %s124
      %p133 = scmp.eq.s32.totalorder %s15, 3
      %p134 = por %p132, %p133
      %p135 = scmp.ne.s32.totalorder %s124, %s125
      %p136 = scmp.eq.s32.totalorder %s15, 0
      %p137 = por %p135, %p136
      %p138 = scmp.ne.s32.totalorder %s124, %s125
      %p139 = scmp.eq.s32.totalorder %s16, 3
      %p140 = por %p138, %p139
      %p142 = scmp.ne.s32.totalorder %s125, %s141
      %p143 = scmp.eq.s32.totalorder %s16, 0
      %p144 = por %p142, %p143
      %s145 = ssub.s32 %s17, %s36
      %s146 = ssub.s32 %s18, %s32
      %s147 = sor.u32 %s145, %s146
      %p148 = scmp.eq.s32.totalorder %s147, 0
      %s150 = sadd.s32 %s149, 1
      %s151 = scalar_select %p148, %s149, %s150
      %p154 = pneg %p148
      %p155 = scmp.eq.s32.totalorder %s10, 3
      %p156 = por %p154, %p155
      %p157 = scmp.ne.s32.totalorder %s149, %s152
      %p158 = scmp.eq.s32.totalorder %s10, 0
      %p159 = por %p157, %p158
      %p160 = scmp.ne.s32.totalorder %s149, %s152
      %p161 = scmp.eq.s32.totalorder %s15, 3
      %p162 = por %p160, %p161
      %p163 = scmp.ne.s32.totalorder %s152, %s153
      %p164 = scmp.eq.s32.totalorder %s15, 0
      %p165 = por %p163, %p164
      %p166 = scmp.ne.s32.totalorder %s152, %s153
      %p167 = scmp.eq.s32.totalorder %s16, 3
      %p168 = por %p166, %p167
      %p170 = scmp.ne.s32.totalorder %s153, %s169
      %p171 = scmp.eq.s32.totalorder %s16, 0
      %p172 = por %p170, %p171
      %p173 = scmp.le.s32.totalorder 1, %s10
      %p174 = scmp.lt.s32.totalorder %s10, 5
      %p175 = pnand %p173, %p174
      %p176 = pneg %p175
      // Predicated region
      $region9: #{discriminator_forward.7} parent=5 // pred_check
        _
      $region10: #{discriminator_forward.7} parent=5 // pred_check_branch
        %178 = sbr.rel (%p175) target = $region12
      $region11: #{discriminator_forward.7} parent=5 // pred_region
        %s179 = ssub.s32 %s10, 1
        // Predicated region
        $region13: #{discriminator_forward.7} parent=11 // pred_check
          %p180 = pneg %p111
        $region14: #{discriminator_forward.7} parent=11 // pred_check_branch
          %182 = sbr.rel (%p180) target = $region16
        $region15: #{discriminator_forward.7} parent=11 // pred_region
          %s183 = smul.u32 2, %s21
          %p184 = scmp.lt.s32.totalorder %s183, 1
          %s185 = scalar_select %p184, %s183, 1
          %s186 = scalar_lea.vmem %s2, %s185
          %s187 = smul.u32 2, %s21
        $region16: #{discriminator_forward.7} parent=11 // pred_fallthru
          _
        // Predicated region
        $region17: #{discriminator_forward.7} parent=11 // pred_check
          %p188 = pneg %p137
        $region18: #{discriminator_forward.7} parent=11 // pred_check_branch
          %190 = sbr.rel (%p188) target = $region20
        $region19: #{discriminator_forward.7} parent=11 // pred_region
          %s191 = smul.u32 2, %s21
          %p192 = scmp.lt.s32.totalorder %s191, 1
          %s193 = scalar_select %p192, %s191, 1
          %s194 = scalar_lea.vmem %s3, %s193
          %s195 = smul.u32 2, %s21
        $region20: #{discriminator_forward.7} parent=11 // pred_fallthru
          _
      $region12: #{discriminator_forward.7} parent=5 // pred_fallthru
        _
      %p196 = scmp.lt.s32.totalorder %s10, 4
      // Predicated region
      $region21: #{discriminator_forward.7} parent=5 // pred_check
        %p197 = pneg %p196
      $region22: #{discriminator_forward.7} parent=5 // pred_check_branch
        %199 = sbr.rel (%p197) target = $region24
      $region23: #{discriminator_forward.7} parent=5 // pred_region
        // Predicated region
        $region25: #{discriminator_forward.7} parent=23 // pred_check
          %p200 = pneg %p51
        $region26: #{discriminator_forward.7} parent=23 // pred_check_branch
          %202 = sbr.rel (%p200) target = $region28
        $region27: #{discriminator_forward.7} parent=23 // pred_region
          %s203 = sand.u32 %s41, 1
          %s204 = sand.u32 %s41, 1
          %s205 = smul.addr %s204, 64
          %s206 = scalar_lea.vmem [#allocation3], %s205
          %s207 = smul.u32 4, %s17
          %s208 = smul.u32 4, %s19
          %s209 = smul.addr %s207, 16
          %s210 = sadd.s32 %s208, %s209
          %s211 = smul.addr %s210, 4
          %s212 = scalar_lea.vmem %s0, %s211
          // Predicated region
          $region29: #{discriminator_forward.7} parent=27 // pred_check
            _
          $region30: #{discriminator_forward.7} parent=27 // pred_check_branch
            %214 = sbr.rel (0) target = $region32
          $region31: #{discriminator_forward.7} parent=27 // pred_region
            // Predicated region
            $region33: #{discriminator_forward.7} parent=31 // pred_check
              _
            $region34: #{discriminator_forward.7} parent=31 // pred_check_branch
              %216 = sbr.rel (0) target = $region36
            $region35: #{discriminator_forward.7} parent=31 // pred_region
              loop: start=0, step=1, limit=1
              $region37: #{discriminator_forward.7} parent=35 // loop_pre_header
                _
              $region38: #{discriminator_forward.7} parent=35 // loop_header
                %s218 = sphi 0, %s222
                %p219 = scmp.ge.s32.totalorder %s218, 1
                %s223 = sphi %s212, %s212
                %s224 = sphi %s206, %s206
              $region39: #{discriminator_forward.7} parent=35 // loop_header_branch
                %221 = sbr.rel (%p219) target = $region43
              $region40: #{discriminator_forward.7} parent=35 // loop_body
                %v225 = vld [vmem:[%s223] sm:$0xff]
                %226 = vst [vmem:[%s224] sm:$0xff] %v225
                %v227 = vld [vmem:[%s223 + $0x8] sm:$0xff]
                %228 = vst [vmem:[%s224 + $0x8] sm:$0xff] %v227
                %v229 = vld [vmem:[%s223 + $0x40] sm:$0xff]
                %230 = vst [vmem:[%s224 + $0x10] sm:$0xff] %v229
                %v231 = vld [vmem:[%s223 + $0x48] sm:$0xff]
                %232 = vst [vmem:[%s224 + $0x18] sm:$0xff] %v231
                %v233 = vld [vmem:[%s223 + $0x80] sm:$0xff]
                %234 = vst [vmem:[%s224 + $0x20] sm:$0xff] %v233
                %v235 = vld [vmem:[%s223 + $0x88] sm:$0xff]
                %236 = vst [vmem:[%s224 + $0x28] sm:$0xff] %v235
                %v237 = vld [vmem:[%s223 + $0xc0] sm:$0xff]
                %238 = vst [vmem:[%s224 + $0x30] sm:$0xff] %v237
                %v239 = vld [vmem:[%s223 + $0xc8] sm:$0xff]
                %240 = vst [vmem:[%s224 + $0x38] sm:$0xff] %v239
              $region41: #{discriminator_forward.7} parent=35 // loop_footer
                %s222 = sadd.s32 1, %s218
              $region42: #{discriminator_forward.7} parent=35 // loop_footer_branch
                %217 = sbr.rel target = $region38
              $region43: #{discriminator_forward.7} parent=35 // loop_exit
                _
            $region36: #{discriminator_forward.7} parent=31 // pred_fallthru
              _
            // Predicated region
            $region44: #{discriminator_forward.7} parent=31 // pred_check
              _
            $region45: #{discriminator_forward.7} parent=31 // pred_check_branch
              %242 = sbr.rel target = $region47
            $region46: #{discriminator_forward.7} parent=31 // pred_region
              _
            $region47: #{discriminator_forward.7} parent=31 // pred_fallthru
              _
          $region32: #{discriminator_forward.7} parent=27 // pred_fallthru
            _
          %243 = vnop
        $region28: #{discriminator_forward.7} parent=23 // pred_fallthru
          _
        // Predicated region
        $region48: #{discriminator_forward.7} parent=23 // pred_check
          %p244 = pneg %p79
        $region49: #{discriminator_forward.7} parent=23 // pred_check_branch
          %246 = sbr.rel (%p244) target = $region51
        $region50: #{discriminator_forward.7} parent=23 // pred_region
          %s247 = smul.u32 64, %s19
          %s248 = smul.u32 2, %s18
          %p249 = scmp.lt.s32.totalorder %s247, 255
          %s250 = scalar_select %p249, %s247, 255
          %p251 = scmp.lt.s32.totalorder %s248, 1
          %s252 = scalar_select %p251, %s248, 1
          %s253 = smul.addr %s250, 2
          %s254 = sadd.s32 %s252, %s253
          %s255 = smul.addr %s254, 4
          %s256 = scalar_lea.vmem %s1, %s255
          %s257 = smul.u32 64, %s19
          %s258 = smul.u32 2, %s18
        $region51: #{discriminator_forward.7} parent=23 // pred_fallthru
          _
      $region24: #{discriminator_forward.7} parent=5 // pred_fallthru
        _
      %p259 = scmp.le.s32.totalorder 1, %s10
      %p260 = scmp.lt.s32.totalorder %s10, 5
      %p261 = pnand %p259, %p260
      %p262 = pneg %p261
      // Predicated region
      $region52: #{discriminator_forward.7} parent=5 // pred_check
        _
      $region53: #{discriminator_forward.7} parent=5 // pred_check_branch
        %264 = sbr.rel (%p261) target = $region55
      $region54: #{discriminator_forward.7} parent=5 // pred_region
        %s265 = ssub.s32 %s10, 1
        %s266 = sand.u32 %s44, 1
        %s267 = sand.u32 %s44, 1
        %s268 = smul.addr %s267, 64
        %s269 = scalar_lea.vmem [#allocation3], %s268
        // Predicated region
        $region56: #{discriminator_forward.7} parent=54 // pred_check
          %p270 = pneg %p57
        $region57: #{discriminator_forward.7} parent=54 // pred_check_branch
          %272 = sbr.rel (%p270) target = $region59
        $region58: #{discriminator_forward.7} parent=54 // pred_region
          _
        $region59: #{discriminator_forward.7} parent=54 // pred_fallthru
          _
        %s273 = sand.u32 %s44, 1
        %s274 = sand.u32 %s44, 1
        %s275 = smul.addr %s274, 64
        %s276 = scalar_lea.vmem [#allocation3], %s275
        %p277 = pneg %p57
        %p278 = pneg %p54
        %s279 = smul.u32 64, %s22
        %s280 = smul.u32 2, %s21
        %p281 = scmp.lt.s32.totalorder %s279, 255
        %s282 = scalar_select %p281, %s279, 255
        %p283 = scmp.lt.s32.totalorder %s280, 1
        %s284 = scalar_select %p283, %s280, 1
        %s285 = smul.addr %s282, 2
        %s286 = sadd.s32 %s284, %s285
        %s287 = smul.addr %s286, 4
        %s288 = scalar_lea.vmem %s1, %s287
        %p289 = pneg %p85
        %p290 = pneg %p82
        %s291 = smul.u32 2, %s21
        %p292 = scmp.lt.s32.totalorder %s291, 1
        %s293 = scalar_select %p292, %s291, 1
        %s294 = scalar_lea.vmem %s2, %s293
        %p295 = pneg %p111
        %p296 = pneg %p108
        %s297 = smul.u32 2, %s21
        %p298 = scmp.lt.s32.totalorder %s297, 1
        %s299 = scalar_select %p298, %s297, 1
        %s300 = scalar_lea.vmem %s3, %s299
        %p301 = pneg %p137
        %p302 = pneg %p134
        %p303 = pneg %p165
        %p304 = pneg %p162
        %s305 = smul.u32 4, %s20
        %s306 = smul.u32 2, %s21
        %p307 = scmp.lt.s32.totalorder %s305, 3
        %s308 = scalar_select %p307, %s305, 3
        %p309 = scmp.lt.s32.totalorder %s306, 1
        %s310 = scalar_select %p309, %s306, 1
        %s311 = smul.addr %s308, 2
        %s312 = sadd.s32 %s310, %s311
        %s313 = smul.addr %s312, 8
        %s314 = scalar_lea.vmem %s4, %s313
        %s315 = smul.u32 4, %s20
        %s316 = smul.u32 4, %s22
        %s317 = smul.u32 64, %s22
        %s318 = smul.u32 2, %s21
        %p319 = scmp.lt.s32.totalorder %s317, 255
        %s320 = scalar_select %p319, %s317, 255
        %p321 = scmp.lt.s32.totalorder %s318, 1
        %s322 = scalar_select %p321, %s318, 1
        %s323 = smul.addr %s320, 2
        %s324 = sadd.s32 %s322, %s323
        %s325 = smul.addr %s324, 4
        %s326 = scalar_lea.vmem %s1, %s325
        %s327 = smul.u32 64, %s22
        %s328 = smul.u32 2, %s21
        %s329 = smul.u32 2, %s21
        %p330 = scmp.lt.s32.totalorder %s329, 1
        %s331 = scalar_select %p330, %s329, 1
        %s332 = scalar_lea.vmem %s2, %s331
        %s333 = smul.u32 2, %s21
        %s334 = smul.u32 2, %s21
        %p335 = scmp.lt.s32.totalorder %s334, 1
        %s336 = scalar_select %p335, %s334, 1
        %s337 = scalar_lea.vmem %s3, %s336
        %s338 = smul.u32 2, %s21
        %s339 = smul.u32 4, %s20
        %s340 = smul.u32 2, %s21
        %p341 = scmp.lt.s32.totalorder %s339, 3
        %s342 = scalar_select %p341, %s339, 3
        %p343 = scmp.lt.s32.totalorder %s340, 1
        %s344 = scalar_select %p343, %s340, 1
        %s345 = smul.addr %s342, 2
        %s346 = sadd.s32 %s344, %s345
        %s347 = smul.addr %s346, 8
        %s348 = scalar_lea.vmem %s4, %s347
        %s349 = smul.u32 4, %s20
        %s350 = smul.u32 2, %s21
        %p351 = scmp.eq.s32.totalorder %s22, 0
        // Predicated region
        $region60: #{discriminator_forward.7} parent=54 // pred_check
          %p352 = pneg %p351
        $region61: #{discriminator_forward.7} parent=54 // pred_check_branch
          %354 = sbr.rel (%p352) target = $region63
        $region62: #{discriminator_forward.7} parent=54 // pred_region
          %355 = vst [vmem:[#allocation2] sm:$0xff] 0.0
          %356 = vst [vmem:[#allocation2 + $0x8] sm:$0xff] 0.0
          %357 = vst [vmem:[#allocation2 + $0x10] sm:$0xff] 0.0
          %358 = vst [vmem:[#allocation2 + $0x18] sm:$0xff] 0.0
          %359 = vst [vmem:[#allocation2 + $0x20] sm:$0xff] 0.0
          %360 = vst [vmem:[#allocation2 + $0x28] sm:$0xff] 0.0
          %361 = vst [vmem:[#allocation2 + $0x30] sm:$0xff] 0.0
          %362 = vst [vmem:[#allocation2 + $0x38] sm:$0xff] 0.0
        $region63: #{discriminator_forward.7} parent=54 // pred_fallthru
          _
        %v363 = vld [vmem:[#allocation2] sm:$0xff]
        %v364 = vld [vmem:[#allocation2 + $0x8] sm:$0xff]
        %v365 = vld [vmem:[#allocation2 + $0x10] sm:$0xff]
        %v366 = vld [vmem:[#allocation2 + $0x18] sm:$0xff]
        %v367 = vld [vmem:[#allocation2 + $0x20] sm:$0xff]
        %v368 = vld [vmem:[#allocation2 + $0x28] sm:$0xff]
        %v369 = vld [vmem:[#allocation2 + $0x30] sm:$0xff]
        %v370 = vld [vmem:[#allocation2 + $0x38] sm:$0xff]
        %v371 = vld [vmem:[%s269] sm:$0xff]
        %v372 = vld [vmem:[%s269 + $0x8] sm:$0xff]
        %v373 = vld [vmem:[%s269 + $0x10] sm:$0xff]
        %v374 = vld [vmem:[%s269 + $0x18] sm:$0xff]
        %v375 = vld [vmem:[%s269 + $0x20] sm:$0xff]
        %v376 = vld [vmem:[%s269 + $0x28] sm:$0xff]
        %v377 = vld [vmem:[%s269 + $0x30] sm:$0xff]
        %v378 = vld [vmem:[%s269 + $0x38] sm:$0xff]
        %v379 = vld [vmem:[%s326] sm:$0xff]
        %v380 = vld [vmem:[%s326 + $0x8] sm:$0xff]
        %v381 = vld [vmem:[%s326 + $0x10] sm:$0xff]
        %v382 = vld [vmem:[%s326 + $0x18] sm:$0xff]
        %v383 = vld [vmem:[%s326 + $0x20] sm:$0xff]
        %v384 = vld [vmem:[%s326 + $0x28] sm:$0xff]
        %v385 = vld [vmem:[%s326 + $0x30] sm:$0xff]
        %v386 = vld [vmem:[%s326 + $0x38] sm:$0xff]
        %v387 = vld [vmem:[%s326 + $0x40] sm:$0xff]
        %v388 = vld [vmem:[%s326 + $0x48] sm:$0xff]
        %v389 = vld [vmem:[%s326 + $0x50] sm:$0xff]
        %v390 = vld [vmem:[%s326 + $0x58] sm:$0xff]
        %v391 = vld [vmem:[%s326 + $0x60] sm:$0xff]
        %v392 = vld [vmem:[%s326 + $0x68] sm:$0xff]
        %v393 = vld [vmem:[%s326 + $0x70] sm:$0xff]
        %v394 = vld [vmem:[%s326 + $0x78] sm:$0xff]
        %v395 = vld [vmem:[%s326 + $0x80] sm:$0xff]
        %v396 = vld [vmem:[%s326 + $0x88] sm:$0xff]
        %v397 = vld [vmem:[%s326 + $0x90] sm:$0xff]
        %v398 = vld [vmem:[%s326 + $0x98] sm:$0xff]
        %v399 = vld [vmem:[%s326 + $0xa0] sm:$0xff]
        %v400 = vld [vmem:[%s326 + $0xa8] sm:$0xff]
        %v401 = vld [vmem:[%s326 + $0xb0] sm:$0xff]
        %v402 = vld [vmem:[%s326 + $0xb8] sm:$0xff]
        %v403 = vld [vmem:[%s326 + $0xc0] sm:$0xff]
        %v404 = vld [vmem:[%s326 + $0xc8] sm:$0xff]
        %v405 = vld [vmem:[%s326 + $0xd0] sm:$0xff]
        %v406 = vld [vmem:[%s326 + $0xd8] sm:$0xff]
        %v407 = vld [vmem:[%s326 + $0xe0] sm:$0xff]
        %v408 = vld [vmem:[%s326 + $0xe8] sm:$0xff]
        %v409 = vld [vmem:[%s326 + $0xf0] sm:$0xff]
        %v410 = vld [vmem:[%s326 + $0xf8] sm:$0xff]
        %v411 = vld [vmem:[%s326 + $0x100] sm:$0xff]
        %v412 = vld [vmem:[%s326 + $0x108] sm:$0xff]
        %v413 = vld [vmem:[%s326 + $0x110] sm:$0xff]
        %v414 = vld [vmem:[%s326 + $0x118] sm:$0xff]
        %v415 = vld [vmem:[%s326 + $0x120] sm:$0xff]
        %v416 = vld [vmem:[%s326 + $0x128] sm:$0xff]
        %v417 = vld [vmem:[%s326 + $0x130] sm:$0xff]
        %v418 = vld [vmem:[%s326 + $0x138] sm:$0xff]
        %v419 = vld [vmem:[%s326 + $0x140] sm:$0xff]
        %v420 = vld [vmem:[%s326 + $0x148] sm:$0xff]
        %v421 = vld [vmem:[%s326 + $0x150] sm:$0xff]
        %v422 = vld [vmem:[%s326 + $0x158] sm:$0xff]
        %v423 = vld [vmem:[%s326 + $0x160] sm:$0xff]
        %v424 = vld [vmem:[%s326 + $0x168] sm:$0xff]
        %v425 = vld [vmem:[%s326 + $0x170] sm:$0xff]
        %v426 = vld [vmem:[%s326 + $0x178] sm:$0xff]
        %v427 = vld [vmem:[%s326 + $0x180] sm:$0xff]
        %v428 = vld [vmem:[%s326 + $0x188] sm:$0xff]
        %v429 = vld [vmem:[%s326 + $0x190] sm:$0xff]
        %v430 = vld [vmem:[%s326 + $0x198] sm:$0xff]
        %v431 = vld [vmem:[%s326 + $0x1a0] sm:$0xff]
        %v432 = vld [vmem:[%s326 + $0x1a8] sm:$0xff]
        %v433 = vld [vmem:[%s326 + $0x1b0] sm:$0xff]
        %v434 = vld [vmem:[%s326 + $0x1b8] sm:$0xff]
        %v435 = vld [vmem:[%s326 + $0x1c0] sm:$0xff]
        %v436 = vld [vmem:[%s326 + $0x1c8] sm:$0xff]
        %v437 = vld [vmem:[%s326 + $0x1d0] sm:$0xff]
        %v438 = vld [vmem:[%s326 + $0x1d8] sm:$0xff]
        %v439 = vld [vmem:[%s326 + $0x1e0] sm:$0xff]
        %v440 = vld [vmem:[%s326 + $0x1e8] sm:$0xff]
        %v441 = vld [vmem:[%s326 + $0x1f0] sm:$0xff]
        %v442 = vld [vmem:[%s326 + $0x1f8] sm:$0xff]
        %v451 = vunpack.c.l.b16 %v371
        %v452 = vunpack.c.h.b16 %v371
        %v453 = vunpack.c.l.b16 %v372
        %v454 = vunpack.c.h.b16 %v372
        %v455 = vunpack.c.l.b16 %v373
        %v456 = vunpack.c.h.b16 %v373
        %v457 = vunpack.c.l.b16 %v374
        %v458 = vunpack.c.h.b16 %v374
        %v459 = vunpack.c.l.b16 %v375
        %v460 = vunpack.c.h.b16 %v375
        %v461 = vunpack.c.l.b16 %v376
        %v462 = vunpack.c.h.b16 %v376
        %v463 = vunpack.c.l.b16 %v377
        %v464 = vunpack.c.h.b16 %v377
        %v465 = vunpack.c.l.b16 %v378
        %v466 = vunpack.c.h.b16 %v378
        %v467 = vpack.c.b16 %v455, %v451
        %v468 = vpack.c.b16 %v456, %v452
        %v469 = vpack.c.b16 %v457, %v453
        %v470 = vpack.c.b16 %v458, %v454
        %v471 = vpack.c.b16 %v463, %v459
        %v472 = vpack.c.b16 %v464, %v460
        %v473 = vpack.c.b16 %v465, %v461
        %v474 = vpack.c.b16 %v466, %v462
        %v547 = vunpack.c.l.b16 %v379
        %v548 = vunpack.c.h.b16 %v379
        %v549 = vunpack.c.l.b16 %v380
        %v550 = vunpack.c.h.b16 %v380
        %v551 = vunpack.c.l.b16 %v381
        %v552 = vunpack.c.h.b16 %v381
        %v553 = vunpack.c.l.b16 %v382
        %v554 = vunpack.c.h.b16 %v382
        %v555 = vunpack.c.l.b16 %v383
        %v556 = vunpack.c.h.b16 %v383
        %v557 = vunpack.c.l.b16 %v384
        %v558 = vunpack.c.h.b16 %v384
        %v559 = vunpack.c.l.b16 %v385
        %v560 = vunpack.c.h.b16 %v385
        %v561 = vunpack.c.l.b16 %v386
        %v562 = vunpack.c.h.b16 %v386
        %v563 = vunpack.c.l.b16 %v387
        %v564 = vunpack.c.h.b16 %v387
        %v565 = vunpack.c.l.b16 %v388
        %v566 = vunpack.c.h.b16 %v388
        %v567 = vunpack.c.l.b16 %v389
        %v568 = vunpack.c.h.b16 %v389
        %v569 = vunpack.c.l.b16 %v390
        %v570 = vunpack.c.h.b16 %v390
        %v571 = vunpack.c.l.b16 %v391
        %v572 = vunpack.c.h.b16 %v391
        %v573 = vunpack.c.l.b16 %v392
        %v574 = vunpack.c.h.b16 %v392
        %v575 = vunpack.c.l.b16 %v393
        %v576 = vunpack.c.h.b16 %v393
        %v577 = vunpack.c.l.b16 %v394
        %v578 = vunpack.c.h.b16 %v394
        %v579 = vunpack.c.l.b16 %v395
        %v580 = vunpack.c.h.b16 %v395
        %v581 = vunpack.c.l.b16 %v396
        %v582 = vunpack.c.h.b16 %v396
        %v583 = vunpack.c.l.b16 %v397
        %v584 = vunpack.c.h.b16 %v397
        %v585 = vunpack.c.l.b16 %v398
        %v586 = vunpack.c.h.b16 %v398
        %v587 = vunpack.c.l.b16 %v399
        %v588 = vunpack.c.h.b16 %v399
        %v589 = vunpack.c.l.b16 %v400
        %v590 = vunpack.c.h.b16 %v400
        %v591 = vunpack.c.l.b16 %v401
        %v592 = vunpack.c.h.b16 %v401
        %v593 = vunpack.c.l.b16 %v402
        %v594 = vunpack.c.h.b16 %v402
        %v595 = vunpack.c.l.b16 %v403
        %v596 = vunpack.c.h.b16 %v403
        %v597 = vunpack.c.l.b16 %v404
        %v598 = vunpack.c.h.b16 %v404
        %v599 = vunpack.c.l.b16 %v405
        %v600 = vunpack.c.h.b16 %v405
        %v601 = vunpack.c.l.b16 %v406
        %v602 = vunpack.c.h.b16 %v406
        %v603 = vunpack.c.l.b16 %v407
        %v604 = vunpack.c.h.b16 %v407
        %v605 = vunpack.c.l.b16 %v408
        %v606 = vunpack.c.h.b16 %v408
        %v607 = vunpack.c.l.b16 %v409
        %v608 = vunpack.c.h.b16 %v409
        %v609 = vunpack.c.l.b16 %v410
        %v610 = vunpack.c.h.b16 %v410
        %v611 = vunpack.c.l.b16 %v411
        %v612 = vunpack.c.h.b16 %v411
        %v613 = vunpack.c.l.b16 %v412
        %v614 = vunpack.c.h.b16 %v412
        %v615 = vunpack.c.l.b16 %v413
        %v616 = vunpack.c.h.b16 %v413
        %v617 = vunpack.c.l.b16 %v414
        %v618 = vunpack.c.h.b16 %v414
        %v619 = vunpack.c.l.b16 %v415
        %v620 = vunpack.c.h.b16 %v415
        %v621 = vunpack.c.l.b16 %v416
        %v622 = vunpack.c.h.b16 %v416
        %v623 = vunpack.c.l.b16 %v417
        %v624 = vunpack.c.h.b16 %v417
        %v625 = vunpack.c.l.b16 %v418
        %v626 = vunpack.c.h.b16 %v418
        %v627 = vunpack.c.l.b16 %v419
        %v628 = vunpack.c.h.b16 %v419
        %v629 = vunpack.c.l.b16 %v420
        %v630 = vunpack.c.h.b16 %v420
        %v631 = vunpack.c.l.b16 %v421
        %v632 = vunpack.c.h.b16 %v421
        %v633 = vunpack.c.l.b16 %v422
        %v634 = vunpack.c.h.b16 %v422
        %v635 = vunpack.c.l.b16 %v423
        %v636 = vunpack.c.h.b16 %v423
        %v637 = vunpack.c.l.b16 %v424
        %v638 = vunpack.c.h.b16 %v424
        %v639 = vunpack.c.l.b16 %v425
        %v640 = vunpack.c.h.b16 %v425
        %v641 = vunpack.c.l.b16 %v426
        %v642 = vunpack.c.h.b16 %v426
        %v643 = vunpack.c.l.b16 %v427
        %v644 = vunpack.c.h.b16 %v427
        %v645 = vunpack.c.l.b16 %v428
        %v646 = vunpack.c.h.b16 %v428
        %v647 = vunpack.c.l.b16 %v429
        %v648 = vunpack.c.h.b16 %v429
        %v649 = vunpack.c.l.b16 %v430
        %v650 = vunpack.c.h.b16 %v430
        %v651 = vunpack.c.l.b16 %v431
        %v652 = vunpack.c.h.b16 %v431
        %v653 = vunpack.c.l.b16 %v432
        %v654 = vunpack.c.h.b16 %v432
        %v655 = vunpack.c.l.b16 %v433
        %v656 = vunpack.c.h.b16 %v433
        %v657 = vunpack.c.l.b16 %v434
        %v658 = vunpack.c.h.b16 %v434
        %v659 = vunpack.c.l.b16 %v435
        %v660 = vunpack.c.h.b16 %v435
        %v661 = vunpack.c.l.b16 %v436
        %v662 = vunpack.c.h.b16 %v436
        %v663 = vunpack.c.l.b16 %v437
        %v664 = vunpack.c.h.b16 %v437
        %v665 = vunpack.c.l.b16 %v438
        %v666 = vunpack.c.h.b16 %v438
        %v667 = vunpack.c.l.b16 %v439
        %v668 = vunpack.c.h.b16 %v439
        %v669 = vunpack.c.l.b16 %v440
        %v670 = vunpack.c.h.b16 %v440
        %v671 = vunpack.c.l.b16 %v441
        %v672 = vunpack.c.h.b16 %v441
        %v673 = vunpack.c.l.b16 %v442
        %v674 = vunpack.c.h.b16 %v442
        %v675 = vpack.c.b16 %v549, %v547
        %v676 = vpack.c.b16 %v550, %v548
        %v677 = vpack.c.b16 %v553, %v551
        %v678 = vpack.c.b16 %v554, %v552
        %v679 = vpack.c.b16 %v557, %v555
        %v680 = vpack.c.b16 %v558, %v556
        %v681 = vpack.c.b16 %v561, %v559
        %v682 = vpack.c.b16 %v562, %v560
        %v683 = vpack.c.b16 %v565, %v563
        %v684 = vpack.c.b16 %v566, %v564
        %v685 = vpack.c.b16 %v569, %v567
        %v686 = vpack.c.b16 %v570, %v568
        %v687 = vpack.c.b16 %v573, %v571
        %v688 = vpack.c.b16 %v574, %v572
        %v689 = vpack.c.b16 %v577, %v575
        %v690 = vpack.c.b16 %v578, %v576
        %v691 = vpack.c.b16 %v581, %v579
        %v692 = vpack.c.b16 %v582, %v580
        %v693 = vpack.c.b16 %v585, %v583
        %v694 = vpack.c.b16 %v586, %v584
        %v695 = vpack.c.b16 %v589, %v587
        %v696 = vpack.c.b16 %v590, %v588
        %v697 = vpack.c.b16 %v593, %v591
        %v698 = vpack.c.b16 %v594, %v592
        %v699 = vpack.c.b16 %v597, %v595
        %v700 = vpack.c.b16 %v598, %v596
        %v701 = vpack.c.b16 %v601, %v599
        %v702 = vpack.c.b16 %v602, %v600
        %v703 = vpack.c.b16 %v605, %v603
        %v704 = vpack.c.b16 %v606, %v604
        %v705 = vpack.c.b16 %v609, %v607
        %v706 = vpack.c.b16 %v610, %v608
        %v707 = vpack.c.b16 %v613, %v611
        %v708 = vpack.c.b16 %v614, %v612
        %v709 = vpack.c.b16 %v617, %v615
        %v710 = vpack.c.b16 %v618, %v616
        %v711 = vpack.c.b16 %v621, %v619
        %v712 = vpack.c.b16 %v622, %v620
        %v713 = vpack.c.b16 %v625, %v623
        %v714 = vpack.c.b16 %v626, %v624
        %v715 = vpack.c.b16 %v629, %v627
        %v716 = vpack.c.b16 %v630, %v628
        %v717 = vpack.c.b16 %v633, %v631
        %v718 = vpack.c.b16 %v634, %v632
        %v719 = vpack.c.b16 %v637, %v635
        %v720 = vpack.c.b16 %v638, %v636
        %v721 = vpack.c.b16 %v641, %v639
        %v722 = vpack.c.b16 %v642, %v640
        %v723 = vpack.c.b16 %v645, %v643
        %v724 = vpack.c.b16 %v646, %v644
        %v725 = vpack.c.b16 %v649, %v647
        %v726 = vpack.c.b16 %v650, %v648
        %v727 = vpack.c.b16 %v653, %v651
        %v728 = vpack.c.b16 %v654, %v652
        %v729 = vpack.c.b16 %v657, %v655
        %v730 = vpack.c.b16 %v658, %v656
        %v731 = vpack.c.b16 %v661, %v659
        %v732 = vpack.c.b16 %v662, %v660
        %v733 = vpack.c.b16 %v665, %v663
        %v734 = vpack.c.b16 %v666, %v664
        %v735 = vpack.c.b16 %v669, %v667
        %v736 = vpack.c.b16 %v670, %v668
        %v737 = vpack.c.b16 %v673, %v671
        %v738 = vpack.c.b16 %v674, %v672
        %803 = vmatprep.subr.bf16.mxu0 %v676
        %804 = vmatpush1.bf16.msra.mxu0 %v675
        %805 = vmatprep.subr.bf16.mxu0 %v678
        %806 = vmatpush1.bf16.msra.mxu0 %v677
        %807 = vmatprep.subr.bf16.mxu0 %v680
        %808 = vmatpush1.bf16.msra.mxu0 %v679
        %809 = vmatprep.subr.bf16.mxu0 %v682
        %810 = vmatpush1.bf16.msra.mxu0 %v681
        %811 = vmatprep.subr.bf16.mxu0 %v684
        %812 = vmatpush1.bf16.msra.mxu0 %v683
        %813 = vmatprep.subr.bf16.mxu0 %v686
        %814 = vmatpush1.bf16.msra.mxu0 %v685
        %815 = vmatprep.subr.bf16.mxu0 %v688
        %816 = vmatpush1.bf16.msra.mxu0 %v687
        %817 = vmatprep.subr.bf16.mxu0 %v690
        %818 = vmatpush1.bf16.msra.mxu0 %v689
        %819 = vmatprep.subr.bf16.mxu0 %v692
        %820 = vmatpush1.bf16.msra.mxu0 %v691
        %821 = vmatprep.subr.bf16.mxu0 %v694
        %822 = vmatpush1.bf16.msra.mxu0 %v693
        %823 = vmatprep.subr.bf16.mxu0 %v696
        %824 = vmatpush1.bf16.msra.mxu0 %v695
        %825 = vmatprep.subr.bf16.mxu0 %v698
        %826 = vmatpush1.bf16.msra.mxu0 %v697
        %827 = vmatprep.subr.bf16.mxu0 %v700
        %828 = vmatpush1.bf16.msra.mxu0 %v699
        %829 = vmatprep.subr.bf16.mxu0 %v702
        %830 = vmatpush1.bf16.msra.mxu0 %v701
        %831 = vmatprep.subr.bf16.mxu0 %v704
        %832 = vmatpush1.bf16.msra.mxu0 %v703
        %833 = vmatprep.subr.bf16.mxu0 %v706
        %834 = vmatpush1.bf16.msra.mxu0 %v705
        %835 = vmatprep.mubr.bf16.mxu0 %v468
        %836 = vmatmul.mubr.bf16.gmra.mrb[0].mxu0 %v467
        %v837 = vpop.f32.mrb[0].mxu0
        %v838 = vadd.f32 0.0, %v837
        %v839 = vpop.f32.mrb[0].mxu0
        %v840 = vadd.f32 0.0, %v839
        %v841 = vpop.f32.mrb[0].mxu0
        %v842 = vadd.f32 0.0, %v841
        %v843 = vpop.f32.mrb[0].mxu0
        %v844 = vadd.f32 0.0, %v843
        %845 = vmatprep.mubr.bf16.mxu0 %v472
        %846 = vmatmul.mubr.bf16.gmra.mrb[0].mxu0 %v471
        %v847 = vpop.f32.mrb[0].mxu0
        %v848 = vadd.f32 0.0, %v847
        %v849 = vpop.f32.mrb[0].mxu0
        %v850 = vadd.f32 0.0, %v849
        %v851 = vpop.f32.mrb[0].mxu0
        %v852 = vadd.f32 0.0, %v851
        %v853 = vpop.f32.mrb[0].mxu0
        %v854 = vadd.f32 0.0, %v853
        %855 = vdwg.mxu0
        %856 = vmatprep.subr.bf16.mxu0 %v708
        %857 = vmatpush1.bf16.msra.mxu0 %v707
        %858 = vmatprep.subr.bf16.mxu0 %v710
        %859 = vmatpush1.bf16.msra.mxu0 %v709
        %860 = vmatprep.subr.bf16.mxu0 %v712
        %861 = vmatpush1.bf16.msra.mxu0 %v711
        %862 = vmatprep.subr.bf16.mxu0 %v714
        %863 = vmatpush1.bf16.msra.mxu0 %v713
        %864 = vmatprep.subr.bf16.mxu0 %v716
        %865 = vmatpush1.bf16.msra.mxu0 %v715
        %866 = vmatprep.subr.bf16.mxu0 %v718
        %867 = vmatpush1.bf16.msra.mxu0 %v717
        %868 = vmatprep.subr.bf16.mxu0 %v720
        %869 = vmatpush1.bf16.msra.mxu0 %v719
        %870 = vmatprep.subr.bf16.mxu0 %v722
        %871 = vmatpush1.bf16.msra.mxu0 %v721
        %872 = vmatprep.subr.bf16.mxu0 %v724
        %873 = vmatpush1.bf16.msra.mxu0 %v723
        %874 = vmatprep.subr.bf16.mxu0 %v726
        %875 = vmatpush1.bf16.msra.mxu0 %v725
        %876 = vmatprep.subr.bf16.mxu0 %v728
        %877 = vmatpush1.bf16.msra.mxu0 %v727
        %878 = vmatprep.subr.bf16.mxu0 %v730
        %879 = vmatpush1.bf16.msra.mxu0 %v729
        %880 = vmatprep.subr.bf16.mxu0 %v732
        %881 = vmatpush1.bf16.msra.mxu0 %v731
        %882 = vmatprep.subr.bf16.mxu0 %v734
        %883 = vmatpush1.bf16.msra.mxu0 %v733
        %884 = vmatprep.subr.bf16.mxu0 %v736
        %885 = vmatpush1.bf16.msra.mxu0 %v735
        %886 = vmatprep.subr.bf16.mxu0 %v738
        %887 = vmatpush1.bf16.msra.mxu0 %v737
        %888 = vmatprep.mubr.bf16.mxu0 %v470
        %889 = vmatmul.mubr.bf16.gmra.mrb[0].mxu0 %v469
        %v890 = vpop.f32.mrb[0].mxu0
        %v891 = vadd.f32 %v838, %v890
        %v892 = vpop.f32.mrb[0].mxu0
        %v893 = vadd.f32 %v840, %v892
        %v894 = vpop.f32.mrb[0].mxu0
        %v895 = vadd.f32 %v842, %v894
        %v896 = vpop.f32.mrb[0].mxu0
        %v897 = vadd.f32 %v844, %v896
        %898 = vmatprep.mubr.bf16.mxu0 %v474
        %899 = vmatmul.mubr.bf16.gmra.mrb[0].mxu0 %v473
        %v900 = vpop.f32.mrb[0].mxu0
        %v901 = vadd.f32 %v848, %v900
        %v902 = vpop.f32.mrb[0].mxu0
        %v903 = vadd.f32 %v850, %v902
        %v904 = vpop.f32.mrb[0].mxu0
        %v905 = vadd.f32 %v852, %v904
        %v906 = vpop.f32.mrb[0].mxu0
        %v907 = vadd.f32 %v854, %v906
        %908 = vdwg.mxu0
        %v909 = vadd.f32 %v363, %v891
        %v910 = vadd.f32 %v364, %v893
        %v911 = vadd.f32 %v365, %v895
        %v912 = vadd.f32 %v366, %v897
        %v913 = vadd.f32 %v367, %v901
        %v914 = vadd.f32 %v368, %v903
        %v915 = vadd.f32 %v369, %v905
        %v916 = vadd.f32 %v370, %v907
        %917 = vst [vmem:[#allocation2] sm:$0xff] %v909
        %918 = vst [vmem:[#allocation2 + $0x8] sm:$0xff] %v910
        %919 = vst [vmem:[#allocation2 + $0x10] sm:$0xff] %v911
        %920 = vst [vmem:[#allocation2 + $0x18] sm:$0xff] %v912
        %921 = vst [vmem:[#allocation2 + $0x20] sm:$0xff] %v913
        %922 = vst [vmem:[#allocation2 + $0x28] sm:$0xff] %v914
        %923 = vst [vmem:[#allocation2 + $0x30] sm:$0xff] %v915
        %924 = vst [vmem:[#allocation2 + $0x38] sm:$0xff] %v916
        %p925 = scmp.eq.s32.totalorder %s22, 3
        // Predicated region
        $region64: #{discriminator_forward.7} parent=54 // pred_check
          %p926 = pneg %p925
        $region65: #{discriminator_forward.7} parent=54 // pred_check_branch
          %928 = sbr.rel (%p926) target = $region67
        $region66: #{discriminator_forward.7} parent=54 // pred_region
          %v929 = vld [vmem:[#allocation2] sm:$0xff]
          %v930 = vld [vmem:[#allocation2 + $0x8] sm:$0xff]
          %v931 = vld [vmem:[#allocation2 + $0x10] sm:$0xff]
          %v932 = vld [vmem:[#allocation2 + $0x18] sm:$0xff]
          %v933 = vld [vmem:[#allocation2 + $0x20] sm:$0xff]
          %v934 = vld [vmem:[#allocation2 + $0x28] sm:$0xff]
          %v935 = vld [vmem:[#allocation2 + $0x30] sm:$0xff]
          %v936 = vld [vmem:[#allocation2 + $0x38] sm:$0xff]
          %v937 = vlaneseq
          %v938 = vshrl.u32 %v937, 7
          %v939 = vadd.s32 %v938, 8
          %v940 = vadd.s32 %v938, 16
          %v941 = vadd.s32 %v938, 24
          %vm942 = vcmp.lt.s32.totalorder %v938, 32
          %vm943 = vcmp.lt.s32.totalorder %v939, 32
          %vm944 = vcmp.lt.s32.totalorder %v940, 32
          %vm945 = vcmp.lt.s32.totalorder %v941, 32
          %v946 = vsel %vm942, 1, 0
          %v947 = vsel %vm943, 1, 0
          %v948 = vsel %vm944, 1, 0
          %v949 = vsel %vm945, 1, 0
          %vm950 = vcmp.eq.s32.totalorder %v946, 1
          %vm951 = vcmp.eq.s32.totalorder %v947, 1
          %vm952 = vcmp.eq.s32.totalorder %v948, 1
          %vm953 = vcmp.eq.s32.totalorder %v949, 1
          %v954 = vsel %vm950, %v929, 0.0
          %v955 = vsel %vm950, %v930, 0.0
          %v956 = vsel %vm951, %v931, 0.0
          %v957 = vsel %vm951, %v932, 0.0
          %v958 = vsel %vm952, %v933, 0.0
          %v959 = vsel %vm952, %v934, 0.0
          %v960 = vsel %vm953, %v935, 0.0
          %v961 = vsel %vm953, %v936, 0.0
          %v962 = vadd.f32 %v954, %v956
          %v963 = vadd.f32 %v962, %v958
          %v964 = vadd.f32 %v963, %v960
          %v965 = vrot.slane %v964, 4
          %v966 = vadd.f32 %v964, %v965
          %v967 = vrot.slane %v966, 2
          %v968 = vadd.f32 %v966, %v967
          %v969 = vrot.slane %v968, 1
          %v970 = vadd.f32 %v968, %v969
          %v971 = vadd.f32 %v955, %v957
          %v972 = vadd.f32 %v971, %v959
          %v973 = vadd.f32 %v972, %v961
          %v974 = vrot.slane %v973, 4
          %v975 = vadd.f32 %v973, %v974
          %v976 = vrot.slane %v975, 2
          %v977 = vadd.f32 %v975, %v976
          %v978 = vrot.slane %v977, 1
          %v979 = vadd.f32 %v977, %v978
          %v980 = vmul.f32 %v970, 0.03125
          %v981 = vmul.f32 %v979, 0.03125
          %v982 = vsub.f32 %v929, %v980
          %v983 = vsub.f32 %v930, %v981
          %v984 = vsub.f32 %v931, %v980
          %v985 = vsub.f32 %v932, %v981
          %v986 = vsub.f32 %v933, %v980
          %v987 = vsub.f32 %v934, %v981
          %v988 = vsub.f32 %v935, %v980
          %v989 = vsub.f32 %v936, %v981
          %v990 = vmul.f32 %v982, %v982
          %v991 = vmul.f32 %v983, %v983
          %v992 = vmul.f32 %v984, %v984
          %v993 = vmul.f32 %v985, %v985
          %v994 = vmul.f32 %v986, %v986
          %v995 = vmul.f32 %v987, %v987
          %v996 = vmul.f32 %v988, %v988
          %v997 = vmul.f32 %v989, %v989
          %v998 = vsel %vm950, %v990, 0.0
          %v999 = vsel %vm950, %v991, 0.0
          %v1000 = vsel %vm951, %v992, 0.0
          %v1001 = vsel %vm951, %v993, 0.0
          %v1002 = vsel %vm952, %v994, 0.0
          %v1003 = vsel %vm952, %v995, 0.0
          %v1004 = vsel %vm953, %v996, 0.0
          %v1005 = vsel %vm953, %v997, 0.0
          %v1006 = vadd.f32 %v998, %v1000
          %v1007 = vadd.f32 %v1006, %v1002
          %v1008 = vadd.f32 %v1007, %v1004
          %v1009 = vrot.slane %v1008, 4
          %v1010 = vadd.f32 %v1008, %v1009
          %v1011 = vrot.slane %v1010, 2
          %v1012 = vadd.f32 %v1010, %v1011
          %v1013 = vrot.slane %v1012, 1
          %v1014 = vadd.f32 %v1012, %v1013
          %v1015 = vadd.f32 %v999, %v1001
          %v1016 = vadd.f32 %v1015, %v1003
          %v1017 = vadd.f32 %v1016, %v1005
          %v1018 = vrot.slane %v1017, 4
          %v1019 = vadd.f32 %v1017, %v1018
          %v1020 = vrot.slane %v1019, 2
          %v1021 = vadd.f32 %v1019, %v1020
          %v1022 = vrot.slane %v1021, 1
          %v1023 = vadd.f32 %v1021, %v1022
          %v1024 = vmul.f32 %v1014, 0.03125
          %v1025 = vmul.f32 %v1023, 0.03125
          %v1026 = vadd.f32 %v1024, 1e-05
          %v1027 = vadd.f32 %v1025, 1e-05
          %v1028 = vrsqrt.pop %v1026
          %v1029 = vrsqrt.pop %v1027
          %v1030 = vmul.f32 %v982, %v1028
          %v1031 = vmul.f32 %v983, %v1029
          %v1032 = vmul.f32 %v984, %v1028
          %v1033 = vmul.f32 %v985, %v1029
          %v1034 = vmul.f32 %v986, %v1028
          %v1035 = vmul.f32 %v987, %v1029
          %v1036 = vmul.f32 %v988, %v1028
          %v1037 = vmul.f32 %v989, %v1029
          %v1038 = vld [vmem:[%s332] sm:$0x3]
          %v1040 = vlaneseq
          %v1041 = vshrl.u32 %v1040, 7
          %v1042 = vsub.s32 0, %v1041
          %v1043 = vrot.slane %v1038, %v1042
          %v1044 = vlaneseq
          %v1045 = vshrl.u32 %v1044, 7
          %v1046 = vsub.s32 1, %v1045
          %v1047 = vrot.slane %v1038, %v1046
          %v1050 = vmul.f32 %v1030, %v1043
          %v1051 = vmul.f32 %v1031, %v1047
          %v1052 = vmul.f32 %v1032, %v1043
          %v1053 = vmul.f32 %v1033, %v1047
          %v1054 = vmul.f32 %v1034, %v1043
          %v1055 = vmul.f32 %v1035, %v1047
          %v1056 = vmul.f32 %v1036, %v1043
          %v1057 = vmul.f32 %v1037, %v1047
          %v1058 = vld [vmem:[%s337] sm:$0x3]
          %v1060 = vlaneseq
          %v1061 = vshrl.u32 %v1060, 7
          %v1062 = vsub.s32 0, %v1061
          %v1063 = vrot.slane %v1058, %v1062
          %v1064 = vlaneseq
          %v1065 = vshrl.u32 %v1064, 7
          %v1066 = vsub.s32 1, %v1065
          %v1067 = vrot.slane %v1058, %v1066
          %v1070 = vadd.f32 %v1050, %v1063
          %v1071 = vadd.f32 %v1051, %v1067
          %v1072 = vadd.f32 %v1052, %v1063
          %v1073 = vadd.f32 %v1053, %v1067
          %v1074 = vadd.f32 %v1054, %v1063
          %v1075 = vadd.f32 %v1055, %v1067
          %v1076 = vadd.f32 %v1056, %v1063
          %v1077 = vadd.f32 %v1057, %v1067
          %vm1078 = vcmp.ge.f32.partialorder %v1070, 0.0
          %vm1079 = vcmp.ge.f32.partialorder %v1071, 0.0
          %vm1080 = vcmp.ge.f32.partialorder %v1072, 0.0
          %vm1081 = vcmp.ge.f32.partialorder %v1073, 0.0
          %vm1082 = vcmp.ge.f32.partialorder %v1074, 0.0
          %vm1083 = vcmp.ge.f32.partialorder %v1075, 0.0
          %vm1084 = vcmp.ge.f32.partialorder %v1076, 0.0
          %vm1085 = vcmp.ge.f32.partialorder %v1077, 0.0
          %v1086 = vmul.f32 %v1070, 0.2
          %v1087 = vmul.f32 %v1071, 0.2
          %v1088 = vmul.f32 %v1072, 0.2
          %v1089 = vmul.f32 %v1073, 0.2
          %v1090 = vmul.f32 %v1074, 0.2
          %v1091 = vmul.f32 %v1075, 0.2
          %v1092 = vmul.f32 %v1076, 0.2
          %v1093 = vmul.f32 %v1077, 0.2
          %v1094 = vsel %vm1078, %v1070, %v1086
          %v1095 = vsel %vm1079, %v1071, %v1087
          %v1096 = vsel %vm1080, %v1072, %v1088
          %v1097 = vsel %vm1081, %v1073, %v1089
          %v1098 = vsel %vm1082, %v1074, %v1090
          %v1099 = vsel %vm1083, %v1075, %v1091
          %v1100 = vsel %vm1084, %v1076, %v1092
          %v1101 = vsel %vm1085, %v1077, %v1093
          %1102 = vst [vmem:[%s348] sm:$0xff] %v1094
          %1103 = vst [vmem:[%s348 + $0x8] sm:$0xff] %v1095
          %1104 = vst [vmem:[%s348 + $0x10] sm:$0xff] %v1096
          %1105 = vst [vmem:[%s348 + $0x18] sm:$0xff] %v1097
          %1106 = vst [vmem:[%s348 + $0x20] sm:$0xff] %v1098
          %1107 = vst [vmem:[%s348 + $0x28] sm:$0xff] %v1099
          %1108 = vst [vmem:[%s348 + $0x30] sm:$0xff] %v1100
          %1109 = vst [vmem:[%s348 + $0x38] sm:$0xff] %v1101
        $region67: #{discriminator_forward.7} parent=54 // pred_fallthru
          _
        %s1110 = smul.u32 4, %s20
        %s1111 = smul.u32 2, %s21
        %p1112 = scmp.lt.s32.totalorder %s1110, 3
        %s1113 = scalar_select %p1112, %s1110, 3
        %p1114 = scmp.lt.s32.totalorder %s1111, 1
        %s1115 = scalar_select %p1114, %s1111, 1
        %s1116 = smul.addr %s1113, 2
        %s1117 = sadd.s32 %s1115, %s1116
        %s1118 = smul.addr %s1117, 8
        %s1119 = scalar_lea.vmem %s4, %s1118
        // Predicated region
        $region68: #{discriminator_forward.7} parent=54 // pred_check
          %p1120 = pneg %p162
        $region69: #{discriminator_forward.7} parent=54 // pred_check_branch
          %1122 = sbr.rel (%p1120) target = $region71
        $region70: #{discriminator_forward.7} parent=54 // pred_region
          %s1123 = smul.u32 4, %s20
          %s1124 = smul.u32 2, %s21
        $region71: #{discriminator_forward.7} parent=54 // pred_fallthru
          _
        // Predicated region
        $region72: #{discriminator_forward.7} parent=54 // pred_check
          %p1125 = pneg %p162
        $region73: #{discriminator_forward.7} parent=54 // pred_check_branch
          %1127 = sbr.rel (%p1125) target = $region75
        $region74: #{discriminator_forward.7} parent=54 // pred_region
          %s1128 = smul.u32 4, %s20
          %s1129 = smul.u32 2, %s21
          %p1130 = scmp.lt.s32.totalorder %s1128, 3
          %s1131 = scalar_select %p1130, %s1128, 3
          %p1132 = scmp.lt.s32.totalorder %s1129, 1
          %s1133 = scalar_select %p1132, %s1129, 1
          %s1134 = smul.addr %s1131, 2
          %s1135 = sadd.s32 %s1133, %s1134
          %s1136 = smul.addr %s1135, 8
          %s1137 = scalar_lea.vmem %s4, %s1136
        $region75: #{discriminator_forward.7} parent=54 // pred_fallthru
          _
      $region55: #{discriminator_forward.7} parent=5 // pred_fallthru
        _
      %p1138 = scmp.le.s32.totalorder 2, %s10
      // Predicated region
      $region76: #{discriminator_forward.7} parent=5 // pred_check
        %p1139 = pneg %p1138
      $region77: #{discriminator_forward.7} parent=5 // pred_check_branch
        %1141 = sbr.rel (%p1139) target = $region79
      $region78: #{discriminator_forward.7} parent=5 // pred_region
        %s1142 = ssub.s32 %s10, 2
      $region79: #{discriminator_forward.7} parent=5 // pred_fallthru
        _
    $region6: #{discriminator_forward.7} parent=1 // loop_footer
      %s14 = sadd.s32 1, %s10
    $region7: #{discriminator_forward.7} parent=1 // loop_footer_branch
      %9 = sbr.rel target = $region3
    $region8: #{discriminator_forward.7} parent=1 // loop_exit
      _

// kernel: discriminator_forward.8
$region0: #{discriminator_forward.8}
  #allocation0 [shape = 'u32[]', space=smem, size = 0x4, offset = 0x4, fixed_abs, tag = 'smem constant byte address 0x4 - core index']
  #allocation1 [shape = 'u32[144,128]{1,0:T(1,128)}', space=vmem, size = 0x12000, scoped, tag = 'internal scratch']
  #allocation2 [shape = 'f32[24,256]{1,0:T(8,128)}', space=vmem, size = 0x6000, scoped, tag = 'scratch operand']
  %s0 = inlined_call_operand.vmem [shape: bf16[24,4096], index: 0, kind: input, shape index: {}]
  %s1 = inlined_call_operand.vmem [shape: bf16[4096,512], index: 1, kind: input, shape index: {}]
  %s2 = inlined_call_operand.vmem [shape: f32[1,512], index: 2, kind: input, shape index: {}]
  %s3 = inlined_call_operand.vmem [shape: f32[1,512], index: 3, kind: input, shape index: {}]
  %s4 = inlined_call_operand.vmem [shape: f32[24,512], index: 4, kind: output, shape index: {}]
  %s5 = sld [smem:[#allocation0]]
  $region137: #{discriminator_forward.8} parent=0
    _
  %s7 = ssub.s32 1, %s5
  %s8 = scalar_select 0, %s7, %s5
  $region1: #{discriminator_forward.8} parent=0
    #allocation3 [shape = 'u8[49152]{0}', space=vmem, size = 0xc000, scoped, tag = 'input window, operand 0']
    #allocation4 [shape = 'u8[524288]{0}', space=vmem, size = 0x80000, scoped, tag = 'input window, operand 1']
    #allocation5 [shape = 'u8[49152]{0}', space=vmem, size = 0xc000, scoped, tag = 'output window, operand 0']
    loop: start=0, step=1, limit=18
    $region2: #{discriminator_forward.8} parent=1 // loop_pre_header
      _
    $region3: #{discriminator_forward.8} parent=1 // loop_header
      %s10 = sphi 0, %s14
      %p11 = scmp.ge.s32.totalorder %s10, 18
      %s17 = sphi 0, %s36
      %s18 = sphi 0, %s32
      %s19 = sphi 0, %s28
      %s20 = sphi 0, %s17
      %s21 = sphi 0, %s18
      %s22 = sphi 0, %s19
      %s23 = sphi 0, %s20
      %s24 = sphi 0, %s21
      %s25 = sphi 0, %s22
      %s41 = sphi 0, %s43
      %s44 = sphi 0, %s41
      %s45 = sphi 0, %s44
      %s61 = sphi 0, %s45
      %s69 = sphi 0, %s71
      %s72 = sphi 0, %s69
      %s73 = sphi 0, %s72
      %s89 = sphi 0, %s73
      %s95 = sphi 0, %s97
      %s98 = sphi 0, %s95
      %s99 = sphi 0, %s98
      %s115 = sphi 0, %s99
      %s121 = sphi 0, %s123
      %s124 = sphi 0, %s121
      %s125 = sphi 0, %s124
      %s141 = sphi 0, %s125
      %s149 = sphi 0, %s151
      %s152 = sphi 0, %s149
      %s153 = sphi 0, %s152
      %s169 = sphi 0, %s153
    $region4: #{discriminator_forward.8} parent=1 // loop_header_branch
      %13 = sbr.rel (%p11) target = $region8
    $region5: #{discriminator_forward.8} parent=1 // loop_body
      %s15 = ssub.s32 %s10, 1
      %s16 = ssub.s32 %s10, 2
      %s26 = sadd.s32 1, %s19
      %p27 = scmp.ge.s32.totalorder %s26, 8
      %s28 = scalar_select %p27, 0, %s26
      %s29 = sadd.s32 1, %s18
      %s30 = scalar_select %p27, %s29, %s18
      %p31 = scmp.ge.s32.totalorder %s30, 2
      %s32 = scalar_select %p31, 0, %s30
      %s33 = sadd.s32 1, %s17
      %s34 = scalar_select %p31, %s33, %s17
      %p35 = scmp.ge.s32.totalorder %s34, 1
      %s36 = scalar_select %p35, 0, %s34
      %s37 = ssub.s32 %s17, %s36
      %s38 = ssub.s32 %s19, %s28
      %s39 = sor.u32 %s37, %s38
      %p40 = scmp.eq.s32.totalorder %s39, 0
      %s42 = sadd.s32 %s41, 1
      %s43 = scalar_select %p40, %s41, %s42
      %p46 = pneg %p40
      %p47 = scmp.eq.s32.totalorder %s10, 15
      %p48 = por %p46, %p47
      %p49 = scmp.ne.s32.totalorder %s41, %s44
      %p50 = scmp.eq.s32.totalorder %s10, 0
      %p51 = por %p49, %p50
      %p52 = scmp.ne.s32.totalorder %s41, %s44
      %p53 = scmp.eq.s32.totalorder %s15, 15
      %p54 = por %p52, %p53
      %p55 = scmp.ne.s32.totalorder %s44, %s45
      %p56 = scmp.eq.s32.totalorder %s15, 0
      %p57 = por %p55, %p56
      %p58 = scmp.ne.s32.totalorder %s44, %s45
      %p59 = scmp.eq.s32.totalorder %s16, 15
      %p60 = por %p58, %p59
      %p62 = scmp.ne.s32.totalorder %s45, %s61
      %p63 = scmp.eq.s32.totalorder %s16, 0
      %p64 = por %p62, %p63
      %s65 = ssub.s32 %s19, %s28
      %s66 = ssub.s32 %s18, %s32
      %s67 = sor.u32 %s65, %s66
      %p68 = scmp.eq.s32.totalorder %s67, 0
      %s70 = sadd.s32 %s69, 1
      %s71 = scalar_select %p68, %s69, %s70
      %p74 = pneg %p68
      %p75 = scmp.eq.s32.totalorder %s10, 15
      %p76 = por %p74, %p75
      %p77 = scmp.ne.s32.totalorder %s69, %s72
      %p78 = scmp.eq.s32.totalorder %s10, 0
      %p79 = por %p77, %p78
      %p80 = scmp.ne.s32.totalorder %s69, %s72
      %p81 = scmp.eq.s32.totalorder %s15, 15
      %p82 = por %p80, %p81
      %p83 = scmp.ne.s32.totalorder %s72, %s73
      %p84 = scmp.eq.s32.totalorder %s15, 0
      %p85 = por %p83, %p84
      %p86 = scmp.ne.s32.totalorder %s72, %s73
      %p87 = scmp.eq.s32.totalorder %s16, 15
      %p88 = por %p86, %p87
      %p90 = scmp.ne.s32.totalorder %s73, %s89
      %p91 = scmp.eq.s32.totalorder %s16, 0
      %p92 = por %p90, %p91
      %s93 = ssub.s32 %s18, %s32
      %p94 = scmp.eq.s32.totalorder %s93, 0
      %s96 = sadd.s32 %s95, 1
      %s97 = scalar_select %p94, %s95, %s96
      %p100 = pneg %p94
      %p101 = scmp.eq.s32.totalorder %s10, 15
      %p102 = por %p100, %p101
      %p103 = scmp.ne.s32.totalorder %s95, %s98
      %p104 = scmp.eq.s32.totalorder %s10, 0
      %p105 = por %p103, %p104
      %p106 = scmp.ne.s32.totalorder %s95, %s98
      %p107 = scmp.eq.s32.totalorder %s15, 15
      %p108 = por %p106, %p107
      %p109 = scmp.ne.s32.totalorder %s98, %s99
      %p110 = scmp.eq.s32.totalorder %s15, 0
      %p111 = por %p109, %p110
      %p112 = scmp.ne.s32.totalorder %s98, %s99
      %p113 = scmp.eq.s32.totalorder %s16, 15
      %p114 = por %p112, %p113
      %p116 = scmp.ne.s32.totalorder %s99, %s115
      %p117 = scmp.eq.s32.totalorder %s16, 0
      %p118 = por %p116, %p117
      %s119 = ssub.s32 %s18, %s32
      %p120 = scmp.eq.s32.totalorder %s119, 0
      %s122 = sadd.s32 %s121, 1
      %s123 = scalar_select %p120, %s121, %s122
      %p126 = pneg %p120
      %p127 = scmp.eq.s32.totalorder %s10, 15
      %p128 = por %p126, %p127
      %p129 = scmp.ne.s32.totalorder %s121, %s124
      %p130 = scmp.eq.s32.totalorder %s10, 0
      %p131 = por %p129, %p130
      %p132 = scmp.ne.s32.totalorder %s121, %s124
      %p133 = scmp.eq.s32.totalorder %s15, 15
      %p134 = por %p132, %p133
      %p135 = scmp.ne.s32.totalorder %s124, %s125
      %p136 = scmp.eq.s32.totalorder %s15, 0
      %p137 = por %p135, %p136
      %p138 = scmp.ne.s32.totalorder %s124, %s125
      %p139 = scmp.eq.s32.totalorder %s16, 15
      %p140 = por %p138, %p139
      %p142 = scmp.ne.s32.totalorder %s125, %s141
      %p143 = scmp.eq.s32.totalorder %s16, 0
      %p144 = por %p142, %p143
      %s145 = ssub.s32 %s17, %s36
      %s146 = ssub.s32 %s18, %s32
      %s147 = sor.u32 %s145, %s146
      %p148 = scmp.eq.s32.totalorder %s147, 0
      %s150 = sadd.s32 %s149, 1
      %s151 = scalar_select %p148, %s149, %s150
      %p154 = pneg %p148
      %p155 = scmp.eq.s32.totalorder %s10, 15
      %p156 = por %p154, %p155
      %p157 = scmp.ne.s32.totalorder %s149, %s152
      %p158 = scmp.eq.s32.totalorder %s10, 0
      %p159 = por %p157, %p158
      %p160 = scmp.ne.s32.totalorder %s149, %s152
      %p161 = scmp.eq.s32.totalorder %s15, 15
      %p162 = por %p160, %p161
      %p163 = scmp.ne.s32.totalorder %s152, %s153
      %p164 = scmp.eq.s32.totalorder %s15, 0
      %p165 = por %p163, %p164
      %p166 = scmp.ne.s32.totalorder %s152, %s153
      %p167 = scmp.eq.s32.totalorder %s16, 15
      %p168 = por %p166, %p167
      %p170 = scmp.ne.s32.totalorder %s153, %s169
      %p171 = scmp.eq.s32.totalorder %s16, 0
      %p172 = por %p170, %p171
      %p173 = scmp.le.s32.totalorder 1, %s10
      %p174 = scmp.lt.s32.totalorder %s10, 17
      %p175 = pnand %p173, %p174
      %p176 = pneg %p175
      // Predicated region
      $region9: #{discriminator_forward.8} parent=5 // pred_check
        _
      $region10: #{discriminator_forward.8} parent=5 // pred_check_branch
        %178 = sbr.rel (%p175) target = $region12
      $region11: #{discriminator_forward.8} parent=5 // pred_region
        %s179 = ssub.s32 %s10, 1
      $region12: #{discriminator_forward.8} parent=5 // pred_fallthru
        _
      %p180 = scmp.lt.s32.totalorder %s10, 16
      // Predicated region
      $region13: #{discriminator_forward.8} parent=5 // pred_check
        %p181 = pneg %p180
      $region14: #{discriminator_forward.8} parent=5 // pred_check_branch
        %183 = sbr.rel (%p181) target = $region16
      $region15: #{discriminator_forward.8} parent=5 // pred_region
        // Predicated region
        $region17: #{discriminator_forward.8} parent=15 // pred_check
          %p184 = pneg %p51
        $region18: #{discriminator_forward.8} parent=15 // pred_check_branch
          %186 = sbr.rel (%p184) target = $region20
        $region19: #{discriminator_forward.8} parent=15 // pred_region
          %s187 = sand.u32 %s41, 1
          %s188 = sand.u32 %s41, 1
          %s189 = smul.addr %s188, 48
          %s190 = scalar_lea.vmem [#allocation3], %s189
          %s191 = smul.u32 3, %s17
          %s192 = smul.u32 4, %s19
          %s193 = smul.addr %s191, 32
          %s194 = sadd.s32 %s192, %s193
          %s195 = smul.addr %s194, 4
          %s196 = scalar_lea.vmem %s0, %s195
          // Predicated region
          $region21: #{discriminator_forward.8} parent=19 // pred_check
            _
          $region22: #{discriminator_forward.8} parent=19 // pred_check_branch
            %198 = sbr.rel (0) target = $region24
          $region23: #{discriminator_forward.8} parent=19 // pred_region
            // Predicated region
            $region25: #{discriminator_forward.8} parent=23 // pred_check
              _
            $region26: #{discriminator_forward.8} parent=23 // pred_check_branch
              %200 = sbr.rel (0) target = $region28
            $region27: #{discriminator_forward.8} parent=23 // pred_region
              loop: start=0, step=1, limit=1
              $region29: #{discriminator_forward.8} parent=27 // loop_pre_header
                _
              $region30: #{discriminator_forward.8} parent=27 // loop_header
                %s202 = sphi 0, %s206
                %p203 = scmp.ge.s32.totalorder %s202, 1
                %s207 = sphi %s196, %s196
                %s208 = sphi %s190, %s190
              $region31: #{discriminator_forward.8} parent=27 // loop_header_branch
                %205 = sbr.rel (%p203) target = $region35
              $region32: #{discriminator_forward.8} parent=27 // loop_body
                %v209 = vld [vmem:[%s207] sm:$0xff]
                %210 = vst [vmem:[%s208] sm:$0xff] %v209
                %v211 = vld [vmem:[%s207 + $0x8] sm:$0xff]
                %212 = vst [vmem:[%s208 + $0x8] sm:$0xff] %v211
                %v213 = vld [vmem:[%s207 + $0x80] sm:$0xff]
                %214 = vst [vmem:[%s208 + $0x10] sm:$0xff] %v213
                %v215 = vld [vmem:[%s207 + $0x88] sm:$0xff]
                %216 = vst [vmem:[%s208 + $0x18] sm:$0xff] %v215
                %v217 = vld [vmem:[%s207 + $0x100] sm:$0xff]
                %218 = vst [vmem:[%s208 + $0x20] sm:$0xff] %v217
                %v219 = vld [vmem:[%s207 + $0x108] sm:$0xff]
                %220 = vst [vmem:[%s208 + $0x28] sm:$0xff] %v219
              $region33: #{discriminator_forward.8} parent=27 // loop_footer
                %s206 = sadd.s32 1, %s202
              $region34: #{discriminator_forward.8} parent=27 // loop_footer_branch
                %201 = sbr.rel target = $region30
              $region35: #{discriminator_forward.8} parent=27 // loop_exit
                _
            $region28: #{discriminator_forward.8} parent=23 // pred_fallthru
              _
            // Predicated region
            $region36: #{discriminator_forward.8} parent=23 // pred_check
              _
            $region37: #{discriminator_forward.8} parent=23 // pred_check_branch
              %222 = sbr.rel target = $region39
            $region38: #{discriminator_forward.8} parent=23 // pred_region
              _
            $region39: #{discriminator_forward.8} parent=23 // pred_fallthru
              _
          $region24: #{discriminator_forward.8} parent=19 // pred_fallthru
            _
          %223 = vnop
        $region20: #{discriminator_forward.8} parent=15 // pred_fallthru
          _
        // Predicated region
        $region40: #{discriminator_forward.8} parent=15 // pred_check
          %p224 = pneg %p79
        $region41: #{discriminator_forward.8} parent=15 // pred_check_branch
          %226 = sbr.rel (%p224) target = $region43
        $region42: #{discriminator_forward.8} parent=15 // pred_region
          %s227 = sand.u32 %s69, 1
          %s228 = sand.u32 %s69, 1
          %s229 = smul.addr %s228, 512
          %s230 = scalar_lea.vmem [#allocation4], %s229
          %s231 = smul.u32 64, %s19
          %s232 = smul.u32 2, %s18
          %s233 = smul.addr %s231, 4
          %s234 = sadd.s32 %s232, %s233
          %s235 = smul.addr %s234, 4
          %s236 = scalar_lea.vmem %s1, %s235
          // Predicated region
          $region44: #{discriminator_forward.8} parent=42 // pred_check
            _
          $region45: #{discriminator_forward.8} parent=42 // pred_check_branch
            %238 = sbr.rel (0) target = $region47
          $region46: #{discriminator_forward.8} parent=42 // pred_region
            // Predicated region
            $region48: #{discriminator_forward.8} parent=46 // pred_check
              _
            $region49: #{discriminator_forward.8} parent=46 // pred_check_branch
              %240 = sbr.rel (0) target = $region51
            $region50: #{discriminator_forward.8} parent=46 // pred_region
              // Predicated region
              $region63: #{discriminator_forward.8} parent=50 // pred_check
                _
              $region64: #{discriminator_forward.8} parent=50 // pred_check_branch
                %381 = sbr.rel (0) target = $region66
              $region65: #{discriminator_forward.8} parent=50 // pred_region
                loop: start=0, step=1, limit=1
                $region67: #{discriminator_forward.8} parent=65 // loop_pre_header
                  _
                $region68: #{discriminator_forward.8} parent=65 // loop_header
                  %s383 = sphi 0, %s387
                  %p384 = scmp.ge.s32.totalorder %s383, 1
                  %s388 = sphi %s236, %s236
                  %s389 = sphi %s230, %s230
                $region69: #{discriminator_forward.8} parent=65 // loop_header_branch
                  %386 = sbr.rel (%p384) target = $region73
                $region70: #{discriminator_forward.8} parent=65 // loop_body
                  %v390 = vld [vmem:[%s388] sm:$0xff]
                  %391 = vst [vmem:[%s389] sm:$0xff] %v390
                  %v392 = vld [vmem:[%s388 + $0x10] sm:$0xff]
                  %393 = vst [vmem:[%s389 + $0x8] sm:$0xff] %v392
                  %v394 = vld [vmem:[%s388 + $0x20] sm:$0xff]
                  %395 = vst [vmem:[%s389 + $0x10] sm:$0xff] %v394
                  %v396 = vld [vmem:[%s388 + $0x30] sm:$0xff]
                  %397 = vst [vmem:[%s389 + $0x18] sm:$0xff] %v396
                  %v398 = vld [vmem:[%s388 + $0x40] sm:$0xff]
                  %399 = vst [vmem:[%s389 + $0x20] sm:$0xff] %v398
                  %v400 = vld [vmem:[%s388 + $0x50] sm:$0xff]
                  %401 = vst [vmem:[%s389 + $0x28] sm:$0xff] %v400
                  %v402 = vld [vmem:[%s388 + $0x60] sm:$0xff]
                  %403 = vst [vmem:[%s389 + $0x30] sm:$0xff] %v402
                  %v404 = vld [vmem:[%s388 + $0x70] sm:$0xff]
                  %405 = vst [vmem:[%s389 + $0x38] sm:$0xff] %v404
                  %v406 = vld [vmem:[%s388 + $0x80] sm:$0xff]
                  %407 = vst [vmem:[%s389 + $0x40] sm:$0xff] %v406
                  %v408 = vld [vmem:[%s388 + $0x90] sm:$0xff]
                  %409 = vst [vmem:[%s389 + $0x48] sm:$0xff] %v408
                  %v410 = vld [vmem:[%s388 + $0xa0] sm:$0xff]
                  %411 = vst [vmem:[%s389 + $0x50] sm:$0xff] %v410
                  %v412 = vld [vmem:[%s388 + $0xb0] sm:$0xff]
                  %413 = vst [vmem:[%s389 + $0x58] sm:$0xff] %v412
                  %v414 = vld [vmem:[%s388 + $0xc0] sm:$0xff]
                  %415 = vst [vmem:[%s389 + $0x60] sm:$0xff] %v414
                  %v416 = vld [vmem:[%s388 + $0xd0] sm:$0xff]
                  %417 = vst [vmem:[%s389 + $0x68] sm:$0xff] %v416
                  %v418 = vld [vmem:[%s388 + $0xe0] sm:$0xff]
                  %419 = vst [vmem:[%s389 + $0x70] sm:$0xff] %v418
                  %v420 = vld [vmem:[%s388 + $0xf0] sm:$0xff]
                  %421 = vst [vmem:[%s389 + $0x78] sm:$0xff] %v420
                  %v422 = vld [vmem:[%s388 + $0x100] sm:$0xff]
                  %423 = vst [vmem:[%s389 + $0x80] sm:$0xff] %v422
                  %v424 = vld [vmem:[%s388 + $0x110] sm:$0xff]
                  %425 = vst [vmem:[%s389 + $0x88] sm:$0xff] %v424
                  %v426 = vld [vmem:[%s388 + $0x120] sm:$0xff]
                  %427 = vst [vmem:[%s389 + $0x90] sm:$0xff] %v426
                  %v428 = vld [vmem:[%s388 + $0x130] sm:$0xff]
                  %429 = vst [vmem:[%s389 + $0x98] sm:$0xff] %v428
                  %v430 = vld [vmem:[%s388 + $0x140] sm:$0xff]
                  %431 = vst [vmem:[%s389 + $0xa0] sm:$0xff] %v430
                  %v432 = vld [vmem:[%s388 + $0x150] sm:$0xff]
                  %433 = vst [vmem:[%s389 + $0xa8] sm:$0xff] %v432
                  %v434 = vld [vmem:[%s388 + $0x160] sm:$0xff]
                  %435 = vst [vmem:[%s389 + $0xb0] sm:$0xff] %v434
                  %v436 = vld [vmem:[%s388 + $0x170] sm:$0xff]
                  %437 = vst [vmem:[%s389 + $0xb8] sm:$0xff] %v436
                  %v438 = vld [vmem:[%s388 + $0x180] sm:$0xff]
                  %439 = vst [vmem:[%s389 + $0xc0] sm:$0xff] %v438
                  %v440 = vld [vmem:[%s388 + $0x190] sm:$0xff]
                  %441 = vst [vmem:[%s389 + $0xc8] sm:$0xff] %v440
                  %v442 = vld [vmem:[%s388 + $0x1a0] sm:$0xff]
                  %443 = vst [vmem:[%s389 + $0xd0] sm:$0xff] %v442
                  %v444 = vld [vmem:[%s388 + $0x1b0] sm:$0xff]
                  %445 = vst [vmem:[%s389 + $0xd8] sm:$0xff] %v444
                  %v446 = vld [vmem:[%s388 + $0x1c0] sm:$0xff]
                  %447 = vst [vmem:[%s389 + $0xe0] sm:$0xff] %v446
                  %v448 = vld [vmem:[%s388 + $0x1d0] sm:$0xff]
                  %449 = vst [vmem:[%s389 + $0xe8] sm:$0xff] %v448
                  %v450 = vld [vmem:[%s388 + $0x1e0] sm:$0xff]
                  %451 = vst [vmem:[%s389 + $0xf0] sm:$0xff] %v450
                  %v452 = vld [vmem:[%s388 + $0x1f0] sm:$0xff]
                  %453 = vst [vmem:[%s389 + $0xf8] sm:$0xff] %v452
                  %v454 = vld [vmem:[%s388 + $0x200] sm:$0xff]
                  %455 = vst [vmem:[%s389 + $0x100] sm:$0xff] %v454
                  %v456 = vld [vmem:[%s388 + $0x210] sm:$0xff]
                  %457 = vst [vmem:[%s389 + $0x108] sm:$0xff] %v456
                  %v458 = vld [vmem:[%s388 + $0x220] sm:$0xff]
                  %459 = vst [vmem:[%s389 + $0x110] sm:$0xff] %v458
                  %v460 = vld [vmem:[%s388 + $0x230] sm:$0xff]
                  %461 = vst [vmem:[%s389 + $0x118] sm:$0xff] %v460
                  %v462 = vld [vmem:[%s388 + $0x240] sm:$0xff]
                  %463 = vst [vmem:[%s389 + $0x120] sm:$0xff] %v462
                  %v464 = vld [vmem:[%s388 + $0x250] sm:$0xff]
                  %465 = vst [vmem:[%s389 + $0x128] sm:$0xff] %v464
                  %v466 = vld [vmem:[%s388 + $0x260] sm:$0xff]
                  %467 = vst [vmem:[%s389 + $0x130] sm:$0xff] %v466
                  %v468 = vld [vmem:[%s388 + $0x270] sm:$0xff]
                  %469 = vst [vmem:[%s389 + $0x138] sm:$0xff] %v468
                  %v470 = vld [vmem:[%s388 + $0x280] sm:$0xff]
                  %471 = vst [vmem:[%s389 + $0x140] sm:$0xff] %v470
                  %v472 = vld [vmem:[%s388 + $0x290] sm:$0xff]
                  %473 = vst [vmem:[%s389 + $0x148] sm:$0xff] %v472
                  %v474 = vld [vmem:[%s388 + $0x2a0] sm:$0xff]
                  %475 = vst [vmem:[%s389 + $0x150] sm:$0xff] %v474
                  %v476 = vld [vmem:[%s388 + $0x2b0] sm:$0xff]
                  %477 = vst [vmem:[%s389 + $0x158] sm:$0xff] %v476
                  %v478 = vld [vmem:[%s388 + $0x2c0] sm:$0xff]
                  %479 = vst [vmem:[%s389 + $0x160] sm:$0xff] %v478
                  %v480 = vld [vmem:[%s388 + $0x2d0] sm:$0xff]
                  %481 = vst [vmem:[%s389 + $0x168] sm:$0xff] %v480
                  %v482 = vld [vmem:[%s388 + $0x2e0] sm:$0xff]
                  %483 = vst [vmem:[%s389 + $0x170] sm:$0xff] %v482
                  %v484 = vld [vmem:[%s388 + $0x2f0] sm:$0xff]
                  %485 = vst [vmem:[%s389 + $0x178] sm:$0xff] %v484
                  %v486 = vld [vmem:[%s388 + $0x300] sm:$0xff]
                  %487 = vst [vmem:[%s389 + $0x180] sm:$0xff] %v486
                  %v488 = vld [vmem:[%s388 + $0x310] sm:$0xff]
                  %489 = vst [vmem:[%s389 + $0x188] sm:$0xff] %v488
                  %v490 = vld [vmem:[%s388 + $0x320] sm:$0xff]
                  %491 = vst [vmem:[%s389 + $0x190] sm:$0xff] %v490
                  %v492 = vld [vmem:[%s388 + $0x330] sm:$0xff]
                  %493 = vst [vmem:[%s389 + $0x198] sm:$0xff] %v492
                  %v494 = vld [vmem:[%s388 + $0x340] sm:$0xff]
                  %495 = vst [vmem:[%s389 + $0x1a0] sm:$0xff] %v494
                  %v496 = vld [vmem:[%s388 + $0x350] sm:$0xff]
                  %497 = vst [vmem:[%s389 + $0x1a8] sm:$0xff] %v496
                  %v498 = vld [vmem:[%s388 + $0x360] sm:$0xff]
                  %499 = vst [vmem:[%s389 + $0x1b0] sm:$0xff] %v498
                  %v500 = vld [vmem:[%s388 + $0x370] sm:$0xff]
                  %501 = vst [vmem:[%s389 + $0x1b8] sm:$0xff] %v500
                  %v502 = vld [vmem:[%s388 + $0x380] sm:$0xff]
                  %503 = vst [vmem:[%s389 + $0x1c0] sm:$0xff] %v502
                  %v504 = vld [vmem:[%s388 + $0x390] sm:$0xff]
                  %505 = vst [vmem:[%s389 + $0x1c8] sm:$0xff] %v504
                  %v506 = vld [vmem:[%s388 + $0x3a0] sm:$0xff]
                  %507 = vst [vmem:[%s389 + $0x1d0] sm:$0xff] %v506
                  %v508 = vld [vmem:[%s388 + $0x3b0] sm:$0xff]
                  %509 = vst [vmem:[%s389 + $0x1d8] sm:$0xff] %v508
                  %v510 = vld [vmem:[%s388 + $0x3c0] sm:$0xff]
                  %511 = vst [vmem:[%s389 + $0x1e0] sm:$0xff] %v510
                  %v512 = vld [vmem:[%s388 + $0x3d0] sm:$0xff]
                  %513 = vst [vmem:[%s389 + $0x1e8] sm:$0xff] %v512
                  %v514 = vld [vmem:[%s388 + $0x3e0] sm:$0xff]
                  %515 = vst [vmem:[%s389 + $0x1f0] sm:$0xff] %v514
                  %v516 = vld [vmem:[%s388 + $0x3f0] sm:$0xff]
                  %517 = vst [vmem:[%s389 + $0x1f8] sm:$0xff] %v516
                $region71: #{discriminator_forward.8} parent=65 // loop_footer
                  %s387 = sadd.s32 1, %s383
                $region72: #{discriminator_forward.8} parent=65 // loop_footer_branch
                  %382 = sbr.rel target = $region68
                $region73: #{discriminator_forward.8} parent=65 // loop_exit
                  _
              $region66: #{discriminator_forward.8} parent=50 // pred_fallthru
                _
              // Predicated region
              $region74: #{discriminator_forward.8} parent=50 // pred_check
                _
              $region75: #{discriminator_forward.8} parent=50 // pred_check_branch
                %519 = sbr.rel target = $region77
              $region76: #{discriminator_forward.8} parent=50 // pred_region
                _
              $region77: #{discriminator_forward.8} parent=50 // pred_fallthru
                _
            $region51: #{discriminator_forward.8} parent=46 // pred_fallthru
              _
            // Predicated region
            $region52: #{discriminator_forward.8} parent=46 // pred_check
              _
            $region53: #{discriminator_forward.8} parent=46 // pred_check_branch
              %242 = sbr.rel target = $region55
            $region54: #{discriminator_forward.8} parent=46 // pred_region
              loop: start=0, step=1, limit=1
              $region56: #{discriminator_forward.8} parent=54 // loop_pre_header
                _
              $region57: #{discriminator_forward.8} parent=54 // loop_header
                %s245 = sphi 0, %s249
                %p246 = scmp.ge.s32.totalorder %s245, 1
                %s250 = sphi %s236, %s236
                %s251 = sphi %s230, %s230
              $region58: #{discriminator_forward.8} parent=54 // loop_header_branch
                %248 = sbr.rel (%p246) target = $region62
              $region59: #{discriminator_forward.8} parent=54 // loop_body
                %v252 = vld [vmem:[%s250] sm:$0xff]
                %253 = vst [vmem:[%s251] sm:$0xff] %v252
                %v254 = vld [vmem:[%s250 + $0x10] sm:$0xff]
                %255 = vst [vmem:[%s251 + $0x8] sm:$0xff] %v254
                %v256 = vld [vmem:[%s250 + $0x20] sm:$0xff]
                %257 = vst [vmem:[%s251 + $0x10] sm:$0xff] %v256
                %v258 = vld [vmem:[%s250 + $0x30] sm:$0xff]
                %259 = vst [vmem:[%s251 + $0x18] sm:$0xff] %v258
                %v260 = vld [vmem:[%s250 + $0x40] sm:$0xff]
                %261 = vst [vmem:[%s251 + $0x20] sm:$0xff] %v260
                %v262 = vld [vmem:[%s250 + $0x50] sm:$0xff]
                %263 = vst [vmem:[%s251 + $0x28] sm:$0xff] %v262
                %v264 = vld [vmem:[%s250 + $0x60] sm:$0xff]
                %265 = vst [vmem:[%s251 + $0x30] sm:$0xff] %v264
                %v266 = vld [vmem:[%s250 + $0x70] sm:$0xff]
                %267 = vst [vmem:[%s251 + $0x38] sm:$0xff] %v266
                %v268 = vld [vmem:[%s250 + $0x80] sm:$0xff]
                %269 = vst [vmem:[%s251 + $0x40] sm:$0xff] %v268
                %v270 = vld [vmem:[%s250 + $0x90] sm:$0xff]
                %271 = vst [vmem:[%s251 + $0x48] sm:$0xff] %v270
                %v272 = vld [vmem:[%s250 + $0xa0] sm:$0xff]
                %273 = vst [vmem:[%s251 + $0x50] sm:$0xff] %v272
                %v274 = vld [vmem:[%s250 + $0xb0] sm:$0xff]
                %275 = vst [vmem:[%s251 + $0x58] sm:$0xff] %v274
                %v276 = vld [vmem:[%s250 + $0xc0] sm:$0xff]
                %277 = vst [vmem:[%s251 + $0x60] sm:$0xff] %v276
                %v278 = vld [vmem:[%s250 + $0xd0] sm:$0xff]
                %279 = vst [vmem:[%s251 + $0x68] sm:$0xff] %v278
                %v280 = vld [vmem:[%s250 + $0xe0] sm:$0xff]
                %281 = vst [vmem:[%s251 + $0x70] sm:$0xff] %v280
                %v282 = vld [vmem:[%s250 + $0xf0] sm:$0xff]
                %283 = vst [vmem:[%s251 + $0x78] sm:$0xff] %v282
                %v284 = vld [vmem:[%s250 + $0x100] sm:$0xff]
                %285 = vst [vmem:[%s251 + $0x80] sm:$0xff] %v284
                %v286 = vld [vmem:[%s250 + $0x110] sm:$0xff]
                %287 = vst [vmem:[%s251 + $0x88] sm:$0xff] %v286
                %v288 = vld [vmem:[%s250 + $0x120] sm:$0xff]
                %289 = vst [vmem:[%s251 + $0x90] sm:$0xff] %v288
                %v290 = vld [vmem:[%s250 + $0x130] sm:$0xff]
                %291 = vst [vmem:[%s251 + $0x98] sm:$0xff] %v290
                %v292 = vld [vmem:[%s250 + $0x140] sm:$0xff]
                %293 = vst [vmem:[%s251 + $0xa0] sm:$0xff] %v292
                %v294 = vld [vmem:[%s250 + $0x150] sm:$0xff]
                %295 = vst [vmem:[%s251 + $0xa8] sm:$0xff] %v294
                %v296 = vld [vmem:[%s250 + $0x160] sm:$0xff]
                %297 = vst [vmem:[%s251 + $0xb0] sm:$0xff] %v296
                %v298 = vld [vmem:[%s250 + $0x170] sm:$0xff]
                %299 = vst [vmem:[%s251 + $0xb8] sm:$0xff] %v298
                %v300 = vld [vmem:[%s250 + $0x180] sm:$0xff]
                %301 = vst [vmem:[%s251 + $0xc0] sm:$0xff] %v300
                %v302 = vld [vmem:[%s250 + $0x190] sm:$0xff]
                %303 = vst [vmem:[%s251 + $0xc8] sm:$0xff] %v302
                %v304 = vld [vmem:[%s250 + $0x1a0] sm:$0xff]
                %305 = vst [vmem:[%s251 + $0xd0] sm:$0xff] %v304
                %v306 = vld [vmem:[%s250 + $0x1b0] sm:$0xff]
                %307 = vst [vmem:[%s251 + $0xd8] sm:$0xff] %v306
                %v308 = vld [vmem:[%s250 + $0x1c0] sm:$0xff]
                %309 = vst [vmem:[%s251 + $0xe0] sm:$0xff] %v308
                %v310 = vld [vmem:[%s250 + $0x1d0] sm:$0xff]
                %311 = vst [vmem:[%s251 + $0xe8] sm:$0xff] %v310
                %v312 = vld [vmem:[%s250 + $0x1e0] sm:$0xff]
                %313 = vst [vmem:[%s251 + $0xf0] sm:$0xff] %v312
                %v314 = vld [vmem:[%s250 + $0x1f0] sm:$0xff]
                %315 = vst [vmem:[%s251 + $0xf8] sm:$0xff] %v314
                %v316 = vld [vmem:[%s250 + $0x200] sm:$0xff]
                %317 = vst [vmem:[%s251 + $0x100] sm:$0xff] %v316
                %v318 = vld [vmem:[%s250 + $0x210] sm:$0xff]
                %319 = vst [vmem:[%s251 + $0x108] sm:$0xff] %v318
                %v320 = vld [vmem:[%s250 + $0x220] sm:$0xff]
                %321 = vst [vmem:[%s251 + $0x110] sm:$0xff] %v320
                %v322 = vld [vmem:[%s250 + $0x230] sm:$0xff]
                %323 = vst [vmem:[%s251 + $0x118] sm:$0xff] %v322
                %v324 = vld [vmem:[%s250 + $0x240] sm:$0xff]
                %325 = vst [vmem:[%s251 + $0x120] sm:$0xff] %v324
                %v326 = vld [vmem:[%s250 + $0x250] sm:$0xff]
                %327 = vst [vmem:[%s251 + $0x128] sm:$0xff] %v326
                %v328 = vld [vmem:[%s250 + $0x260] sm:$0xff]
                %329 = vst [vmem:[%s251 + $0x130] sm:$0xff] %v328
                %v330 = vld [vmem:[%s250 + $0x270] sm:$0xff]
                %331 = vst [vmem:[%s251 + $0x138] sm:$0xff] %v330
                %v332 = vld [vmem:[%s250 + $0x280] sm:$0xff]
                %333 = vst [vmem:[%s251 + $0x140] sm:$0xff] %v332
                %v334 = vld [vmem:[%s250 + $0x290] sm:$0xff]
                %335 = vst [vmem:[%s251 + $0x148] sm:$0xff] %v334
                %v336 = vld [vmem:[%s250 + $0x2a0] sm:$0xff]
                %337 = vst [vmem:[%s251 + $0x150] sm:$0xff] %v336
                %v338 = vld [vmem:[%s250 + $0x2b0] sm:$0xff]
                %339 = vst [vmem:[%s251 + $0x158] sm:$0xff] %v338
                %v340 = vld [vmem:[%s250 + $0x2c0] sm:$0xff]
                %341 = vst [vmem:[%s251 + $0x160] sm:$0xff] %v340
                %v342 = vld [vmem:[%s250 + $0x2d0] sm:$0xff]
                %343 = vst [vmem:[%s251 + $0x168] sm:$0xff] %v342
                %v344 = vld [vmem:[%s250 + $0x2e0] sm:$0xff]
                %345 = vst [vmem:[%s251 + $0x170] sm:$0xff] %v344
                %v346 = vld [vmem:[%s250 + $0x2f0] sm:$0xff]
                %347 = vst [vmem:[%s251 + $0x178] sm:$0xff] %v346
                %v348 = vld [vmem:[%s250 + $0x300] sm:$0xff]
                %349 = vst [vmem:[%s251 + $0x180] sm:$0xff] %v348
                %v350 = vld [vmem:[%s250 + $0x310] sm:$0xff]
                %351 = vst [vmem:[%s251 + $0x188] sm:$0xff] %v350
                %v352 = vld [vmem:[%s250 + $0x320] sm:$0xff]
                %353 = vst [vmem:[%s251 + $0x190] sm:$0xff] %v352
                %v354 = vld [vmem:[%s250 + $0x330] sm:$0xff]
                %355 = vst [vmem:[%s251 + $0x198] sm:$0xff] %v354
                %v356 = vld [vmem:[%s250 + $0x340] sm:$0xff]
                %357 = vst [vmem:[%s251 + $0x1a0] sm:$0xff] %v356
                %v358 = vld [vmem:[%s250 + $0x350] sm:$0xff]
                %359 = vst [vmem:[%s251 + $0x1a8] sm:$0xff] %v358
                %v360 = vld [vmem:[%s250 + $0x360] sm:$0xff]
                %361 = vst [vmem:[%s251 + $0x1b0] sm:$0xff] %v360
                %v362 = vld [vmem:[%s250 + $0x370] sm:$0xff]
                %363 = vst [vmem:[%s251 + $0x1b8] sm:$0xff] %v362
                %v364 = vld [vmem:[%s250 + $0x380] sm:$0xff]
                %365 = vst [vmem:[%s251 + $0x1c0] sm:$0xff] %v364
                %v366 = vld [vmem:[%s250 + $0x390] sm:$0xff]
                %367 = vst [vmem:[%s251 + $0x1c8] sm:$0xff] %v366
                %v368 = vld [vmem:[%s250 + $0x3a0] sm:$0xff]
                %369 = vst [vmem:[%s251 + $0x1d0] sm:$0xff] %v368
                %v370 = vld [vmem:[%s250 + $0x3b0] sm:$0xff]
                %371 = vst [vmem:[%s251 + $0x1d8] sm:$0xff] %v370
                %v372 = vld [vmem:[%s250 + $0x3c0] sm:$0xff]
                %373 = vst [vmem:[%s251 + $0x1e0] sm:$0xff] %v372
                %v374 = vld [vmem:[%s250 + $0x3d0] sm:$0xff]
                %375 = vst [vmem:[%s251 + $0x1e8] sm:$0xff] %v374
                %v376 = vld [vmem:[%s250 + $0x3e0] sm:$0xff]
                %377 = vst [vmem:[%s251 + $0x1f0] sm:$0xff] %v376
                %v378 = vld [vmem:[%s250 + $0x3f0] sm:$0xff]
                %379 = vst [vmem:[%s251 + $0x1f8] sm:$0xff] %v378
              $region60: #{discriminator_forward.8} parent=54 // loop_footer
                %s249 = sadd.s32 1, %s245
              $region61: #{discriminator_forward.8} parent=54 // loop_footer_branch
                %244 = sbr.rel target = $region57
              $region62: #{discriminator_forward.8} parent=54 // loop_exit
                _
            $region55: #{discriminator_forward.8} parent=46 // pred_fallthru
              _
          $region47: #{discriminator_forward.8} parent=42 // pred_fallthru
            _
          %520 = vnop
        $region43: #{discriminator_forward.8} parent=15 // pred_fallthru
          _
        // Predicated region
        $region78: #{discriminator_forward.8} parent=15 // pred_check
          %p521 = pneg %p105
        $region79: #{discriminator_forward.8} parent=15 // pred_check_branch
          %523 = sbr.rel (%p521) target = $region81
        $region80: #{discriminator_forward.8} parent=15 // pred_region
          %s524 = smul.u32 2, %s18
          %p525 = scmp.lt.s32.totalorder %s524, 3
          %s526 = scalar_select %p525, %s524, 3
          %s527 = scalar_lea.vmem %s2, %s526
          %s528 = smul.u32 2, %s18
        $region81: #{discriminator_forward.8} parent=15 // pred_fallthru
          _
        // Predicated region
        $region82: #{discriminator_forward.8} parent=15 // pred_check
          %p529 = pneg %p131
        $region83: #{discriminator_forward.8} parent=15 // pred_check_branch
          %531 = sbr.rel (%p529) target = $region85
        $region84: #{discriminator_forward.8} parent=15 // pred_region
          %s532 = smul.u32 2, %s18
          %p533 = scmp.lt.s32.totalorder %s532, 3
          %s534 = scalar_select %p533, %s532, 3
          %s535 = scalar_lea.vmem %s3, %s534
          %s536 = smul.u32 2, %s18
        $region85: #{discriminator_forward.8} parent=15 // pred_fallthru
          _
      $region16: #{discriminator_forward.8} parent=5 // pred_fallthru
        _
      %p537 = scmp.le.s32.totalorder 1, %s10
      %p538 = scmp.lt.s32.totalorder %s10, 17
      %p539 = pnand %p537, %p538
      %p540 = pneg %p539
      // Predicated region
      $region86: #{discriminator_forward.8} parent=5 // pred_check
        _
      $region87: #{discriminator_forward.8} parent=5 // pred_check_branch
        %542 = sbr.rel (%p539) target = $region89
      $region88: #{discriminator_forward.8} parent=5 // pred_region
        %s543 = ssub.s32 %s10, 1
        %s544 = sand.u32 %s44, 1
        %s545 = sand.u32 %s44, 1
        %s546 = smul.addr %s545, 48
        %s547 = scalar_lea.vmem [#allocation3], %s546
        // Predicated region
        $region90: #{discriminator_forward.8} parent=88 // pred_check
          %p548 = pneg %p57
        $region91: #{discriminator_forward.8} parent=88 // pred_check_branch
          %550 = sbr.rel (%p548) target = $region93
        $region92: #{discriminator_forward.8} parent=88 // pred_region
          _
        $region93: #{discriminator_forward.8} parent=88 // pred_fallthru
          _
        %s551 = sand.u32 %s72, 1
        %s552 = sand.u32 %s72, 1
        %s553 = smul.addr %s552, 512
        %s554 = scalar_lea.vmem [#allocation4], %s553
        // Predicated region
        $region94: #{discriminator_forward.8} parent=88 // pred_check
          %p555 = pneg %p85
        $region95: #{discriminator_forward.8} parent=88 // pred_check_branch
          %557 = sbr.rel (%p555) target = $region97
        $region96: #{discriminator_forward.8} parent=88 // pred_region
          _
        $region97: #{discriminator_forward.8} parent=88 // pred_fallthru
          _
        %s558 = sand.u32 %s44, 1
        %s559 = sand.u32 %s44, 1
        %s560 = smul.addr %s559, 48
        %s561 = scalar_lea.vmem [#allocation3], %s560
        %p562 = pneg %p57
        %p563 = pneg %p54
        %s564 = sand.u32 %s72, 1
        %s565 = sand.u32 %s72, 1
        %s566 = smul.addr %s565, 512
        %s567 = scalar_lea.vmem [#allocation4], %s566
        %p568 = pneg %p85
        %p569 = pneg %p82
        %s570 = smul.u32 2, %s21
        %p571 = scmp.lt.s32.totalorder %s570, 3
        %s572 = scalar_select %p571, %s570, 3
        %s573 = scalar_lea.vmem %s2, %s572
        %p574 = pneg %p111
        %p575 = pneg %p108
        %s576 = smul.u32 2, %s21
        %p577 = scmp.lt.s32.totalorder %s576, 3
        %s578 = scalar_select %p577, %s576, 3
        %s579 = scalar_lea.vmem %s3, %s578
        %p580 = pneg %p137
        %p581 = pneg %p134
        %p582 = pneg %p165
        %p583 = pneg %p162
        %s584 = sand.u32 %s152, 1
        %s585 = sand.u32 %s152, 1
        %s586 = smul.addr %s585, 48
        %s587 = scalar_lea.vmem [#allocation5], %s586
        %s588 = smul.u32 3, %s20
        %s589 = smul.u32 4, %s22
        %s590 = smul.u32 64, %s22
        %s591 = smul.u32 2, %s21
        %s592 = smul.u32 2, %s21
        %p593 = scmp.lt.s32.totalorder %s592, 3
        %s594 = scalar_select %p593, %s592, 3
        %s595 = scalar_lea.vmem %s2, %s594
        %s596 = smul.u32 2, %s21
        %s597 = smul.u32 2, %s21
        %p598 = scmp.lt.s32.totalorder %s597, 3
        %s599 = scalar_select %p598, %s597, 3
        %s600 = scalar_lea.vmem %s3, %s599
        %s601 = smul.u32 2, %s21
        %s602 = smul.u32 3, %s20
        %s603 = smul.u32 2, %s21
        %p604 = scmp.eq.s32.totalorder %s22, 0
        // Predicated region
        $region98: #{discriminator_forward.8} parent=88 // pred_check
          %p605 = pneg %p604
        $region99: #{discriminator_forward.8} parent=88 // pred_check_branch
          %607 = sbr.rel (%p605) target = $region101
        $region100: #{discriminator_forward.8} parent=88 // pred_region
          %608 = vst [vmem:[#allocation2] sm:$0xff] 0.0
          %609 = vst [vmem:[#allocation2 + $0x8] sm:$0xff] 0.0
          %610 = vst [vmem:[#allocation2 + $0x10] sm:$0xff] 0.0
          %611 = vst [vmem:[#allocation2 + $0x18] sm:$0xff] 0.0
          %612 = vst [vmem:[#allocation2 + $0x20] sm:$0xff] 0.0
          %613 = vst [vmem:[#allocation2 + $0x28] sm:$0xff] 0.0
        $region101: #{discriminator_forward.8} parent=88 // pred_fallthru
          _
        %v614 = vld [vmem:[#allocation2] sm:$0xff]
        %v615 = vld [vmem:[#allocation2 + $0x8] sm:$0xff]
        %v616 = vld [vmem:[#allocation2 + $0x10] sm:$0xff]
        %v617 = vld [vmem:[#allocation2 + $0x18] sm:$0xff]
        %v618 = vld [vmem:[#allocation2 + $0x20] sm:$0xff]
        %v619 = vld [vmem:[#allocation2 + $0x28] sm:$0xff]
        %v620 = vld [vmem:[%s547] sm:$0xff]
        %v621 = vld [vmem:[%s547 + $0x8] sm:$0xff]
        %v622 = vld [vmem:[%s547 + $0x10] sm:$0xff]
        %v623 = vld [vmem:[%s547 + $0x18] sm:$0xff]
        %v624 = vld [vmem:[%s547 + $0x20] sm:$0xff]
        %v625 = vld [vmem:[%s547 + $0x28] sm:$0xff]
        %v626 = vld [vmem:[%s554] sm:$0xff]
        %v627 = vld [vmem:[%s554 + $0x8] sm:$0xff]
        %v628 = vld [vmem:[%s554 + $0x10] sm:$0xff]
        %v629 = vld [vmem:[%s554 + $0x18] sm:$0xff]
        %v630 = vld [vmem:[%s554 + $0x20] sm:$0xff]
        %v631 = vld [vmem:[%s554 + $0x28] sm:$0xff]
        %v632 = vld [vmem:[%s554 + $0x30] sm:$0xff]
        %v633 = vld [vmem:[%s554 + $0x38] sm:$0xff]
        %v634 = vld [vmem:[%s554 + $0x40] sm:$0xff]
        %v635 = vld [vmem:[%s554 + $0x48] sm:$0xff]
        %v636 = vld [vmem:[%s554 + $0x50] sm:$0xff]
        %v637 = vld [vmem:[%s554 + $0x58] sm:$0xff]
        %v638 = vld [vmem:[%s554 + $0x60] sm:$0xff]
        %v639 = vld [vmem:[%s554 + $0x68] sm:$0xff]
        %v640 = vld [vmem:[%s554 + $0x70] sm:$0xff]
        %v641 = vld [vmem:[%s554 + $0x78] sm:$0xff]
        %v642 = vld [vmem:[%s554 + $0x80] sm:$0xff]
        %v643 = vld [vmem:[%s554 + $0x88] sm:$0xff]
        %v644 = vld [vmem:[%s554 + $0x90] sm:$0xff]
        %v645 = vld [vmem:[%s554 + $0x98] sm:$0xff]
        %v646 = vld [vmem:[%s554 + $0xa0] sm:$0xff]
        %v647 = vld [vmem:[%s554 + $0xa8] sm:$0xff]
        %v648 = vld [vmem:[%s554 + $0xb0] sm:$0xff]
        %v649 = vld [vmem:[%s554 + $0xb8] sm:$0xff]
        %v650 = vld [vmem:[%s554 + $0xc0] sm:$0xff]
        %v651 = vld [vmem:[%s554 + $0xc8] sm:$0xff]
        %v652 = vld [vmem:[%s554 + $0xd0] sm:$0xff]
        %v653 = vld [vmem:[%s554 + $0xd8] sm:$0xff]
        %v654 = vld [vmem:[%s554 + $0xe0] sm:$0xff]
        %v655 = vld [vmem:[%s554 + $0xe8] sm:$0xff]
        %v656 = vld [vmem:[%s554 + $0xf0] sm:$0xff]
        %v657 = vld [vmem:[%s554 + $0xf8] sm:$0xff]
        %v658 = vld [vmem:[%s554 + $0x100] sm:$0xff]
        %v659 = vld [vmem:[%s554 + $0x108] sm:$0xff]
        %v660 = vld [vmem:[%s554 + $0x110] sm:$0xff]
        %v661 = vld [vmem:[%s554 + $0x118] sm:$0xff]
        %v662 = vld [vmem:[%s554 + $0x120] sm:$0xff]
        %v663 = vld [vmem:[%s554 + $0x128] sm:$0xff]
        %v664 = vld [vmem:[%s554 + $0x130] sm:$0xff]
        %v665 = vld [vmem:[%s554 + $0x138] sm:$0xff]
        %v666 = vld [vmem:[%s554 + $0x140] sm:$0xff]
        %v667 = vld [vmem:[%s554 + $0x148] sm:$0xff]
        %v668 = vld [vmem:[%s554 + $0x150] sm:$0xff]
        %v669 = vld [vmem:[%s554 + $0x158] sm:$0xff]
        %v670 = vld [vmem:[%s554 + $0x160] sm:$0xff]
        %v671 = vld [vmem:[%s554 + $0x168] sm:$0xff]
        %v672 = vld [vmem:[%s554 + $0x170] sm:$0xff]
        %v673 = vld [vmem:[%s554 + $0x178] sm:$0xff]
        %v674 = vld [vmem:[%s554 + $0x180] sm:$0xff]
        %v675 = vld [vmem:[%s554 + $0x188] sm:$0xff]
        %v676 = vld [vmem:[%s554 + $0x190] sm:$0xff]
        %v677 = vld [vmem:[%s554 + $0x198] sm:$0xff]
        %v678 = vld [vmem:[%s554 + $0x1a0] sm:$0xff]
        %v679 = vld [vmem:[%s554 + $0x1a8] sm:$0xff]
        %v680 = vld [vmem:[%s554 + $0x1b0] sm:$0xff]
        %v681 = vld [vmem:[%s554 + $0x1b8] sm:$0xff]
        %v682 = vld [vmem:[%s554 + $0x1c0] sm:$0xff]
        %v683 = vld [vmem:[%s554 + $0x1c8] sm:$0xff]
        %v684 = vld [vmem:[%s554 + $0x1d0] sm:$0xff]
        %v685 = vld [vmem:[%s554 + $0x1d8] sm:$0xff]
        %v686 = vld [vmem:[%s554 + $0x1e0] sm:$0xff]
        %v687 = vld [vmem:[%s554 + $0x1e8] sm:$0xff]
        %v688 = vld [vmem:[%s554 + $0x1f0] sm:$0xff]
        %v689 = vld [vmem:[%s554 + $0x1f8] sm:$0xff]
        %v696 = vunpack.c.l.b16 %v620
        %v697 = vunpack.c.h.b16 %v620
        %v698 = vunpack.c.l.b16 %v621
        %v699 = vunpack.c.h.b16 %v621
        %v700 = vunpack.c.l.b16 %v622
        %v701 = vunpack.c.h.b16 %v622
        %v702 = vunpack.c.l.b16 %v623
        %v703 = vunpack.c.h.b16 %v623
        %v704 = vunpack.c.l.b16 %v624
        %v705 = vunpack.c.h.b16 %v624
        %v706 = vunpack.c.l.b16 %v625
        %v707 = vunpack.c.h.b16 %v625
        %v708 = vpack.c.b16 %v700, %v696
        %v709 = vpack.c.b16 %v701, %v697
        %v710 = vpack.c.b16 %v702, %v698
        %v711 = vpack.c.b16 %v703, %v699
        %v712 = vpack.c.b16 %v704, %v704
        %v713 = vpack.c.b16 %v705, %v705
        %v714 = vpack.c.b16 %v706, %v706
        %v715 = vpack.c.b16 %v707, %v707
        %v788 = vunpack.c.l.b16 %v626
        %v789 = vunpack.c.h.b16 %v626
        %v790 = vunpack.c.l.b16 %v627
        %v791 = vunpack.c.h.b16 %v627
        %v792 = vunpack.c.l.b16 %v628
        %v793 = vunpack.c.h.b16 %v628
        %v794 = vunpack.c.l.b16 %v629
        %v795 = vunpack.c.h.b16 %v629
        %v796 = vunpack.c.l.b16 %v630
        %v797 = vunpack.c.h.b16 %v630
        %v798 = vunpack.c.l.b16 %v631
        %v799 = vunpack.c.h.b16 %v631
        %v800 = vunpack.c.l.b16 %v632
        %v801 = vunpack.c.h.b16 %v632
        %v802 = vunpack.c.l.b16 %v633
        %v803 = vunpack.c.h.b16 %v633
        %v804 = vunpack.c.l.b16 %v634
        %v805 = vunpack.c.h.b16 %v634
        %v806 = vunpack.c.l.b16 %v635
        %v807 = vunpack.c.h.b16 %v635
        %v808 = vunpack.c.l.b16 %v636
        %v809 = vunpack.c.h.b16 %v636
        %v810 = vunpack.c.l.b16 %v637
        %v811 = vunpack.c.h.b16 %v637
        %v812 = vunpack.c.l.b16 %v638
        %v813 = vunpack.c.h.b16 %v638
        %v814 = vunpack.c.l.b16 %v639
        %v815 = vunpack.c.h.b16 %v639
        %v816 = vunpack.c.l.b16 %v640
        %v817 = vunpack.c.h.b16 %v640
        %v818 = vunpack.c.l.b16 %v641
        %v819 = vunpack.c.h.b16 %v641
        %v820 = vunpack.c.l.b16 %v642
        %v821 = vunpack.c.h.b16 %v642
        %v822 = vunpack.c.l.b16 %v643
        %v823 = vunpack.c.h.b16 %v643
        %v824 = vunpack.c.l.b16 %v644
        %v825 = vunpack.c.h.b16 %v644
        %v826 = vunpack.c.l.b16 %v645
        %v827 = vunpack.c.h.b16 %v645
        %v828 = vunpack.c.l.b16 %v646
        %v829 = vunpack.c.h.b16 %v646
        %v830 = vunpack.c.l.b16 %v647
        %v831 = vunpack.c.h.b16 %v647
        %v832 = vunpack.c.l.b16 %v648
        %v833 = vunpack.c.h.b16 %v648
        %v834 = vunpack.c.l.b16 %v649
        %v835 = vunpack.c.h.b16 %v649
        %v836 = vunpack.c.l.b16 %v650
        %v837 = vunpack.c.h.b16 %v650
        %v838 = vunpack.c.l.b16 %v651
        %v839 = vunpack.c.h.b16 %v651
        %v840 = vunpack.c.l.b16 %v652
        %v841 = vunpack.c.h.b16 %v652
        %v842 = vunpack.c.l.b16 %v653
        %v843 = vunpack.c.h.b16 %v653
        %v844 = vunpack.c.l.b16 %v654
        %v845 = vunpack.c.h.b16 %v654
        %v846 = vunpack.c.l.b16 %v655
        %v847 = vunpack.c.h.b16 %v655
        %v848 = vunpack.c.l.b16 %v656
        %v849 = vunpack.c.h.b16 %v656
        %v850 = vunpack.c.l.b16 %v657
        %v851 = vunpack.c.h.b16 %v657
        %v852 = vunpack.c.l.b16 %v658
        %v853 = vunpack.c.h.b16 %v658
        %v854 = vunpack.c.l.b16 %v659
        %v855 = vunpack.c.h.b16 %v659
        %v856 = vunpack.c.l.b16 %v660
        %v857 = vunpack.c.h.b16 %v660
        %v858 = vunpack.c.l.b16 %v661
        %v859 = vunpack.c.h.b16 %v661
        %v860 = vunpack.c.l.b16 %v662
        %v861 = vunpack.c.h.b16 %v662
        %v862 = vunpack.c.l.b16 %v663
        %v863 = vunpack.c.h.b16 %v663
        %v864 = vunpack.c.l.b16 %v664
        %v865 = vunpack.c.h.b16 %v664
        %v866 = vunpack.c.l.b16 %v665
        %v867 = vunpack.c.h.b16 %v665
        %v868 = vunpack.c.l.b16 %v666
        %v869 = vunpack.c.h.b16 %v666
        %v870 = vunpack.c.l.b16 %v667
        %v871 = vunpack.c.h.b16 %v667
        %v872 = vunpack.c.l.b16 %v668
        %v873 = vunpack.c.h.b16 %v668
        %v874 = vunpack.c.l.b16 %v669
        %v875 = vunpack.c.h.b16 %v669
        %v876 = vunpack.c.l.b16 %v670
        %v877 = vunpack.c.h.b16 %v670
        %v878 = vunpack.c.l.b16 %v671
        %v879 = vunpack.c.h.b16 %v671
        %v880 = vunpack.c.l.b16 %v672
        %v881 = vunpack.c.h.b16 %v672
        %v882 = vunpack.c.l.b16 %v673
        %v883 = vunpack.c.h.b16 %v673
        %v884 = vunpack.c.l.b16 %v674
        %v885 = vunpack.c.h.b16 %v674
        %v886 = vunpack.c.l.b16 %v675
        %v887 = vunpack.c.h.b16 %v675
        %v888 = vunpack.c.l.b16 %v676
        %v889 = vunpack.c.h.b16 %v676
        %v890 = vunpack.c.l.b16 %v677
        %v891 = vunpack.c.h.b16 %v677
        %v892 = vunpack.c.l.b16 %v678
        %v893 = vunpack.c.h.b16 %v678
        %v894 = vunpack.c.l.b16 %v679
        %v895 = vunpack.c.h.b16 %v679
        %v896 = vunpack.c.l.b16 %v680
        %v897 = vunpack.c.h.b16 %v680
        %v898 = vunpack.c.l.b16 %v681
        %v899 = vunpack.c.h.b16 %v681
        %v900 = vunpack.c.l.b16 %v682
        %v901 = vunpack.c.h.b16 %v682
        %v902 = vunpack.c.l.b16 %v683
        %v903 = vunpack.c.h.b16 %v683
        %v904 = vunpack.c.l.b16 %v684
        %v905 = vunpack.c.h.b16 %v684
        %v906 = vunpack.c.l.b16 %v685
        %v907 = vunpack.c.h.b16 %v685
        %v908 = vunpack.c.l.b16 %v686
        %v909 = vunpack.c.h.b16 %v686
        %v910 = vunpack.c.l.b16 %v687
        %v911 = vunpack.c.h.b16 %v687
        %v912 = vunpack.c.l.b16 %v688
        %v913 = vunpack.c.h.b16 %v688
        %v914 = vunpack.c.l.b16 %v689
        %v915 = vunpack.c.h.b16 %v689
        %v916 = vpack.c.b16 %v790, %v788
        %v917 = vpack.c.b16 %v791, %v789
        %v918 = vpack.c.b16 %v794, %v792
        %v919 = vpack.c.b16 %v795, %v793
        %v920 = vpack.c.b16 %v798, %v796
        %v921 = vpack.c.b16 %v799, %v797
        %v922 = vpack.c.b16 %v802, %v800
        %v923 = vpack.c.b16 %v803, %v801
        %v924 = vpack.c.b16 %v806, %v804
        %v925 = vpack.c.b16 %v807, %v805
        %v926 = vpack.c.b16 %v810, %v808
        %v927 = vpack.c.b16 %v811, %v809
        %v928 = vpack.c.b16 %v814, %v812
        %v929 = vpack.c.b16 %v815, %v813
        %v930 = vpack.c.b16 %v818, %v816
        %v931 = vpack.c.b16 %v819, %v817
        %v932 = vpack.c.b16 %v822, %v820
        %v933 = vpack.c.b16 %v823, %v821
        %v934 = vpack.c.b16 %v826, %v824
        %v935 = vpack.c.b16 %v827, %v825
        %v936 = vpack.c.b16 %v830, %v828
        %v937 = vpack.c.b16 %v831, %v829
        %v938 = vpack.c.b16 %v834, %v832
        %v939 = vpack.c.b16 %v835, %v833
        %v940 = vpack.c.b16 %v838, %v836
        %v941 = vpack.c.b16 %v839, %v837
        %v942 = vpack.c.b16 %v842, %v840
        %v943 = vpack.c.b16 %v843, %v841
        %v944 = vpack.c.b16 %v846, %v844
        %v945 = vpack.c.b16 %v847, %v845
        %v946 = vpack.c.b16 %v850, %v848
        %v947 = vpack.c.b16 %v851, %v849
        %v948 = vpack.c.b16 %v854, %v852
        %v949 = vpack.c.b16 %v855, %v853
        %v950 = vpack.c.b16 %v858, %v856
        %v951 = vpack.c.b16 %v859, %v857
        %v952 = vpack.c.b16 %v862, %v860
        %v953 = vpack.c.b16 %v863, %v861
        %v954 = vpack.c.b16 %v866, %v864
        %v955 = vpack.c.b16 %v867, %v865
        %v956 = vpack.c.b16 %v870, %v868
        %v957 = vpack.c.b16 %v871, %v869
        %v958 = vpack.c.b16 %v874, %v872
        %v959 = vpack.c.b16 %v875, %v873
        %v960 = vpack.c.b16 %v878, %v876
        %v961 = vpack.c.b16 %v879, %v877
        %v962 = vpack.c.b16 %v882, %v880
        %v963 = vpack.c.b16 %v883, %v881
        %v964 = vpack.c.b16 %v886, %v884
        %v965 = vpack.c.b16 %v887, %v885
        %v966 = vpack.c.b16 %v890, %v888
        %v967 = vpack.c.b16 %v891, %v889
        %v968 = vpack.c.b16 %v894, %v892
        %v969 = vpack.c.b16 %v895, %v893
        %v970 = vpack.c.b16 %v898, %v896
        %v971 = vpack.c.b16 %v899, %v897
        %v972 = vpack.c.b16 %v902, %v900
        %v973 = vpack.c.b16 %v903, %v901
        %v974 = vpack.c.b16 %v906, %v904
        %v975 = vpack.c.b16 %v907, %v905
        %v976 = vpack.c.b16 %v910, %v908
        %v977 = vpack.c.b16 %v911, %v909
        %v978 = vpack.c.b16 %v914, %v912
        %v979 = vpack.c.b16 %v915, %v913
        %1044 = vmatprep.subr.bf16.mxu0 %v917
        %1045 = vmatpush1.bf16.msra.mxu0 %v916
        %1046 = vmatprep.subr.bf16.mxu0 %v919
        %1047 = vmatpush1.bf16.msra.mxu0 %v918
        %1048 = vmatprep.subr.bf16.mxu0 %v921
        %1049 = vmatpush1.bf16.msra.mxu0 %v920
        %1050 = vmatprep.subr.bf16.mxu0 %v923
        %1051 = vmatpush1.bf16.msra.mxu0 %v922
        %1052 = vmatprep.subr.bf16.mxu0 %v925
        %1053 = vmatpush1.bf16.msra.mxu0 %v924
        %1054 = vmatprep.subr.bf16.mxu0 %v927
        %1055 = vmatpush1.bf16.msra.mxu0 %v926
        %1056 = vmatprep.subr.bf16.mxu0 %v929
        %1057 = vmatpush1.bf16.msra.mxu0 %v928
        %1058 = vmatprep.subr.bf16.mxu0 %v931
        %1059 = vmatpush1.bf16.msra.mxu0 %v930
        %1060 = vmatprep.subr.bf16.mxu0 %v933
        %1061 = vmatpush1.bf16.msra.mxu0 %v932
        %1062 = vmatprep.subr.bf16.mxu0 %v935
        %1063 = vmatpush1.bf16.msra.mxu0 %v934
        %1064 = vmatprep.subr.bf16.mxu0 %v937
        %1065 = vmatpush1.bf16.msra.mxu0 %v936
        %1066 = vmatprep.subr.bf16.mxu0 %v939
        %1067 = vmatpush1.bf16.msra.mxu0 %v938
        %1068 = vmatprep.subr.bf16.mxu0 %v941
        %1069 = vmatpush1.bf16.msra.mxu0 %v940
        %1070 = vmatprep.subr.bf16.mxu0 %v943
        %1071 = vmatpush1.bf16.msra.mxu0 %v942
        %1072 = vmatprep.subr.bf16.mxu0 %v945
        %1073 = vmatpush1.bf16.msra.mxu0 %v944
        %1074 = vmatprep.subr.bf16.mxu0 %v947
        %1075 = vmatpush1.bf16.msra.mxu0 %v946
        %1076 = vmatprep.mubr.bf16.mxu0 %v709
        %1077 = vmatmul.mubr.bf16.gmra.mrb[0].mxu0 %v708
        %v1078 = vpop.f32.mrb[0].mxu0
        %v1079 = vadd.f32 0.0, %v1078
        %v1080 = vpop.f32.mrb[0].mxu0
        %v1081 = vadd.f32 0.0, %v1080
        %v1082 = vpop.f32.mrb[0].mxu0
        %v1083 = vadd.f32 0.0, %v1082
        %v1084 = vpop.f32.mrb[0].mxu0
        %v1085 = vadd.f32 0.0, %v1084
        %1086 = vmatprep.mubr.bf16.mxu0 %v713
        %1087 = vmatmul.mubr.bf16.gmra.mrb[0].mxu0 %v712
        %v1088 = vpop.f32.mrb[0].mxu0
        %v1089 = vadd.f32 0.0, %v1088
        %v1090 = vpop.f32.mrb[0].mxu0
        %v1091 = vadd.f32 0.0, %v1090
        %v1092 = vpop.f32.mrb[0].mxu0
        %v1093 = vpop.f32.mrb[0].mxu0
        %1094 = vdwg.mxu0
        %1095 = vmatprep.subr.bf16.mxu0 %v949
        %1096 = vmatpush1.bf16.msra.mxu0 %v948
        %1097 = vmatprep.subr.bf16.mxu0 %v951
        %1098 = vmatpush1.bf16.msra.mxu0 %v950
        %1099 = vmatprep.subr.bf16.mxu0 %v953
        %1100 = vmatpush1.bf16.msra.mxu0 %v952
        %1101 = vmatprep.subr.bf16.mxu0 %v955
        %1102 = vmatpush1.bf16.msra.mxu0 %v954
        %1103 = vmatprep.subr.bf16.mxu0 %v957
        %1104 = vmatpush1.bf16.msra.mxu0 %v956
        %1105 = vmatprep.subr.bf16.mxu0 %v959
        %1106 = vmatpush1.bf16.msra.mxu0 %v958
        %1107 = vmatprep.subr.bf16.mxu0 %v961
        %1108 = vmatpush1.bf16.msra.mxu0 %v960
        %1109 = vmatprep.subr.bf16.mxu0 %v963
        %1110 = vmatpush1.bf16.msra.mxu0 %v962
        %1111 = vmatprep.subr.bf16.mxu0 %v965
        %1112 = vmatpush1.bf16.msra.mxu0 %v964
        %1113 = vmatprep.subr.bf16.mxu0 %v967
        %1114 = vmatpush1.bf16.msra.mxu0 %v966
        %1115 = vmatprep.subr.bf16.mxu0 %v969
        %1116 = vmatpush1.bf16.msra.mxu0 %v968
        %1117 = vmatprep.subr.bf16.mxu0 %v971
        %1118 = vmatpush1.bf16.msra.mxu0 %v970
        %1119 = vmatprep.subr.bf16.mxu0 %v973
        %1120 = vmatpush1.bf16.msra.mxu0 %v972
        %1121 = vmatprep.subr.bf16.mxu0 %v975
        %1122 = vmatpush1.bf16.msra.mxu0 %v974
        %1123 = vmatprep.subr.bf16.mxu0 %v977
        %1124 = vmatpush1.bf16.msra.mxu0 %v976
        %1125 = vmatprep.subr.bf16.mxu0 %v979
        %1126 = vmatpush1.bf16.msra.mxu0 %v978
        %1127 = vmatprep.mubr.bf16.mxu0 %v711
        %1128 = vmatmul.mubr.bf16.gmra.mrb[0].mxu0 %v710
        %v1129 = vpop.f32.mrb[0].mxu0
        %v1130 = vadd.f32 %v1079, %v1129
        %v1131 = vpop.f32.mrb[0].mxu0
        %v1132 = vadd.f32 %v1081, %v1131
        %v1133 = vpop.f32.mrb[0].mxu0
        %v1134 = vadd.f32 %v1083, %v1133
        %v1135 = vpop.f32.mrb[0].mxu0
        %v1136 = vadd.f32 %v1085, %v1135
        %1137 = vmatprep.mubr.bf16.mxu0 %v715
        %1138 = vmatmul.mubr.bf16.gmra.mrb[0].mxu0 %v714
        %v1139 = vpop.f32.mrb[0].mxu0
        %v1140 = vadd.f32 %v1089, %v1139
        %v1141 = vpop.f32.mrb[0].mxu0
        %v1142 = vadd.f32 %v1091, %v1141
        %v1143 = vpop.f32.mrb[0].mxu0
        %v1144 = vpop.f32.mrb[0].mxu0
        %1145 = vdwg.mxu0
        %v1146 = vadd.f32 %v614, %v1130
        %v1147 = vadd.f32 %v615, %v1132
        %v1148 = vadd.f32 %v616, %v1134
        %v1149 = vadd.f32 %v617, %v1136
        %v1150 = vadd.f32 %v618, %v1140
        %v1151 = vadd.f32 %v619, %v1142
        %1152 = vst [vmem:[#allocation2] sm:$0xff] %v1146
        %1153 = vst [vmem:[#allocation2 + $0x8] sm:$0xff] %v1147
        %1154 = vst [vmem:[#allocation2 + $0x10] sm:$0xff] %v1148
        %1155 = vst [vmem:[#allocation2 + $0x18] sm:$0xff] %v1149
        %1156 = vst [vmem:[#allocation2 + $0x20] sm:$0xff] %v1150
        %1157 = vst [vmem:[#allocation2 + $0x28] sm:$0xff] %v1151
        %p1158 = scmp.eq.s32.totalorder %s22, 7
        // Predicated region
        $region102: #{discriminator_forward.8} parent=88 // pred_check
          %p1159 = pneg %p1158
        $region103: #{discriminator_forward.8} parent=88 // pred_check_branch
          %1161 = sbr.rel (%p1159) target = $region105
        $region104: #{discriminator_forward.8} parent=88 // pred_region
          %v1162 = vld [vmem:[#allocation2] sm:$0xff]
          %v1163 = vld [vmem:[#allocation2 + $0x8] sm:$0xff]
          %v1164 = vld [vmem:[#allocation2 + $0x10] sm:$0xff]
          %v1165 = vld [vmem:[#allocation2 + $0x18] sm:$0xff]
          %v1166 = vld [vmem:[#allocation2 + $0x20] sm:$0xff]
          %v1167 = vld [vmem:[#allocation2 + $0x28] sm:$0xff]
          %v1168 = vlaneseq
          %v1169 = vshrl.u32 %v1168, 7
          %v1170 = vadd.s32 %v1169, 8
          %v1171 = vadd.s32 %v1169, 16
          %vm1172 = vcmp.lt.s32.totalorder %v1169, 18
          %vm1173 = vcmp.lt.s32.totalorder %v1170, 18
          %vm1174 = vcmp.lt.s32.totalorder %v1171, 18
          %v1175 = vsel %vm1172, 1, 0
          %v1176 = vsel %vm1173, 1, 0
          %v1177 = vsel %vm1174, 1, 0
          %vm1178 = vcmp.eq.s32.totalorder %v1175, 1
          %vm1179 = vcmp.eq.s32.totalorder %v1176, 1
          %vm1180 = vcmp.eq.s32.totalorder %v1177, 1
          %v1181 = vsel %vm1178, %v1162, 0.0
          %v1182 = vsel %vm1178, %v1163, 0.0
          %v1183 = vsel %vm1179, %v1164, 0.0
          %v1184 = vsel %vm1179, %v1165, 0.0
          %v1185 = vsel %vm1180, %v1166, 0.0
          %v1186 = vsel %vm1180, %v1167, 0.0
          %v1187 = vadd.f32 %v1181, %v1183
          %v1188 = vadd.f32 %v1187, %v1185
          %v1189 = vrot.slane %v1188, 4
          %v1190 = vadd.f32 %v1188, %v1189
          %v1191 = vrot.slane %v1190, 2
          %v1192 = vadd.f32 %v1190, %v1191
          %v1193 = vrot.slane %v1192, 1
          %v1194 = vadd.f32 %v1192, %v1193
          %v1195 = vadd.f32 %v1182, %v1184
          %v1196 = vadd.f32 %v1195, %v1186
          %v1197 = vrot.slane %v1196, 4
          %v1198 = vadd.f32 %v1196, %v1197
          %v1199 = vrot.slane %v1198, 2
          %v1200 = vadd.f32 %v1198, %v1199
          %v1201 = vrot.slane %v1200, 1
          %v1202 = vadd.f32 %v1200, %v1201
          %v1203 = vmul.f32 %v1194, 0.055555556
          %v1204 = vmul.f32 %v1202, 0.055555556
          %v1205 = vsub.f32 %v1162, %v1203
          %v1206 = vsub.f32 %v1163, %v1204
          %v1207 = vsub.f32 %v1164, %v1203
          %v1208 = vsub.f32 %v1165, %v1204
          %v1209 = vsub.f32 %v1166, %v1203
          %v1210 = vsub.f32 %v1167, %v1204
          %v1211 = vmul.f32 %v1205, %v1205
          %v1212 = vmul.f32 %v1206, %v1206
          %v1213 = vmul.f32 %v1207, %v1207
          %v1214 = vmul.f32 %v1208, %v1208
          %v1215 = vmul.f32 %v1209, %v1209
          %v1216 = vmul.f32 %v1210, %v1210
          %v1217 = vsel %vm1178, %v1211, 0.0
          %v1218 = vsel %vm1178, %v1212, 0.0
          %v1219 = vsel %vm1179, %v1213, 0.0
          %v1220 = vsel %vm1179, %v1214, 0.0
          %v1221 = vsel %vm1180, %v1215, 0.0
          %v1222 = vsel %vm1180, %v1216, 0.0
          %v1223 = vadd.f32 %v1217, %v1219
          %v1224 = vadd.f32 %v1223, %v1221
          %v1225 = vrot.slane %v1224, 4
          %v1226 = vadd.f32 %v1224, %v1225
          %v1227 = vrot.slane %v1226, 2
          %v1228 = vadd.f32 %v1226, %v1227
          %v1229 = vrot.slane %v1228, 1
          %v1230 = vadd.f32 %v1228, %v1229
          %v1231 = vadd.f32 %v1218, %v1220
          %v1232 = vadd.f32 %v1231, %v1222
          %v1233 = vrot.slane %v1232, 4
          %v1234 = vadd.f32 %v1232, %v1233
          %v1235 = vrot.slane %v1234, 2
          %v1236 = vadd.f32 %v1234, %v1235
          %v1237 = vrot.slane %v1236, 1
          %v1238 = vadd.f32 %v1236, %v1237
          %v1239 = vmul.f32 %v1230, 0.055555556
          %v1240 = vmul.f32 %v1238, 0.055555556
          %v1241 = vadd.f32 %v1239, 1e-05
          %v1242 = vadd.f32 %v1240, 1e-05
          %v1243 = vrsqrt.pop %v1241
          %v1244 = vrsqrt.pop %v1242
          %v1245 = vmul.f32 %v1205, %v1243
          %v1246 = vmul.f32 %v1206, %v1244
          %v1247 = vmul.f32 %v1207, %v1243
          %v1248 = vmul.f32 %v1208, %v1244
          %v1249 = vmul.f32 %v1209, %v1243
          %v1250 = vmul.f32 %v1210, %v1244
          %v1251 = vld [vmem:[%s595] sm:$0x3]
          %v1253 = vlaneseq
          %v1254 = vshrl.u32 %v1253, 7
          %v1255 = vsub.s32 0, %v1254
          %v1256 = vrot.slane %v1251, %v1255
          %v1257 = vlaneseq
          %v1258 = vshrl.u32 %v1257, 7
          %v1259 = vsub.s32 1, %v1258
          %v1260 = vrot.slane %v1251, %v1259
          %v1263 = vmul.f32 %v1245, %v1256
          %v1264 = vmul.f32 %v1246, %v1260
          %v1265 = vmul.f32 %v1247, %v1256
          %v1266 = vmul.f32 %v1248, %v1260
          %v1267 = vmul.f32 %v1249, %v1256
          %v1268 = vmul.f32 %v1250, %v1260
          %v1269 = vld [vmem:[%s600] sm:$0x3]
          %v1271 = vlaneseq
          %v1272 = vshrl.u32 %v1271, 7
          %v1273 = vsub.s32 0, %v1272
          %v1274 = vrot.slane %v1269, %v1273
          %v1275 = vlaneseq
          %v1276 = vshrl.u32 %v1275, 7
          %v1277 = vsub.s32 1, %v1276
          %v1278 = vrot.slane %v1269, %v1277
          %v1281 = vadd.f32 %v1263, %v1274
          %v1282 = vadd.f32 %v1264, %v1278
          %v1283 = vadd.f32 %v1265, %v1274
          %v1284 = vadd.f32 %v1266, %v1278
          %v1285 = vadd.f32 %v1267, %v1274
          %v1286 = vadd.f32 %v1268, %v1278
          %vm1287 = vcmp.ge.f32.partialorder %v1281, 0.0
          %vm1288 = vcmp.ge.f32.partialorder %v1282, 0.0
          %vm1289 = vcmp.ge.f32.partialorder %v1283, 0.0
          %vm1290 = vcmp.ge.f32.partialorder %v1284, 0.0
          %vm1291 = vcmp.ge.f32.partialorder %v1285, 0.0
          %vm1292 = vcmp.ge.f32.partialorder %v1286, 0.0
          %v1293 = vmul.f32 %v1281, 0.2
          %v1294 = vmul.f32 %v1282, 0.2
          %v1295 = vmul.f32 %v1283, 0.2
          %v1296 = vmul.f32 %v1284, 0.2
          %v1297 = vmul.f32 %v1285, 0.2
          %v1298 = vmul.f32 %v1286, 0.2
          %v1299 = vsel %vm1287, %v1281, %v1293
          %v1300 = vsel %vm1288, %v1282, %v1294
          %v1301 = vsel %vm1289, %v1283, %v1295
          %v1302 = vsel %vm1290, %v1284, %v1296
          %v1303 = vsel %vm1291, %v1285, %v1297
          %v1304 = vsel %vm1292, %v1286, %v1298
          %1305 = vst [vmem:[%s587] sm:$0xff] %v1299
          %1306 = vst [vmem:[%s587 + $0x8] sm:$0xff] %v1300
          %1307 = vst [vmem:[%s587 + $0x10] sm:$0xff] %v1301
          %1308 = vst [vmem:[%s587 + $0x18] sm:$0xff] %v1302
          %1309 = vst [vmem:[%s587 + $0x20] sm:$0xff] %v1303
          %1310 = vst [vmem:[%s587 + $0x28] sm:$0xff] %v1304
        $region105: #{discriminator_forward.8} parent=88 // pred_fallthru
          _
        %s1311 = sand.u32 %s152, 1
        %s1312 = sand.u32 %s152, 1
        %s1313 = smul.addr %s1312, 48
        %s1314 = scalar_lea.vmem [#allocation5], %s1313
        // Predicated region
        $region106: #{discriminator_forward.8} parent=88 // pred_check
          %p1315 = pneg %p162
        $region107: #{discriminator_forward.8} parent=88 // pred_check_branch
          %1317 = sbr.rel (%p1315) target = $region109
        $region108: #{discriminator_forward.8} parent=88 // pred_region
          %s1318 = smul.u32 3, %s20
          %s1319 = smul.u32 2, %s21
          %s1320 = smul.addr %s1318, 4
          %s1321 = sadd.s32 %s1319, %s1320
          %s1322 = smul.addr %s1321, 8
          %s1323 = scalar_lea.vmem %s4, %s1322
          // Predicated region
          $region110: #{discriminator_forward.8} parent=108 // pred_check
            _
          $region111: #{discriminator_forward.8} parent=108 // pred_check_branch
            %1325 = sbr.rel (0) target = $region113
          $region112: #{discriminator_forward.8} parent=108 // pred_region
            // Predicated region
            $region114: #{discriminator_forward.8} parent=112 // pred_check
              _
            $region115: #{discriminator_forward.8} parent=112 // pred_check_branch
              %1327 = sbr.rel (0) target = $region117
            $region116: #{discriminator_forward.8} parent=112 // pred_region
              loop: start=0, step=1, limit=1
              $region118: #{discriminator_forward.8} parent=116 // loop_pre_header
                _
              $region119: #{discriminator_forward.8} parent=116 // loop_header
                %s1329 = sphi 0, %s1333
                %p1330 = scmp.ge.s32.totalorder %s1329, 1
                %s1334 = sphi %s1314, %s1314
                %s1335 = sphi %s1323, %s1323
              $region120: #{discriminator_forward.8} parent=116 // loop_header_branch
                %1332 = sbr.rel (%p1330) target = $region124
              $region121: #{discriminator_forward.8} parent=116 // loop_body
                %v1336 = vld [vmem:[%s1334] sm:$0xff]
                %1337 = vst [vmem:[%s1335] sm:$0xff] %v1336
                %v1338 = vld [vmem:[%s1334 + $0x8] sm:$0xff]
                %1339 = vst [vmem:[%s1335 + $0x8] sm:$0xff] %v1338
                %v1340 = vld [vmem:[%s1334 + $0x10] sm:$0xff]
                %1341 = vst [vmem:[%s1335 + $0x20] sm:$0xff] %v1340
                %v1342 = vld [vmem:[%s1334 + $0x18] sm:$0xff]
                %1343 = vst [vmem:[%s1335 + $0x28] sm:$0xff] %v1342
                %v1344 = vld [vmem:[%s1334 + $0x20] sm:$0xff]
                %1345 = vst [vmem:[%s1335 + $0x40] sm:$0xff] %v1344
                %v1346 = vld [vmem:[%s1334 + $0x28] sm:$0xff]
                %1347 = vst [vmem:[%s1335 + $0x48] sm:$0xff] %v1346
              $region122: #{discriminator_forward.8} parent=116 // loop_footer
                %s1333 = sadd.s32 1, %s1329
              $region123: #{discriminator_forward.8} parent=116 // loop_footer_branch
                %1328 = sbr.rel target = $region119
              $region124: #{discriminator_forward.8} parent=116 // loop_exit
                _
            $region117: #{discriminator_forward.8} parent=112 // pred_fallthru
              _
            // Predicated region
            $region125: #{discriminator_forward.8} parent=112 // pred_check
              _
            $region126: #{discriminator_forward.8} parent=112 // pred_check_branch
              %1349 = sbr.rel target = $region128
            $region127: #{discriminator_forward.8} parent=112 // pred_region
              _
            $region128: #{discriminator_forward.8} parent=112 // pred_fallthru
              _
          $region113: #{discriminator_forward.8} parent=108 // pred_fallthru
            _
          %1350 = vnop
        $region109: #{discriminator_forward.8} parent=88 // pred_fallthru
          _
      $region89: #{discriminator_forward.8} parent=5 // pred_fallthru
        _
      %p1351 = scmp.le.s32.totalorder 2, %s10
      // Predicated region
      $region129: #{discriminator_forward.8} parent=5 // pred_check
        %p1352 = pneg %p1351
      $region130: #{discriminator_forward.8} parent=5 // pred_check_branch
        %1354 = sbr.rel (%p1352) target = $region132
      $region131: #{discriminator_forward.8} parent=5 // pred_region
        %s1355 = ssub.s32 %s10, 2
        // Predicated region
        $region133: #{discriminator_forward.8} parent=131 // pred_check
          %p1356 = pneg %p168
        $region134: #{discriminator_forward.8} parent=131 // pred_check_branch
          %1358 = sbr.rel (%p1356) target = $region136
        $region135: #{discriminator_forward.8} parent=131 // pred_region
          %s1359 = sand.u32 %s153, 1
          %s1360 = sand.u32 %s153, 1
          %s1361 = smul.addr %s1360, 48
          %s1362 = scalar_lea.vmem [#allocation5], %s1361
        $region136: #{discriminator_forward.8} parent=131 // pred_fallthru
          _
      $region132: #{discriminator_forward.8} parent=5 // pred_fallthru
        _
    $region6: #{discriminator_forward.8} parent=1 // loop_footer
      %s14 = sadd.s32 1, %s10
    $region7: #{discriminator_forward.8} parent=1 // loop_footer_branch
      %9 = sbr.rel target = $region3
    $region8: #{discriminator_forward.8} parent=1 // loop_exit
      _

// kernel: discriminator_forward.9
$region0: #{discriminator_forward.9}
  #allocation0 [shape = 'u32[]', space=smem, size = 0x4, offset = 0x4, fixed_abs, tag = 'smem constant byte address 0x4 - core index']
  #allocation1 [shape = 'u32[144,128]{1,0:T(1,128)}', space=vmem, size = 0x12000, scoped, tag = 'internal scratch']
  #allocation2 [shape = 'f32[8,128]{1,0:T(8,128)}', space=vmem, size = 0x1000, scoped, tag = 'scratch operand']
  %s0 = inlined_call_operand.vmem [shape: bf16[8,8192], index: 0, kind: input, shape index: {}]
  %s1 = inlined_call_operand.vmem [shape: bf16[8192,128], index: 1, kind: input, shape index: {}]
  %s2 = inlined_call_operand.vmem [shape: f32[1,128], index: 2, kind: input, shape index: {}]
  %s3 = inlined_call_operand.vmem [shape: f32[8,128], index: 3, kind: output, shape index: {}]
  %s4 = sld [smem:[#allocation0]]
  $region53: #{discriminator_forward.9} parent=0
    _
  %s6 = ssub.s32 1, %s4
  %s7 = scalar_select 0, %s6, %s4
  loop: start=0, step=1, limit=18
  $region2: #{discriminator_forward.9} parent=0 // loop_pre_header
    _
  $region3: #{discriminator_forward.9} parent=0 // loop_header
    %s9 = sphi 0, %s13
    %p10 = scmp.ge.s32.totalorder %s9, 18
    %s16 = sphi 0, %s35
    %s17 = sphi 0, %s31
    %s18 = sphi 0, %s27
    %s19 = sphi 0, %s16
    %s20 = sphi 0, %s17
    %s21 = sphi 0, %s18
    %s22 = sphi 0, %s19
    %s23 = sphi 0, %s20
    %s24 = sphi 0, %s21
    %s40 = sphi 0, %s42
    %s43 = sphi 0, %s40
    %s44 = sphi 0, %s43
    %s60 = sphi 0, %s44
    %s68 = sphi 0, %s70
    %s71 = sphi 0, %s68
    %s72 = sphi 0, %s71
    %s88 = sphi 0, %s72
    %s94 = sphi 0, %s96
    %s97 = sphi 0, %s94
    %s98 = sphi 0, %s97
    %s114 = sphi 0, %s98
    %s122 = sphi 0, %s124
    %s125 = sphi 0, %s122
    %s126 = sphi 0, %s125
    %s142 = sphi 0, %s126
  $region4: #{discriminator_forward.9} parent=0 // loop_header_branch
    %12 = sbr.rel (%p10) target = $region8
  $region5: #{discriminator_forward.9} parent=0 // loop_body
    %s14 = ssub.s32 %s9, 1
    %s15 = ssub.s32 %s9, 2
    %s25 = sadd.s32 1, %s18
    %p26 = scmp.ge.s32.totalorder %s25, 16
    %s27 = scalar_select %p26, 0, %s25
    %s28 = sadd.s32 1, %s17
    %s29 = scalar_select %p26, %s28, %s17
    %p30 = scmp.ge.s32.totalorder %s29, 1
    %s31 = scalar_select %p30, 0, %s29
    %s32 = sadd.s32 1, %s16
    %s33 = scalar_select %p30, %s32, %s16
    %p34 = scmp.ge.s32.totalorder %s33, 1
    %s35 = scalar_select %p34, 0, %s33
    %s36 = ssub.s32 %s16, %s35
    %s37 = ssub.s32 %s18, %s27
    %s38 = sor.u32 %s36, %s37
    %p39 = scmp.eq.s32.totalorder %s38, 0
    %s41 = sadd.s32 %s40, 1
    %s42 = scalar_select %p39, %s40, %s41
    %p45 = pneg %p39
    %p46 = scmp.eq.s32.totalorder %s9, 15
    %p47 = por %p45, %p46
    %p48 = scmp.ne.s32.totalorder %s40, %s43
    %p49 = scmp.eq.s32.totalorder %s9, 0
    %p50 = por %p48, %p49
    %p51 = scmp.ne.s32.totalorder %s40, %s43
    %p52 = scmp.eq.s32.totalorder %s14, 15
    %p53 = por %p51, %p52
    %p54 = scmp.ne.s32.totalorder %s43, %s44
    %p55 = scmp.eq.s32.totalorder %s14, 0
    %p56 = por %p54, %p55
    %p57 = scmp.ne.s32.totalorder %s43, %s44
    %p58 = scmp.eq.s32.totalorder %s15, 15
    %p59 = por %p57, %p58
    %p61 = scmp.ne.s32.totalorder %s44, %s60
    %p62 = scmp.eq.s32.totalorder %s15, 0
    %p63 = por %p61, %p62
    %s64 = ssub.s32 %s18, %s27
    %s65 = ssub.s32 %s17, %s31
    %s66 = sor.u32 %s64, %s65
    %p67 = scmp.eq.s32.totalorder %s66, 0
    %s69 = sadd.s32 %s68, 1
    %s70 = scalar_select %p67, %s68, %s69
    %p73 = pneg %p67
    %p74 = scmp.eq.s32.totalorder %s9, 15
    %p75 = por %p73, %p74
    %p76 = scmp.ne.s32.totalorder %s68, %s71
    %p77 = scmp.eq.s32.totalorder %s9, 0
    %p78 = por %p76, %p77
    %p79 = scmp.ne.s32.totalorder %s68, %s71
    %p80 = scmp.eq.s32.totalorder %s14, 15
    %p81 = por %p79, %p80
    %p82 = scmp.ne.s32.totalorder %s71, %s72
    %p83 = scmp.eq.s32.totalorder %s14, 0
    %p84 = por %p82, %p83
    %p85 = scmp.ne.s32.totalorder %s71, %s72
    %p86 = scmp.eq.s32.totalorder %s15, 15
    %p87 = por %p85, %p86
    %p89 = scmp.ne.s32.totalorder %s72, %s88
    %p90 = scmp.eq.s32.totalorder %s15, 0
    %p91 = por %p89, %p90
    %s92 = ssub.s32 %s17, %s31
    %p93 = scmp.eq.s32.totalorder %s92, 0
    %s95 = sadd.s32 %s94, 1
    %s96 = scalar_select %p93, %s94, %s95
    %p99 = pneg %p93
    %p100 = scmp.eq.s32.totalorder %s9, 15
    %p101 = por %p99, %p100
    %p102 = scmp.ne.s32.totalorder %s94, %s97
    %p103 = scmp.eq.s32.totalorder %s9, 0
    %p104 = por %p102, %p103
    %p105 = scmp.ne.s32.totalorder %s94, %s97
    %p106 = scmp.eq.s32.totalorder %s14, 15
    %p107 = por %p105, %p106
    %p108 = scmp.ne.s32.totalorder %s97, %s98
    %p109 = scmp.eq.s32.totalorder %s14, 0
    %p110 = por %p108, %p109
    %p111 = scmp.ne.s32.totalorder %s97, %s98
    %p112 = scmp.eq.s32.totalorder %s15, 15
    %p113 = por %p111, %p112
    %p115 = scmp.ne.s32.totalorder %s98, %s114
    %p116 = scmp.eq.s32.totalorder %s15, 0
    %p117 = por %p115, %p116
    %s118 = ssub.s32 %s16, %s35
    %s119 = ssub.s32 %s17, %s31
    %s120 = sor.u32 %s118, %s119
    %p121 = scmp.eq.s32.totalorder %s120, 0
    %s123 = sadd.s32 %s122, 1
    %s124 = scalar_select %p121, %s122, %s123
    %p127 = pneg %p121
    %p128 = scmp.eq.s32.totalorder %s9, 15
    %p129 = por %p127, %p128
    %p130 = scmp.ne.s32.totalorder %s122, %s125
    %p131 = scmp.eq.s32.totalorder %s9, 0
    %p132 = por %p130, %p131
    %p133 = scmp.ne.s32.totalorder %s122, %s125
    %p134 = scmp.eq.s32.totalorder %s14, 15
    %p135 = por %p133, %p134
    %p136 = scmp.ne.s32.totalorder %s125, %s126
    %p137 = scmp.eq.s32.totalorder %s14, 0
    %p138 = por %p136, %p137
    %p139 = scmp.ne.s32.totalorder %s125, %s126
    %p140 = scmp.eq.s32.totalorder %s15, 15
    %p141 = por %p139, %p140
    %p143 = scmp.ne.s32.totalorder %s126, %s142
    %p144 = scmp.eq.s32.totalorder %s15, 0
    %p145 = por %p143, %p144
    %p146 = scmp.le.s32.totalorder 1, %s9
    %p147 = scmp.lt.s32.totalorder %s9, 17
    %p148 = pnand %p146, %p147
    %p149 = pneg %p148
    // Predicated region
    $region9: #{discriminator_forward.9} parent=5 // pred_check
      _
    $region10: #{discriminator_forward.9} parent=5 // pred_check_branch
      %151 = sbr.rel (%p148) target = $region12
    $region11: #{discriminator_forward.9} parent=5 // pred_region
      %s152 = ssub.s32 %s9, 1
      // Predicated region
      $region13: #{discriminator_forward.9} parent=11 // pred_check
        %p153 = pneg %p110
      $region14: #{discriminator_forward.9} parent=11 // pred_check_branch
        %155 = sbr.rel (%p153) target = $region16
      $region15: #{discriminator_forward.9} parent=11 // pred_region
        %p156 = scmp.lt.s32.totalorder %s20, 0
        %s157 = scalar_select %p156, %s20, 0
        %s158 = scalar_lea.vmem %s2, %s157
      $region16: #{discriminator_forward.9} parent=11 // pred_fallthru
        _
    $region12: #{discriminator_forward.9} parent=5 // pred_fallthru
      _
    %p159 = scmp.lt.s32.totalorder %s9, 16
    // Predicated region
    $region17: #{discriminator_forward.9} parent=5 // pred_check
      %p160 = pneg %p159
    $region18: #{discriminator_forward.9} parent=5 // pred_check_branch
      %162 = sbr.rel (%p160) target = $region20
    $region19: #{discriminator_forward.9} parent=5 // pred_region
      // Predicated region
      $region21: #{discriminator_forward.9} parent=19 // pred_check
        %p163 = pneg %p50
      $region22: #{discriminator_forward.9} parent=19 // pred_check_branch
        %165 = sbr.rel (%p163) target = $region24
      $region23: #{discriminator_forward.9} parent=19 // pred_region
        %s166 = smul.u32 4, %s18
        %p167 = scmp.lt.s32.totalorder %s16, 0
        %s168 = scalar_select %p167, %s16, 0
        %p169 = scmp.lt.s32.totalorder %s166, 63
        %s170 = scalar_select %p169, %s166, 63
        %s171 = smul.addr %s168, 64
        %s172 = sadd.s32 %s170, %s171
        %s173 = smul.addr %s172, 4
        %s174 = scalar_lea.vmem %s0, %s173
        %s175 = smul.u32 4, %s18
      $region24: #{discriminator_forward.9} parent=19 // pred_fallthru
        _
      // Predicated region
      $region25: #{discriminator_forward.9} parent=19 // pred_check
        %p176 = pneg %p78
      $region26: #{discriminator_forward.9} parent=19 // pred_check_branch
        %178 = sbr.rel (%p176) target = $region28
      $region27: #{discriminator_forward.9} parent=19 // pred_region
        %s179 = smul.u32 64, %s18
        %p180 = scmp.lt.s32.totalorder %s179, 1023
        %s181 = scalar_select %p180, %s179, 1023
        %p182 = scmp.lt.s32.totalorder %s17, 0
        %s183 = scalar_select %p182, %s17, 0
        %s184 = sadd.s32 %s183, %s181
        %s185 = smul.addr %s184, 4
        %s186 = scalar_lea.vmem %s1, %s185
        %s187 = smul.u32 64, %s18
      $region28: #{discriminator_forward.9} parent=19 // pred_fallthru
        _
    $region20: #{discriminator_forward.9} parent=5 // pred_fallthru
      _
    %p188 = scmp.le.s32.totalorder 1, %s9
    %p189 = scmp.lt.s32.totalorder %s9, 17
    %p190 = pnand %p188, %p189
    %p191 = pneg %p190
    // Predicated region
    $region29: #{discriminator_forward.9} parent=5 // pred_check
      _
    $region30: #{discriminator_forward.9} parent=5 // pred_check_branch
      %193 = sbr.rel (%p190) target = $region32
    $region31: #{discriminator_forward.9} parent=5 // pred_region
      %s194 = ssub.s32 %s9, 1
      %s195 = smul.u32 4, %s21
      %p196 = scmp.lt.s32.totalorder %s19, 0
      %s197 = scalar_select %p196, %s19, 0
      %p198 = scmp.lt.s32.totalorder %s195, 63
      %s199 = scalar_select %p198, %s195, 63
      %s200 = smul.addr %s197, 64
      %s201 = sadd.s32 %s199, %s200
      %s202 = smul.addr %s201, 4
      %s203 = scalar_lea.vmem %s0, %s202
      %p204 = pneg %p56
      %p205 = pneg %p53
      %s206 = smul.u32 64, %s21
      %p207 = scmp.lt.s32.totalorder %s206, 1023
      %s208 = scalar_select %p207, %s206, 1023
      %p209 = scmp.lt.s32.totalorder %s20, 0
      %s210 = scalar_select %p209, %s20, 0
      %s211 = sadd.s32 %s210, %s208
      %s212 = smul.addr %s211, 4
      %s213 = scalar_lea.vmem %s1, %s212
      %p214 = pneg %p84
      %p215 = pneg %p81
      %p216 = scmp.lt.s32.totalorder %s20, 0
      %s217 = scalar_select %p216, %s20, 0
      %s218 = scalar_lea.vmem %s2, %s217
      %p219 = pneg %p110
      %p220 = pneg %p107
      %p221 = pneg %p138
      %p222 = pneg %p135
      %p223 = scmp.lt.s32.totalorder %s19, 0
      %s224 = scalar_select %p223, %s19, 0
      %p225 = scmp.lt.s32.totalorder %s20, 0
      %s226 = scalar_select %p225, %s20, 0
      %s227 = sadd.s32 %s226, %s224
      %s228 = smul.addr %s227, 8
      %s229 = scalar_lea.vmem %s3, %s228
      %s230 = smul.u32 4, %s21
      %p231 = scmp.lt.s32.totalorder %s19, 0
      %s232 = scalar_select %p231, %s19, 0
      %p233 = scmp.lt.s32.totalorder %s230, 63
      %s234 = scalar_select %p233, %s230, 63
      %s235 = smul.addr %s232, 64
      %s236 = sadd.s32 %s234, %s235
      %s237 = smul.addr %s236, 4
      %s238 = scalar_lea.vmem %s0, %s237
      %s239 = smul.u32 4, %s21
      %s240 = smul.u32 64, %s21
      %p241 = scmp.lt.s32.totalorder %s240, 1023
      %s242 = scalar_select %p241, %s240, 1023
      %p243 = scmp.lt.s32.totalorder %s20, 0
      %s244 = scalar_select %p243, %s20, 0
      %s245 = sadd.s32 %s244, %s242
      %s246 = smul.addr %s245, 4
      %s247 = scalar_lea.vmem %s1, %s246
      %s248 = smul.u32 64, %s21
      %p249 = scmp.lt.s32.totalorder %s20, 0
      %s250 = scalar_select %p249, %s20, 0
      %s251 = scalar_lea.vmem %s2, %s250
      %p252 = scmp.lt.s32.totalorder %s19, 0
      %s253 = scalar_select %p252, %s19, 0
      %p254 = scmp.lt.s32.totalorder %s20, 0
      %s255 = scalar_select %p254, %s20, 0
      %s256 = sadd.s32 %s255, %s253
      %s257 = smul.addr %s256, 8
      %s258 = scalar_lea.vmem %s3, %s257
      %p260 = scmp.eq.s32.totalorder %s21, 0
      // Predicated region
      $region33: #{discriminator_forward.9} parent=31 // pred_check
        %p261 = pneg %p260
      $region34: #{discriminator_forward.9} parent=31 // pred_check_branch
        %263 = sbr.rel (%p261) target = $region36
      $region35: #{discriminator_forward.9} parent=31 // pred_region
        %264 = vst [vmem:[#allocation2] sm:$0xff] 0.0
      $region36: #{discriminator_forward.9} parent=31 // pred_fallthru
        _
      %v265 = vld [vmem:[#allocation2] sm:$0xff]
      %v266 = vld [vmem:[%s238] sm:$0xff]
      %v267 = vld [vmem:[%s238 + $0x8] sm:$0xff]
      %v268 = vld [vmem:[%s247] sm:$0xf]
      %v269 = vld [vmem:[%s247 + $0x4] sm:$0xf]
      %v270 = vld [vmem:[%s247 + $0x8] sm:$0xf]
      %v271 = vld [vmem:[%s247 + $0xc] sm:$0xf]
      %v272 = vld [vmem:[%s247 + $0x10] sm:$0xf]
      %v273 = vld [vmem:[%s247 + $0x14] sm:$0xf]
      %v274 = vld [vmem:[%s247 + $0x18] sm:$0xf]
      %v275 = vld [vmem:[%s247 + $0x1c] sm:$0xf]
      %v276 = vld [vmem:[%s247 + $0x20] sm:$0xf]
      %v277 = vld [vmem:[%s247 + $0x24] sm:$0xf]
      %v278 = vld [vmem:[%s247 + $0x28] sm:$0xf]
      %v279 = vld [vmem:[%s247 + $0x2c] sm:$0xf]
      %v280 = vld [vmem:[%s247 + $0x30] sm:$0xf]
      %v281 = vld [vmem:[%s247 + $0x34] sm:$0xf]
      %v282 = vld [vmem:[%s247 + $0x38] sm:$0xf]
      %v283 = vld [vmem:[%s247 + $0x3c] sm:$0xf]
      %v284 = vld [vmem:[%s247 + $0x40] sm:$0xf]
      %v285 = vld [vmem:[%s247 + $0x44] sm:$0xf]
      %v286 = vld [vmem:[%s247 + $0x48] sm:$0xf]
      %v287 = vld [vmem:[%s247 + $0x4c] sm:$0xf]
      %v288 = vld [vmem:[%s247 + $0x50] sm:$0xf]
      %v289 = vld [vmem:[%s247 + $0x54] sm:$0xf]
      %v290 = vld [vmem:[%s247 + $0x58] sm:$0xf]
      %v291 = vld [vmem:[%s247 + $0x5c] sm:$0xf]
      %v292 = vld [vmem:[%s247 + $0x60] sm:$0xf]
      %v293 = vld [vmem:[%s247 + $0x64] sm:$0xf]
      %v294 = vld [vmem:[%s247 + $0x68] sm:$0xf]
      %v295 = vld [vmem:[%s247 + $0x6c] sm:$0xf]
      %v296 = vld [vmem:[%s247 + $0x70] sm:$0xf]
      %v297 = vld [vmem:[%s247 + $0x74] sm:$0xf]
      %v298 = vld [vmem:[%s247 + $0x78] sm:$0xf]
      %v299 = vld [vmem:[%s247 + $0x7c] sm:$0xf]
      %v300 = vld [vmem:[%s247 + $0x80] sm:$0xf]
      %v301 = vld [vmem:[%s247 + $0x84] sm:$0xf]
      %v302 = vld [vmem:[%s247 + $0x88] sm:$0xf]
      %v303 = vld [vmem:[%s247 + $0x8c] sm:$0xf]
      %v304 = vld [vmem:[%s247 + $0x90] sm:$0xf]
      %v305 = vld [vmem:[%s247 + $0x94] sm:$0xf]
      %v306 = vld [vmem:[%s247 + $0x98] sm:$0xf]
      %v307 = vld [vmem:[%s247 + $0x9c] sm:$0xf]
      %v308 = vld [vmem:[%s247 + $0xa0] sm:$0xf]
      %v309 = vld [vmem:[%s247 + $0xa4] sm:$0xf]
      %v310 = vld [vmem:[%s247 + $0xa8] sm:$0xf]
      %v311 = vld [vmem:[%s247 + $0xac] sm:$0xf]
      %v312 = vld [vmem:[%s247 + $0xb0] sm:$0xf]
      %v313 = vld [vmem:[%s247 + $0xb4] sm:$0xf]
      %v314 = vld [vmem:[%s247 + $0xb8] sm:$0xf]
      %v315 = vld [vmem:[%s247 + $0xbc] sm:$0xf]
      %v316 = vld [vmem:[%s247 + $0xc0] sm:$0xf]
      %v317 = vld [vmem:[%s247 + $0xc4] sm:$0xf]
      %v318 = vld [vmem:[%s247 + $0xc8] sm:$0xf]
      %v319 = vld [vmem:[%s247 + $0xcc] sm:$0xf]
      %v320 = vld [vmem:[%s247 + $0xd0] sm:$0xf]
      %v321 = vld [vmem:[%s247 + $0xd4] sm:$0xf]
      %v322 = vld [vmem:[%s247 + $0xd8] sm:$0xf]
      %v323 = vld [vmem:[%s247 + $0xdc] sm:$0xf]
      %v324 = vld [vmem:[%s247 + $0xe0] sm:$0xf]
      %v325 = vld [vmem:[%s247 + $0xe4] sm:$0xf]
      %v326 = vld [vmem:[%s247 + $0xe8] sm:$0xf]
      %v327 = vld [vmem:[%s247 + $0xec] sm:$0xf]
      %v328 = vld [vmem:[%s247 + $0xf0] sm:$0xf]
      %v329 = vld [vmem:[%s247 + $0xf4] sm:$0xf]
      %v330 = vld [vmem:[%s247 + $0xf8] sm:$0xf]
      %v331 = vld [vmem:[%s247 + $0xfc] sm:$0xf]
      %v334 = vunpack.c.l.b16 %v266
      %v335 = vunpack.c.h.b16 %v266
      %v336 = vunpack.c.l.b16 %v267
      %v337 = vunpack.c.h.b16 %v267
      %v338 = vpack.c.b16 %v334, %v334
      %v339 = vpack.c.b16 %v335, %v335
      %v340 = vpack.c.b16 %v336, %v336
      %v341 = vpack.c.b16 %v337, %v337
      %v410 = vunpack.c.l.b16 %v268
      %v411 = vunpack.c.l.b16 %v269
      %v412 = vunpack.c.l.b16 %v270
      %v413 = vunpack.c.l.b16 %v271
      %v414 = vunpack.c.l.b16 %v272
      %v415 = vunpack.c.l.b16 %v273
      %v416 = vunpack.c.l.b16 %v274
      %v417 = vunpack.c.l.b16 %v275
      %v418 = vunpack.c.l.b16 %v276
      %v419 = vunpack.c.l.b16 %v277
      %v420 = vunpack.c.l.b16 %v278
      %v421 = vunpack.c.l.b16 %v279
      %v422 = vunpack.c.l.b16 %v280
      %v423 = vunpack.c.l.b16 %v281
      %v424 = vunpack.c.l.b16 %v282
      %v425 = vunpack.c.l.b16 %v283
      %v426 = vunpack.c.l.b16 %v284
      %v427 = vunpack.c.l.b16 %v285
      %v428 = vunpack.c.l.b16 %v286
      %v429 = vunpack.c.l.b16 %v287
      %v430 = vunpack.c.l.b16 %v288
      %v431 = vunpack.c.l.b16 %v289
      %v432 = vunpack.c.l.b16 %v290
      %v433 = vunpack.c.l.b16 %v291
      %v434 = vunpack.c.l.b16 %v292
      %v435 = vunpack.c.l.b16 %v293
      %v436 = vunpack.c.l.b16 %v294
      %v437 = vunpack.c.l.b16 %v295
      %v438 = vunpack.c.l.b16 %v296
      %v439 = vunpack.c.l.b16 %v297
      %v440 = vunpack.c.l.b16 %v298
      %v441 = vunpack.c.l.b16 %v299
      %v442 = vunpack.c.l.b16 %v300
      %v443 = vunpack.c.l.b16 %v301
      %v444 = vunpack.c.l.b16 %v302
      %v445 = vunpack.c.l.b16 %v303
      %v446 = vunpack.c.l.b16 %v304
      %v447 = vunpack.c.l.b16 %v305
      %v448 = vunpack.c.l.b16 %v306
      %v449 = vunpack.c.l.b16 %v307
      %v450 = vunpack.c.l.b16 %v308
      %v451 = vunpack.c.l.b16 %v309
      %v452 = vunpack.c.l.b16 %v310
      %v453 = vunpack.c.l.b16 %v311
      %v454 = vunpack.c.l.b16 %v312
      %v455 = vunpack.c.l.b16 %v313
      %v456 = vunpack.c.l.b16 %v314
      %v457 = vunpack.c.l.b16 %v315
      %v458 = vunpack.c.l.b16 %v316
      %v459 = vunpack.c.l.b16 %v317
      %v460 = vunpack.c.l.b16 %v318
      %v461 = vunpack.c.l.b16 %v319
      %v462 = vunpack.c.l.b16 %v320
      %v463 = vunpack.c.l.b16 %v321
      %v464 = vunpack.c.l.b16 %v322
      %v465 = vunpack.c.l.b16 %v323
      %v466 = vunpack.c.l.b16 %v324
      %v467 = vunpack.c.l.b16 %v325
      %v468 = vunpack.c.l.b16 %v326
      %v469 = vunpack.c.l.b16 %v327
      %v470 = vunpack.c.l.b16 %v328
      %v471 = vunpack.c.l.b16 %v329
      %v472 = vunpack.c.l.b16 %v330
      %v473 = vunpack.c.l.b16 %v331
      %v474 = vpack.c.b16 %v411, %v410
      %v475 = vpack.c.b16 %v413, %v412
      %v476 = vpack.c.b16 %v415, %v414
      %v477 = vpack.c.b16 %v417, %v416
      %v478 = vpack.c.b16 %v419, %v418
      %v479 = vpack.c.b16 %v421, %v420
      %v480 = vpack.c.b16 %v423, %v422
      %v481 = vpack.c.b16 %v425, %v424
      %v482 = vpack.c.b16 %v427, %v426
      %v483 = vpack.c.b16 %v429, %v428
      %v484 = vpack.c.b16 %v431, %v430
      %v485 = vpack.c.b16 %v433, %v432
      %v486 = vpack.c.b16 %v435, %v434
      %v487 = vpack.c.b16 %v437, %v436
      %v488 = vpack.c.b16 %v439, %v438
      %v489 = vpack.c.b16 %v441, %v440
      %v490 = vpack.c.b16 %v443, %v442
      %v491 = vpack.c.b16 %v445, %v444
      %v492 = vpack.c.b16 %v447, %v446
      %v493 = vpack.c.b16 %v449, %v448
      %v494 = vpack.c.b16 %v451, %v450
      %v495 = vpack.c.b16 %v453, %v452
      %v496 = vpack.c.b16 %v455, %v454
      %v497 = vpack.c.b16 %v457, %v456
      %v498 = vpack.c.b16 %v459, %v458
      %v499 = vpack.c.b16 %v461, %v460
      %v500 = vpack.c.b16 %v463, %v462
      %v501 = vpack.c.b16 %v465, %v464
      %v502 = vpack.c.b16 %v467, %v466
      %v503 = vpack.c.b16 %v469, %v468
      %v504 = vpack.c.b16 %v471, %v470
      %v505 = vpack.c.b16 %v473, %v472
      %538 = vmatprep.subr.bf16.mxu0 0
      %539 = vmatpush1.bf16.msra.mxu0 %v474
      %540 = vmatprep.subr.bf16.mxu0 0
      %541 = vmatpush1.bf16.msra.mxu0 %v475
      %542 = vmatprep.subr.bf16.mxu0 0
      %543 = vmatpush1.bf16.msra.mxu0 %v476
      %544 = vmatprep.subr.bf16.mxu0 0
      %545 = vmatpush1.bf16.msra.mxu0 %v477
      %546 = vmatprep.subr.bf16.mxu0 0
      %547 = vmatpush1.bf16.msra.mxu0 %v478
      %548 = vmatprep.subr.bf16.mxu0 0
      %549 = vmatpush1.bf16.msra.mxu0 %v479
      %550 = vmatprep.subr.bf16.mxu0 0
      %551 = vmatpush1.bf16.msra.mxu0 %v480
      %552 = vmatprep.subr.bf16.mxu0 0
      %553 = vmatpush1.bf16.msra.mxu0 %v481
      %554 = vmatprep.subr.bf16.mxu0 0
      %555 = vmatpush1.bf16.msra.mxu0 %v482
      %556 = vmatprep.subr.bf16.mxu0 0
      %557 = vmatpush1.bf16.msra.mxu0 %v483
      %558 = vmatprep.subr.bf16.mxu0 0
      %559 = vmatpush1.bf16.msra.mxu0 %v484
      %560 = vmatprep.subr.bf16.mxu0 0
      %561 = vmatpush1.bf16.msra.mxu0 %v485
      %562 = vmatprep.subr.bf16.mxu0 0
      %563 = vmatpush1.bf16.msra.mxu0 %v486
      %564 = vmatprep.subr.bf16.mxu0 0
      %565 = vmatpush1.bf16.msra.mxu0 %v487
      %566 = vmatprep.subr.bf16.mxu0 0
      %567 = vmatpush1.bf16.msra.mxu0 %v488
      %568 = vmatprep.subr.bf16.mxu0 0
      %569 = vmatpush1.bf16.msra.mxu0 %v489
      %570 = vmatprep.mubr.bf16.mxu0 %v339
      %571 = vmatmul.mubr.bf16.gmra.mrb[0].mxu0 %v338
      %v572 = vpop.f32.mrb[0].mxu0
      %v573 = vadd.f32 0.0, %v572
      %v574 = vpop.f32.mrb[0].mxu0
      %v575 = vpop.f32.mrb[0].mxu0
      %v576 = vpop.f32.mrb[0].mxu0
      %577 = vdwg.mxu0
      %578 = vmatprep.subr.bf16.mxu0 0
      %579 = vmatpush1.bf16.msra.mxu0 %v490
      %580 = vmatprep.subr.bf16.mxu0 0
      %581 = vmatpush1.bf16.msra.mxu0 %v491
      %582 = vmatprep.subr.bf16.mxu0 0
      %583 = vmatpush1.bf16.msra.mxu0 %v492
      %584 = vmatprep.subr.bf16.mxu0 0
      %585 = vmatpush1.bf16.msra.mxu0 %v493
      %586 = vmatprep.subr.bf16.mxu0 0
      %587 = vmatpush1.bf16.msra.mxu0 %v494
      %588 = vmatprep.subr.bf16.mxu0 0
      %589 = vmatpush1.bf16.msra.mxu0 %v495
      %590 = vmatprep.subr.bf16.mxu0 0
      %591 = vmatpush1.bf16.msra.mxu0 %v496
      %592 = vmatprep.subr.bf16.mxu0 0
      %593 = vmatpush1.bf16.msra.mxu0 %v497
      %594 = vmatprep.subr.bf16.mxu0 0
      %595 = vmatpush1.bf16.msra.mxu0 %v498
      %596 = vmatprep.subr.bf16.mxu0 0
      %597 = vmatpush1.bf16.msra.mxu0 %v499
      %598 = vmatprep.subr.bf16.mxu0 0
      %599 = vmatpush1.bf16.msra.mxu0 %v500
      %600 = vmatprep.subr.bf16.mxu0 0
      %601 = vmatpush1.bf16.msra.mxu0 %v501
      %602 = vmatprep.subr.bf16.mxu0 0
      %603 = vmatpush1.bf16.msra.mxu0 %v502
      %604 = vmatprep.subr.bf16.mxu0 0
      %605 = vmatpush1.bf16.msra.mxu0 %v503
      %606 = vmatprep.subr.bf16.mxu0 0
      %607 = vmatpush1.bf16.msra.mxu0 %v504
      %608 = vmatprep.subr.bf16.mxu0 0
      %609 = vmatpush1.bf16.msra.mxu0 %v505
      %610 = vmatprep.mubr.bf16.mxu0 %v341
      %611 = vmatmul.mubr.bf16.gmra.mrb[0].mxu0 %v340
      %v612 = vpop.f32.mrb[0].mxu0
      %v613 = vadd.f32 %v573, %v612
      %v614 = vpop.f32.mrb[0].mxu0
      %v615 = vpop.f32.mrb[0].mxu0
      %v616 = vpop.f32.mrb[0].mxu0
      %617 = vdwg.mxu0
      %v618 = vadd.f32 %v265, %v613
      %619 = vst [vmem:[#allocation2] sm:$0xff] %v618
      %p620 = scmp.eq.s32.totalorder %s21, 15
      // Predicated region
      $region37: #{discriminator_forward.9} parent=31 // pred_check
        %p621 = pneg %p620
      $region38: #{discriminator_forward.9} parent=31 // pred_check_branch
        %623 = sbr.rel (%p621) target = $region40
      $region39: #{discriminator_forward.9} parent=31 // pred_region
        %v624 = vld [vmem:[#allocation2] sm:$0xff]
        %v625 = vld [vmem:[%s251] sm:$0x1]
        %v627 = vlaneseq
        %v628 = vshrl.u32 %v627, 7
        %v629 = vsub.s32 0, %v628
        %v630 = vrot.slane %v625, %v629
        %v632 = vadd.f32 %v624, %v630
        %633 = vst [vmem:[%s258] sm:$0xff] %v632
      $region40: #{discriminator_forward.9} parent=31 // pred_fallthru
        _
      %p634 = scmp.lt.s32.totalorder %s19, 0
      %s635 = scalar_select %p634, %s19, 0
      %p636 = scmp.lt.s32.totalorder %s20, 0
      %s637 = scalar_select %p636, %s20, 0
      %s638 = sadd.s32 %s637, %s635
      %s639 = smul.addr %s638, 8
      %s640 = scalar_lea.vmem %s3, %s639
      // Predicated region
      $region41: #{discriminator_forward.9} parent=31 // pred_check
        %p641 = pneg %p135
      $region42: #{discriminator_forward.9} parent=31 // pred_check_branch
        %643 = sbr.rel (%p641) target = $region44
      $region43: #{discriminator_forward.9} parent=31 // pred_region
        _
      $region44: #{discriminator_forward.9} parent=31 // pred_fallthru
        _
      // Predicated region
      $region45: #{discriminator_forward.9} parent=31 // pred_check
        %p644 = pneg %p135
      $region46: #{discriminator_forward.9} parent=31 // pred_check_branch
        %646 = sbr.rel (%p644) target = $region48
      $region47: #{discriminator_forward.9} parent=31 // pred_region
        %p647 = scmp.lt.s32.totalorder %s19, 0
        %s648 = scalar_select %p647, %s19, 0
        %p649 = scmp.lt.s32.totalorder %s20, 0
        %s650 = scalar_select %p649, %s20, 0
        %s651 = sadd.s32 %s650, %s648
        %s652 = smul.addr %s651, 8
        %s653 = scalar_lea.vmem %s3, %s652
      $region48: #{discriminator_forward.9} parent=31 // pred_fallthru
        _
    $region32: #{discriminator_forward.9} parent=5 // pred_fallthru
      _
    %p654 = scmp.le.s32.totalorder 2, %s9
    // Predicated region
    $region49: #{discriminator_forward.9} parent=5 // pred_check
      %p655 = pneg %p654
    $region50: #{discriminator_forward.9} parent=5 // pred_check_branch
      %657 = sbr.rel (%p655) target = $region52
    $region51: #{discriminator_forward.9} parent=5 // pred_region
      %s658 = ssub.s32 %s9, 2
    $region52: #{discriminator_forward.9} parent=5 // pred_fallthru
      _
  $region6: #{discriminator_forward.9} parent=0 // loop_footer
    %s13 = sadd.s32 1, %s9
  $region7: #{discriminator_forward.9} parent=0 // loop_footer_branch
    %8 = sbr.rel target = $region3
  $region8: #{discriminator_forward.9} parent=0 // loop_exit
    _

</llo_original>
